<compile_context>
chip_gen: v5e
topology: v5e:2x2
jax: 0.10.0
libtpu: 0.0.40
codegen_flags: <defaults>
</compile_context>

<pallas_src>
import math
import functools

import numpy as np
import jax
import jax.numpy as jnp
from jax.experimental import pallas as pl
from jax.experimental.pallas import tpu as pltpu

LOG2PI = math.log(2.0 * math.pi)
_LANE = 128


def _round_up(n, m):
    return ((n + m - 1) // m) * m


def _rep_rows(a, s):
    """Replicate [B, C] -> [s*B, C]; row (i*B + b) = a[b] (sample-major)."""
    if s == 1:
        return a
    b, c = a.shape
    return jnp.broadcast_to(a[None, :, :], (s, b, c)).reshape(s * b, c)


def _log_sigmoid(a):
    # log(sigmoid(a)) = -softplus(-a); stable, never -inf (review item).
    return -(jnp.log(1.0 + jnp.exp(-jnp.abs(a))) + jnp.maximum(-a, 0.0))


# ----------------------------------------------------------------------------
# Kernel 1: x-only stage (runs once per batch, not per posterior sample).
# ----------------------------------------------------------------------------
def _xstage_kernel(precision, x_ref, WA_ref, bA_ref, W3_ref, b3_ref,
                   head_ref, xh_ref):
    """head: [B, 2*ZP] raw fc3 output (mean at cols [0,Z), logvar at
    [ZP, ZP+Z)); xh: [2, B, Hp] = [x@W4x + b4 ; x@W7x + b7].
    All stores are full-width (256-lane) unmasked stores."""
    f32 = jnp.float32
    X = x_ref.shape[1]
    Hp = WA_ref.shape[1]

    def dot(a, w):
        return jnp.dot(a.astype(w.dtype), w, precision=precision,
                       preferred_element_type=f32)

    act = jnp.tanh                                   # model.act_func
    x = x_ref[...]                                   # [B, X]

    # packed rows of WA: [W1 (X) | W2 (Hp) | W4x (X) | W7x (X)]
    h = act(dot(x, WA_ref[0:X, :]) + bA_ref[0:1, :])                    # fc1
    h = act(dot(h, WA_ref[X:X + Hp, :]) + bA_ref[1:2, :])               # fc2
    head_ref[...] = dot(h, W3_ref[...]) + b3_ref[...]                   # fc3
    xh_ref[0] = dot(x, WA_ref[X + Hp:2 * X + Hp, :]) + bA_ref[2:3, :]   # fc4 x-part
    xh_ref[1] = dot(x, WA_ref[2 * X + Hp:3 * X + Hp, :]) + bA_ref[3:4, :]  # fc7 x-part


# ----------------------------------------------------------------------------
# Kernel 2: per-sample stage; one grid step == S posterior samples (S*B rows).
# ----------------------------------------------------------------------------
def _sample_kernel(precision,
                   stat_ref, xh_ref, epsv_ref, epsz_ref,
                   WBh_ref, bBh_ref, WBhead_ref, bBhead_ref,
                   Wfin_ref, bfin_ref, Wfout_ref, bfout_ref,
                   z_ref, lp_ref):
    f32 = jnp.float32
    B = stat_ref.shape[0]
    SB = epsv_ref.shape[1]
    S = SB // B
    Z = epsv_ref.shape[2]
    Hp = WBh_ref.shape[1]
    ZP = WBhead_ref.shape[1] // 2
    n_flows = Wfin_ref.shape[0] // 2

    def dot(a, w):
        return jnp.dot(a.astype(w.dtype), w, precision=precision,
                       preferred_element_type=f32)

    act = jnp.tanh

    # ---- stage-1 results, replicated across this step's S samples ----------
    mean0_b = stat_ref[:, 0:Z]                       # [B, Z]   (aligned slices)
    logvar0_b = stat_ref[:, ZP:ZP + Z]
    mean0 = _rep_rows(mean0_b, S)                    # [SB, Z]
    std0 = _rep_rows(jnp.exp(0.5 * logvar0_b), S)
    slv0 = _rep_rows(jnp.sum(logvar0_b, axis=1, keepdims=True), S)   # [SB, 1]
    xh4 = _rep_rows(xh_ref[0], S)                    # [SB, Hp]
    xh7 = _rep_rows(xh_ref[1], S)
    epsv = epsv_ref[0]                               # [SB, Z]
    epsz = epsz_ref[0]

    # ---- q(v|x): reparameterize; (v-mean0)^2*exp(-logvar0) == eps^2 --------
    v = epsv * std0 + mean0
    logqv0 = -0.5 * (Z * LOG2PI + slv0
                     + jnp.sum(epsv * epsv, axis=1, keepdims=True))   # [SB, 1]

    # ---- q(z|x,v)  (packed rows of WBh: [W4z | W5 | W7z | W8]) -------------
    h = act(xh4 + dot(v, WBh_ref[0:Z, :]))                            # fc4
    h = act(dot(h, WBh_ref[Z:Z + Hp, :]) + bBh_ref[0:1, :])           # fc5
    head = dot(h, WBhead_ref[0:Hp, :]) + bBhead_ref[0:1, :]           # fc6 [SB, 2ZP]
    mean1 = head[:, 0:Z]
    logvar1 = head[:, ZP:ZP + Z]
    z = epsz * jnp.exp(0.5 * logvar1) + mean1
    logqz0 = -0.5 * (Z * LOG2PI
                     + jnp.sum(logvar1, axis=1, keepdims=True)
                     + jnp.sum(epsz * epsz, axis=1, keepdims=True))

    # ---- normalizing flows (static unroll; n_flows is small & static) ------
    logdetsum = jnp.zeros((SB, 1), f32)
    for i in range(n_flows):
        hh = jnp.tanh(dot(z, Wfin_ref[2 * i]) + bfin_ref[2 * i])
        o = dot(hh, Wfout_ref[2 * i]) + bfout_ref[2 * i]              # [SB, 2ZP]
        pre = o[:, ZP:ZP + Z] + 5.0
        v = v * jax.nn.sigmoid(pre) + o[:, 0:Z]
        logdet = jnp.sum(_log_sigmoid(pre), axis=1, keepdims=True)

        hh = jnp.tanh(dot(v, Wfin_ref[2 * i + 1]) + bfin_ref[2 * i + 1])
        o = dot(hh, Wfout_ref[2 * i + 1]) + bfout_ref[2 * i + 1]
        pre = o[:, ZP:ZP + Z] + 5.0
        z = z * jax.nn.sigmoid(pre) + o[:, 0:Z]
        logdetsum = (logdetsum + logdet
                     + jnp.sum(_log_sigmoid(pre), axis=1, keepdims=True))

    # ---- r(v|x,z) -----------------------------------------------------------
    h = act(xh7 + dot(z, WBh_ref[Z + Hp:2 * Z + Hp, :]))              # fc7
    h = act(dot(h, WBh_ref[2 * Z + Hp:2 * Z + 2 * Hp, :]) + bBh_ref[1:2, :])  # fc8
    head = dot(h, WBhead_ref[Hp:2 * Hp, :]) + bBhead_ref[1:2, :]      # fc9 [SB, 2ZP]
    mean2 = head[:, 0:Z]
    logvar2 = head[:, ZP:ZP + Z]
    logrvT = -0.5 * (Z * LOG2PI
                     + jnp.sum(logvar2, axis=1, keepdims=True)
                     + jnp.sum((v - mean2) ** 2 * jnp.exp(-logvar2),
                               axis=1, keepdims=True))

    z_ref[0] = z
    lp = logqz0 + logqv0 - logdetsum - logrvT                         # [SB, 1]
    lp_ref[...] = lp.reshape(1, 1, SB)                                # lane-oriented


# ----------------------------------------------------------------------------
# Wrapper
# ----------------------------------------------------------------------------
def _pick_samples_per_step(k, B, target_rows=256, max_rows=1024):
    """Pick S (divisor of k): S*B rows per matmul, target >=256 rows.
    Among divisors reaching the target, prefer one giving an even number of
    grid steps (balanced split across v7x's two TensorCores)."""
    divs = [s for s in range(1, k + 1) if k % s == 0 and s * B <= max_rows]
    if not divs:
        return 1
    candidates = [s for s in divs if s * B >= target_rows]
    if candidates:
        for s in candidates:
            if (k // s) % 2 == 0:
                return s
        return candidates[0]
    return divs[-1]


def aux_nf_forward(k, x, eps_v, eps_z, packed_params,
                   precision=jax.lax.Precision.DEFAULT,
                   samples_per_step=None):
    """x:[B,X], eps_*:[k,B,Z] -> (z:[k,B,Z], logprob:[k,B])."""
    (WA, bA, W3, b3, WBh, bBh, WBhead, bBhead,
     Wfin, bfin, Wfout, bfout) = packed_params
    B, _ = x.shape
    Z = eps_v.shape[-1]
    Hp = WBh.shape[1]
    ZP2 = WBhead.shape[1]                 # 2 * ZP

    S = samples_per_step or _pick_samples_per_step(k, B)
    assert k % S == 0, "samples_per_step must divide k"
    n_steps = k // S
    SB = S * B

    vmem = pl.BlockSpec(memory_space=pltpu.MemorySpace.VMEM)
    VMEM_LIMIT = 48 * 1024 * 1024         # within v7x's 64 MiB physical VMEM

    # ---- stage 1: x-only work (hoisted out of the k replication) -----------
    stat, xh = pl.pallas_call(
        functools.partial(_xstage_kernel, precision),
        out_shape=(jax.ShapeDtypeStruct((B, ZP2), jnp.float32),
                   jax.ShapeDtypeStruct((2, B, Hp), jnp.float32)),
        in_specs=[vmem] * 5,
        out_specs=(vmem, vmem),
        compiler_params=pltpu.CompilerParams(vmem_limit_bytes=VMEM_LIMIT),
    )(x, WA, bA, W3, b3)

    # ---- stage 2: S samples per grid step, grid over k//S blocks -----------
    epsv_r = eps_v.reshape(n_steps, SB, Z)    # row (s*B+b) inside a block
    epsz_r = eps_z.reshape(n_steps, SB, Z)
    const2 = lambda i: (0, 0)
    const3 = lambda i: (0, 0, 0)
    z3, lp3 = pl.pallas_call(
        functools.partial(_sample_kernel, precision),
        grid=(n_steps,),
        in_specs=[
            pl.BlockSpec((B, ZP2), const2),                 # fc3 head (resident)
            pl.BlockSpec((2, B, Hp), const3),               # xh (resident)
            pl.BlockSpec((1, SB, Z), lambda i: (i, 0, 0)),  # eps_v block i
            pl.BlockSpec((1, SB, Z), lambda i: (i, 0, 0)),  # eps_z block i
            pl.BlockSpec(WBh.shape, const2),                # packed weights,
            pl.BlockSpec(bBh.shape, const2),                # all resident
            pl.BlockSpec(WBhead.shape, const2),
            pl.BlockSpec(bBhead.shape, const2),
            pl.BlockSpec(Wfin.shape, const3),
            pl.BlockSpec(bfin.shape, const3),
            pl.BlockSpec(Wfout.shape, const3),
            pl.BlockSpec(bfout.shape, const3),
        ],
        out_specs=(pl.BlockSpec((1, SB, Z), lambda i: (i, 0, 0)),
                   pl.BlockSpec((1, 1, SB), lambda i: (i, 0, 0))),
        out_shape=(jax.ShapeDtypeStruct((n_steps, SB, Z), jnp.float32),
                   jax.ShapeDtypeStruct((n_steps, 1, SB), jnp.float32)),
        compiler_params=pltpu.CompilerParams(
            dimension_semantics=("parallel",),
            vmem_limit_bytes=VMEM_LIMIT),
    )(stat, xh, epsv_r, epsz_r, WBh, bBh, WBhead, bBhead,
      Wfin, bfin, Wfout, bfout)

    return z3.reshape(k, B, Z), lp3.reshape(k, B)


# ----------------------------------------------------------------------------
# Parameter construction (PyTorch Linear-style init) and kernel packing.
# Weights stored transposed ([in, out]) so kernels compute x @ W + b.
# ----------------------------------------------------------------------------
def _linear(key, fan_in, fan_out):
    kw, kb = jax.random.split(key)
    bound = 1.0 / math.sqrt(fan_in)
    W = jax.random.uniform(kw, (fan_in, fan_out), jnp.float32, -bound, bound)
    b = jax.random.uniform(kb, (1, fan_out), jnp.float32, -bound, bound)
    return W, b


def make_raw_params(key, x_size, z_size, n_flows, hidden=200, flow_hidden=100):
    X, Z, H, F = x_size, z_size, hidden, flow_hidden
    keys = iter(jax.random.split(key, 9 + 6 * n_flows))
    raw = {"fc1": _linear(next(keys), X, H), "fc2": _linear(next(keys), H, H),
           "fc3": _linear(next(keys), H, 2 * Z),
           "fc4": _linear(next(keys), X + Z, H), "fc5": _linear(next(keys), H, H),
           "fc6": _linear(next(keys), H, 2 * Z),
           "fc7": _linear(next(keys), X + Z, H), "fc8": _linear(next(keys), H, H),
           "fc9": _linear(next(keys), H, 2 * Z)}
    flows = []
    for _ in range(n_flows):
        flows.append((_linear(next(keys), Z, F), _linear(next(keys), F, Z),
                      _linear(next(keys), F, Z), _linear(next(keys), Z, F),
                      _linear(next(keys), F, Z), _linear(next(keys), F, Z)))
    raw["flows"] = flows
    return raw


def _pad2(a, rows, cols):
    return jnp.pad(a, ((0, rows - a.shape[0]), (0, cols - a.shape[1])))


def _pack_head(Wm, bm, Ws, bs, rows_p, ZP, wdt):
    """Fused head with 128-lane-aligned halves: mean/mew at cols [0,Z),
    logvar/sig-pre at cols [ZP, ZP+Z); zero padding elsewhere (exact)."""
    rows, Z = Wm.shape
    W = jnp.zeros((rows_p, 2 * ZP), jnp.float32)
    W = W.at[:rows, :Z].set(Wm).at[:rows, ZP:ZP + Z].set(Ws)
    b = jnp.zeros((1, 2 * ZP), jnp.float32)
    b = b.at[:, :Z].set(bm).at[:, ZP:ZP + Z].set(bs)
    return W.astype(wdt), b


def pack_params(raw, x_size, z_size, weight_dtype=jnp.float32):
    """Pack ~43 parameters into 12 arrays, zero-padded to 128-lane multiples.
    weight_dtype=jnp.bfloat16 halves weight DMA/VMEM; biases stay f32."""
    X, Z = x_size, z_size
    (W1, b1), (W2, b2), (W3, b3) = raw["fc1"], raw["fc2"], raw["fc3"]
    (W4, b4), (W5, b5), (W6, b6) = raw["fc4"], raw["fc5"], raw["fc6"]
    (W7, b7), (W8, b8), (W9, b9) = raw["fc7"], raw["fc8"], raw["fc9"]
    H = W2.shape[0]
    F = raw["flows"][0][0][0].shape[1]
    Hp = _round_up(H, _LANE)          # 200 -> 256
    Fp = _round_up(F, _LANE)          # 100 -> 128
    ZP = _round_up(Z, _LANE)          # head half width (>= 128)
    wdt = weight_dtype

    W4x, W4z = W4[:X], W4[X:]
    W7x, W7z = W7[:X], W7[X:]
    padb = lambda b: jnp.pad(b, ((0, 0), (0, Hp - b.shape[1])))

    WA = jnp.concatenate([_pad2(W1, X, Hp), _pad2(W2, Hp, Hp),
                          _pad2(W4x, X, Hp), _pad2(W7x, X, Hp)],
                         axis=0).astype(wdt)                       # [3X+Hp, Hp]
    bA = jnp.concatenate([padb(b1), padb(b2), padb(b4), padb(b7)], axis=0)
    W3p, b3p = _pack_head(W3[:, :Z], b3[:, :Z], W3[:, Z:], b3[:, Z:], Hp, ZP, wdt)

    WBh = jnp.concatenate([_pad2(W4z, Z, Hp), _pad2(W5, Hp, Hp),
                           _pad2(W7z, Z, Hp), _pad2(W8, Hp, Hp)],
                          axis=0).astype(wdt)                      # [2Z+2Hp, Hp]
    bBh = jnp.concatenate([padb(b5), padb(b8)], axis=0)
    W6p, b6p = _pack_head(W6[:, :Z], b6[:, :Z], W6[:, Z:], b6[:, Z:], Hp, ZP, wdt)
    W9p, b9p = _pack_head(W9[:, :Z], b9[:, :Z], W9[:, Z:], b9[:, Z:], Hp, ZP, wdt)
    WBhead = jnp.concatenate([W6p, W9p], axis=0)                   # [2Hp, 2ZP]
    bBhead = jnp.concatenate([b6p, b9p], axis=0)

    Wfin, bfin, Wfout, bfout = [], [], [], []
    for (f00, f01, f02, f10, f11, f12) in raw["flows"]:
        for fin, fmew, fsig in ((f00, f01, f02), (f10, f11, f12)):
            Wfin.append(_pad2(fin[0], Z, Fp).astype(wdt))
            bfin.append(jnp.pad(fin[1], ((0, 0), (0, Fp - F))))
            Wo, bo = _pack_head(fmew[0], fmew[1], fsig[0], fsig[1], Fp, ZP, wdt)
            Wfout.append(Wo)
            bfout.append(bo)
    Wfin = jnp.stack(Wfin)        # [2n, Z, Fp]
    bfin = jnp.stack(bfin)        # [2n, 1, Fp]
    Wfout = jnp.stack(Wfout)      # [2n, Fp, 2ZP]
    bfout = jnp.stack(bfout)      # [2n, 1, 2ZP]

    return [WA, bA, W3p, b3p, WBh, bBh, WBhead, bBhead, Wfin, bfin, Wfout, bfout]


# ----------------------------------------------------------------------------
# Pure-JAX reference, faithful to the PyTorch forward (ground truth).
# ----------------------------------------------------------------------------
def aux_nf_reference(k, x, eps_v, eps_z, raw,
                     precision=jax.lax.Precision.HIGHEST):
    (W1, b1), (W2, b2), (W3, b3) = raw["fc1"], raw["fc2"], raw["fc3"]
    (W4, b4), (W5, b5), (W6, b6) = raw["fc4"], raw["fc5"], raw["fc6"]
    (W7, b7), (W8, b8), (W9, b9) = raw["fc7"], raw["fc8"], raw["fc9"]
    B, _ = x.shape
    Z = eps_v.shape[-1]
    kB = k * B
    dot = lambda a, w: jnp.dot(a, w, precision=precision)
    act = jnp.tanh

    def lognormal(val, mean, logvar):                   # all [kB, Z] -> [kB]
        return -0.5 * (Z * LOG2PI + jnp.sum(logvar, axis=1)
                       + jnp.sum((val - mean) ** 2 / jnp.exp(logvar), axis=1))

    h = act(dot(x, W1) + b1)
    h = act(dot(h, W2) + b2)
    o = dot(h, W3) + b3
    mean, logvar = o[:, :Z], o[:, Z:]
    mean_t = jnp.tile(mean, (k, 1))
    logvar_t = jnp.tile(logvar, (k, 1))
    ev = eps_v.reshape(kB, Z)
    v = ev * jnp.exp(0.5 * logvar_t) + mean_t
    logqv0 = lognormal(v, mean_t, logvar_t)
    x_t = jnp.tile(x, (k, 1))

    h = act(dot(jnp.concatenate([x_t, v], axis=1), W4) + b4)
    h = act(dot(h, W5) + b5)
    o = dot(h, W6) + b6
    mean, logvar = o[:, :Z], o[:, Z:]
    ez = eps_z.reshape(kB, Z)
    z = ez * jnp.exp(0.5 * logvar) + mean
    logqz0 = lognormal(z, mean, logvar)

    logdetsum = jnp.zeros((kB,), jnp.float32)
    for (f00, f01, f02, f10, f11, f12) in raw["flows"]:
        hh = jnp.tanh(dot(z, f00[0]) + f00[1])
        mew = dot(hh, f01[0]) + f01[1]
        sig = jax.nn.sigmoid(dot(hh, f02[0]) + f02[1] + 5.0)
        v = v * sig + mew
        logdet = jnp.sum(jnp.log(sig), axis=1)
        hh = jnp.tanh(dot(v, f10[0]) + f10[1])
        mew = dot(hh, f11[0]) + f11[1]
        sig = jax.nn.sigmoid(dot(hh, f12[0]) + f12[1] + 5.0)
        z = z * sig + mew
        logdetsum = logdetsum + logdet + jnp.sum(jnp.log(sig), axis=1)

    h = act(dot(jnp.concatenate([x_t, z], axis=1), W7) + b7)
    h = act(dot(h, W8) + b8)
    o = dot(h, W9) + b9
    mean, logvar = o[:, :Z], o[:, Z:]
    logrvT = lognormal(v, mean, logvar)

    return (z.reshape(k, B, Z),
            (logqz0 + logqv0 - logdetsum - logrvT).reshape(k, B))


if __name__ == "__main__":
    B, X, Z, K, N_FLOWS = 2, 16, 8, 3, 2

    root = jax.random.PRNGKey(0)
    k_x, k_ev, k_ez, k_p = jax.random.split(root, 4)
    x = jax.random.normal(k_x, (B, X), jnp.float32)
    eps_v = jax.random.normal(k_ev, (K, B, Z), jnp.float32)
    eps_z = jax.random.normal(k_ez, (K, B, Z), jnp.float32)
    raw = make_raw_params(k_p, X, Z, N_FLOWS)

    # Ground-truth reference (faithful to the PyTorch forward), f32 HIGHEST.
    z_ref, lp_ref = aux_nf_reference(K, x, eps_v, eps_z, raw)
    z_ref = np.asarray(z_ref)
    lp_ref = np.asarray(lp_ref)

    # (1) Strict check: f32 packed weights + HIGHEST matmuls must match the
    #     reference (validates packing, padding, batching and the rewrites).
    packed_f32 = pack_params(raw, X, Z, weight_dtype=jnp.float32)
    z_hi, lp_hi = aux_nf_forward(K, x, eps_v, eps_z, packed_f32,
                                 precision=jax.lax.Precision.HIGHEST)
    jax.block_until_ready((z_hi, lp_hi))
    assert z_hi.shape == (K, B, Z) and lp_hi.shape == (K, B)
    assert np.all(np.isfinite(np.asarray(z_hi)))
    assert np.allclose(np.asarray(z_hi), z_ref, rtol=1e-3, atol=1e-3)
    assert np.allclose(np.asarray(lp_hi), lp_ref, rtol=1e-3, atol=1e-3)

    # (2) Production path: bf16-stored weights + DEFAULT precision (native
    #     bf16 MXU everywhere, f32 accumulation) — loose sanity band vs the
    #     f32 reference.
    packed_bf16 = pack_params(raw, X, Z, weight_dtype=jnp.bfloat16)
    z_lo, lp_lo = aux_nf_forward(K, x, eps_v, eps_z, packed_bf16)
    jax.block_until_ready((z_lo, lp_lo))
    z_lo = np.asarray(z_lo)
    lp_lo = np.asarray(lp_lo)
    assert np.all(np.isfinite(z_lo)) and np.all(np.isfinite(lp_lo))
    assert np.allclose(z_lo, z_ref, rtol=2e-1, atol=5e-1)
    assert np.allclose(lp_lo, lp_ref, rtol=2e-1, atol=2.0)

    print("KERNEL_OK")
</pallas_src>

<mosaic_0001>
module attributes {stable_mosaic.version = 11 : i64} {
  func.func @_xstage_kernel(%arg0: memref<2x16xf32, #tpu.memory_space<vmem>>, %arg1: memref<304x256xf32, #tpu.memory_space<vmem>>, %arg2: memref<4x256xf32, #tpu.memory_space<vmem>>, %arg3: memref<256x256xf32, #tpu.memory_space<vmem>>, %arg4: memref<1x256xf32, #tpu.memory_space<vmem>>, %arg5: memref<2x256xf32, #tpu.memory_space<vmem>>, %arg6: memref<2x2x256xf32, #tpu.memory_space<vmem>>) attributes {dimension_semantics = [], scalar_prefetch = 0 : i64, scratch_operands = 0 : i64, tpu.core_type = #tpu.core_type<tc>} {
    %c0 = arith.constant 0 : index
    %c0_0 = arith.constant 0 : index
    %0 = vector.load %arg0[%c0, %c0_0] : memref<2x16xf32, #tpu.memory_space<vmem>>, vector<2x16xf32>
    %c0_1 = arith.constant 0 : index
    %c0_2 = arith.constant 0 : index
    %1 = vector.load %arg1[%c0_1, %c0_2] : memref<304x256xf32, #tpu.memory_space<vmem>>, vector<16x256xf32>
    %cst = arith.constant dense<0.000000e+00> : vector<2x256xf32>
    %2 = tpu.matmul %0, %1, %cst {dimension_numbers = #tpu.dot_dimension_numbers<[1], [0], [0], [1], [0, 0, 1, 1], [], []>, precision = #tpu.contract_precision<fp32>} : vector<2x16xf32>, vector<16x256xf32>, vector<2x256xf32> -> vector<2x256xf32>
    %c0_3 = arith.constant 0 : index
    %c0_4 = arith.constant 0 : index
    %3 = vector.load %arg2[%c0_3, %c0_4] : memref<4x256xf32, #tpu.memory_space<vmem>>, vector<1x256xf32>
    %4 = vector.broadcast %3 : vector<1x256xf32> to vector<2x256xf32>
    %5 = arith.addf %2, %4 : vector<2x256xf32>
    %6 = math.tanh %5 : vector<2x256xf32>
    %c16 = arith.constant 16 : index
    %c0_5 = arith.constant 0 : index
    %7 = vector.load %arg1[%c16, %c0_5] : memref<304x256xf32, #tpu.memory_space<vmem>>, vector<256x256xf32>
    %cst_6 = arith.constant dense<0.000000e+00> : vector<2x256xf32>
    %8 = tpu.matmul %6, %7, %cst_6 {dimension_numbers = #tpu.dot_dimension_numbers<[1], [0], [0], [1], [0, 0, 1, 1], [], []>, precision = #tpu.contract_precision<fp32>} : vector<2x256xf32>, vector<256x256xf32>, vector<2x256xf32> -> vector<2x256xf32>
    %c1 = arith.constant 1 : index
    %c0_7 = arith.constant 0 : index
    %9 = vector.load %arg2[%c1, %c0_7] : memref<4x256xf32, #tpu.memory_space<vmem>>, vector<1x256xf32>
    %10 = vector.broadcast %9 : vector<1x256xf32> to vector<2x256xf32>
    %11 = arith.addf %8, %10 : vector<2x256xf32>
    %12 = math.tanh %11 : vector<2x256xf32>
    %c0_8 = arith.constant 0 : index
    %c0_9 = arith.constant 0 : index
    %13 = vector.load %arg3[%c0_8, %c0_9] : memref<256x256xf32, #tpu.memory_space<vmem>>, vector<256x256xf32>
    %cst_10 = arith.constant dense<0.000000e+00> : vector<2x256xf32>
    %14 = tpu.matmul %12, %13, %cst_10 {dimension_numbers = #tpu.dot_dimension_numbers<[1], [0], [0], [1], [0, 0, 1, 1], [], []>, precision = #tpu.contract_precision<fp32>} : vector<2x256xf32>, vector<256x256xf32>, vector<2x256xf32> -> vector<2x256xf32>
    %c0_11 = arith.constant 0 : index
    %c0_12 = arith.constant 0 : index
    %15 = vector.load %arg4[%c0_11, %c0_12] : memref<1x256xf32, #tpu.memory_space<vmem>>, vector<1x256xf32>
    %16 = vector.broadcast %15 : vector<1x256xf32> to vector<2x256xf32>
    %17 = arith.addf %14, %16 : vector<2x256xf32>
    %c0_13 = arith.constant 0 : index
    %c0_14 = arith.constant 0 : index
    %18 = vector.load %arg5[%c0_13, %c0_14] : memref<2x256xf32, #tpu.memory_space<vmem>>, vector<2x256xf32>
    tpu.vector_store %arg5[%c0_13, %c0_14], %17 {strides = array<i32>} : memref<2x256xf32, #tpu.memory_space<vmem>>, vector<2x256xf32>,
    %c272 = arith.constant 272 : index
    %c0_15 = arith.constant 0 : index
    %19 = vector.load %arg1[%c272, %c0_15] : memref<304x256xf32, #tpu.memory_space<vmem>>, vector<16x256xf32>
    %cst_16 = arith.constant dense<0.000000e+00> : vector<2x256xf32>
    %20 = tpu.matmul %0, %19, %cst_16 {dimension_numbers = #tpu.dot_dimension_numbers<[1], [0], [0], [1], [0, 0, 1, 1], [], []>, precision = #tpu.contract_precision<fp32>} : vector<2x16xf32>, vector<16x256xf32>, vector<2x256xf32> -> vector<2x256xf32>
    %c2 = arith.constant 2 : index
    %c0_17 = arith.constant 0 : index
    %21 = vector.load %arg2[%c2, %c0_17] : memref<4x256xf32, #tpu.memory_space<vmem>>, vector<1x256xf32>
    %22 = vector.broadcast %21 : vector<1x256xf32> to vector<2x256xf32>
    %23 = arith.addf %20, %22 : vector<2x256xf32>
    %c0_18 = arith.constant 0 : index
    %c0_19 = arith.constant 0 : index
    %c0_20 = arith.constant 0 : index
    %24 = vector.load %arg6[%c0_18, %c0_19, %c0_20] : memref<2x2x256xf32, #tpu.memory_space<vmem>>, vector<1x2x256xf32>
    %25 = vector.shape_cast %24 : vector<1x2x256xf32> to vector<2x256xf32>
    %26 = vector.shape_cast %23 : vector<2x256xf32> to vector<1x2x256xf32>
    tpu.vector_store %arg6[%c0_18, %c0_19, %c0_20], %26 {strides = array<i32>} : memref<2x2x256xf32, #tpu.memory_space<vmem>>, vector<1x2x256xf32>,
    %c288 = arith.constant 288 : index
    %c0_21 = arith.constant 0 : index
    %27 = vector.load %arg1[%c288, %c0_21] : memref<304x256xf32, #tpu.memory_space<vmem>>, vector<16x256xf32>
    %cst_22 = arith.constant dense<0.000000e+00> : vector<2x256xf32>
    %28 = tpu.matmul %0, %27, %cst_22 {dimension_numbers = #tpu.dot_dimension_numbers<[1], [0], [0], [1], [0, 0, 1, 1], [], []>, precision = #tpu.contract_precision<fp32>} : vector<2x16xf32>, vector<16x256xf32>, vector<2x256xf32> -> vector<2x256xf32>
    %c3 = arith.constant 3 : index
    %c0_23 = arith.constant 0 : index
    %29 = vector.load %arg2[%c3, %c0_23] : memref<4x256xf32, #tpu.memory_space<vmem>>, vector<1x256xf32>
    %30 = vector.broadcast %29 : vector<1x256xf32> to vector<2x256xf32>
    %31 = arith.addf %28, %30 : vector<2x256xf32>
    %c1_24 = arith.constant 1 : index
    %c0_25 = arith.constant 0 : index
    %c0_26 = arith.constant 0 : index
    %32 = vector.load %arg6[%c1_24, %c0_25, %c0_26] : memref<2x2x256xf32, #tpu.memory_space<vmem>>, vector<1x2x256xf32>
    %33 = vector.shape_cast %32 : vector<1x2x256xf32> to vector<2x256xf32>
    %34 = vector.shape_cast %31 : vector<2x256xf32> to vector<1x2x256xf32>
    tpu.vector_store %arg6[%c1_24, %c0_25, %c0_26], %34 {strides = array<i32>} : memref<2x2x256xf32, #tpu.memory_space<vmem>>, vector<1x2x256xf32>,
    return
  }
}

</mosaic_0001>

<llo_original>
// kernel: tpu_custom_call.1
$region0: #{tpu_custom_call.1}
  #allocation0 [shape = 'u32[]', space=smem, size = 0x4, offset = 0x4, fixed_abs, tag = 'smem constant byte address 0x4 - core index']
  #allocation1 [shape = 'u32[72,128]{1,0:T(1,128)}', space=vmem, size = 0x9000, scoped, tag = 'internal scratch']
  %s0 = inlined_call_operand.hbm [shape: f32[2,16], index: 0, kind: input, shape index: {}]
  %s1 = inlined_call_operand.hbm [shape: f32[304,256], index: 1, kind: input, shape index: {}]
  %s2 = inlined_call_operand.hbm [shape: f32[4,256], index: 2, kind: input, shape index: {}]
  %s3 = inlined_call_operand.hbm [shape: f32[256,256], index: 3, kind: input, shape index: {}]
  %s4 = inlined_call_operand.vmem [shape: f32[1,256], index: 4, kind: input, shape index: {}]
  %s5 = inlined_call_operand.hbm [shape: f32[2,256], index: 5, kind: output, shape index: {0}]
  %s6 = inlined_call_operand.hbm [shape: f32[2,2,256], index: 6, kind: output, shape index: {1}]
  %7 = xla_tuple %s5, %s6
  %s8 = sld [smem:[#allocation0]]
  $region54: #{tpu_custom_call.1} parent=0
    _
  %s10 = ssub.s32 1, %s8
  %s11 = scalar_select 0, %s10, %s8
  $region1: #{tpu_custom_call.1} parent=0
    #allocation2 [shape = 'u8[1024]{0}', space=vmem, size = 0x400, scoped, tag = 'input window, operand 0, single buffered']
    #allocation3 [shape = 's32[1]{0}', space=sflag, size = 0x4, scoped, tag = 'scoped memory for tpu_custom_call.1']
    #allocation4 [shape = 's32[1]{0}', space=sflag, size = 0x4, scoped, tag = 'scoped memory for tpu_custom_call.1']
    #allocation5 [shape = 'u8[311296]{0}', space=vmem, size = 0x4c000, scoped, tag = 'input window, operand 1, single buffered']
    #allocation6 [shape = 's32[1]{0}', space=sflag, size = 0x4, scoped, tag = 'scoped memory for tpu_custom_call.1']
    #allocation7 [shape = 'u8[4096]{0}', space=vmem, size = 0x1000, scoped, tag = 'input window, operand 2, single buffered']
    #allocation8 [shape = 'u8[262144]{0}', space=vmem, size = 0x40000, scoped, tag = 'input window, operand 3, single buffered']
    #allocation9 [shape = 's32[1]{0}', space=sflag, size = 0x4, scoped, tag = 'scoped memory for tpu_custom_call.1']
    #allocation10 [shape = 'u8[2048]{0}', space=vmem, size = 0x800, scoped, tag = 'output window, operand 0, single buffered']
    #allocation11 [shape = 'u8[4096]{0}', space=vmem, size = 0x1000, scoped, tag = 'output window, operand 1, single buffered']
    #allocation12 [shape = 's32[1]{0}', space=sflag, size = 0x4, scoped, tag = 'scoped memory for tpu_custom_call.1']
    %12 = vsyncpa [#allocation3], 0
    %13 = vsyncpa [#allocation6], 0
    %14 = vsyncpa [#allocation9], 0
    %15 = vsyncpa [#allocation4], 0
    %16 = vsyncpa [#allocation12], 0
    // Predicated region
    $region2: #{tpu_custom_call.1} parent=1 // pred_check
      _
    $region3: #{tpu_custom_call.1} parent=1 // pred_check_branch
      %18 = sbr.rel (0) target = $region5
    $region4: #{tpu_custom_call.1} parent=1 // pred_region
      %20 = vsyncadd [#allocation3], 0
      %s22 = sshll.u32 %s0, 4
      %s23 = int_to_ptr.hbm [resolvable:$true] %s22
      %s24 = sshll.u32 [#allocation2], 4
      %s25 = int_to_ptr.vmem [resolvable:$true] %s24
      %27 = dma.hbm_to_vmem [thread:$0]  %s23, 32, %s25, [#allocation3]
    $region5: #{tpu_custom_call.1} parent=1 // pred_fallthru
      _
    // Predicated region
    $region6: #{tpu_custom_call.1} parent=1 // pred_check
      _
    $region7: #{tpu_custom_call.1} parent=1 // pred_check_branch
      %29 = sbr.rel (0) target = $region9
    $region8: #{tpu_custom_call.1} parent=1 // pred_region
      %31 = vsyncadd [#allocation6], 0
      %s32 = sshll.u32 %s1, 4
      %s33 = int_to_ptr.hbm [resolvable:$true] %s32
      %s34 = sshll.u32 [#allocation5], 4
      %s35 = int_to_ptr.vmem [resolvable:$true] %s34
      %40 = dma.hbm_to_vmem [thread:$0]  %s33, 9728, %s35, [#allocation6], 256, 256, 16
    $region9: #{tpu_custom_call.1} parent=1 // pred_fallthru
      _
    // Predicated region
    $region10: #{tpu_custom_call.1} parent=1 // pred_check
      _
    $region11: #{tpu_custom_call.1} parent=1 // pred_check_branch
      %42 = sbr.rel (0) target = $region13
    $region12: #{tpu_custom_call.1} parent=1 // pred_region
      %44 = vsyncadd [#allocation6], 0
      %s46 = sshll.u32 %s2, 4
      %s47 = int_to_ptr.hbm [resolvable:$true] %s46
      %s48 = sshll.u32 [#allocation7], 4
      %s49 = int_to_ptr.vmem [resolvable:$true] %s48
      %51 = dma.hbm_to_vmem [thread:$0]  %s47, 128, %s49, [#allocation6]
    $region13: #{tpu_custom_call.1} parent=1 // pred_fallthru
      _
    // Predicated region
    $region14: #{tpu_custom_call.1} parent=1 // pred_check
      _
    $region15: #{tpu_custom_call.1} parent=1 // pred_check_branch
      %53 = sbr.rel (0) target = $region17
    $region16: #{tpu_custom_call.1} parent=1 // pred_region
      %55 = vsyncadd [#allocation9], 0
      %s56 = sshll.u32 %s3, 4
      %s57 = int_to_ptr.hbm [resolvable:$true] %s56
      %s58 = sshll.u32 [#allocation8], 4
      %s59 = int_to_ptr.vmem [resolvable:$true] %s58
      %64 = dma.hbm_to_vmem [thread:$0]  %s57, 8192, %s59, [#allocation9], 256, 256, 16
    $region17: #{tpu_custom_call.1} parent=1 // pred_fallthru
      _
    // Predicated region
    $region18: #{tpu_custom_call.1} parent=1 // pred_check
      _
    $region19: #{tpu_custom_call.1} parent=1 // pred_check_branch
      %66 = sbr.rel (0) target = $region21
    $region20: #{tpu_custom_call.1} parent=1 // pred_region
      _
    $region21: #{tpu_custom_call.1} parent=1 // pred_fallthru
      _
    // Predicated region
    $region22: #{tpu_custom_call.1} parent=1 // pred_check
      _
    $region23: #{tpu_custom_call.1} parent=1 // pred_check_branch
      %68 = sbr.rel (0) target = $region25
    $region24: #{tpu_custom_call.1} parent=1 // pred_region
      %70 = dma.done [#allocation3], 32
    $region25: #{tpu_custom_call.1} parent=1 // pred_fallthru
      _
    // Predicated region
    $region26: #{tpu_custom_call.1} parent=1 // pred_check
      _
    $region27: #{tpu_custom_call.1} parent=1 // pred_check_branch
      %72 = sbr.rel (0) target = $region29
    $region28: #{tpu_custom_call.1} parent=1 // pred_region
      %74 = dma.done [#allocation6], 9728
    $region29: #{tpu_custom_call.1} parent=1 // pred_fallthru
      _
    // Predicated region
    $region30: #{tpu_custom_call.1} parent=1 // pred_check
      _
    $region31: #{tpu_custom_call.1} parent=1 // pred_check_branch
      %76 = sbr.rel (0) target = $region33
    $region32: #{tpu_custom_call.1} parent=1 // pred_region
      %78 = dma.done [#allocation6], 128
    $region33: #{tpu_custom_call.1} parent=1 // pred_fallthru
      _
    // Predicated region
    $region34: #{tpu_custom_call.1} parent=1 // pred_check
      _
    $region35: #{tpu_custom_call.1} parent=1 // pred_check_branch
      %80 = sbr.rel (0) target = $region37
    $region36: #{tpu_custom_call.1} parent=1 // pred_region
      %82 = dma.done [#allocation9], 8192
    $region37: #{tpu_custom_call.1} parent=1 // pred_fallthru
      _
    %v83 = vld [vmem:[#allocation2] sm:$0x3]
    %v84 = vld [vmem:[#allocation5] sm:$0xff]
    %v85 = vld [vmem:[#allocation5 + $0x8] sm:$0xff]
    %v86 = vld [vmem:[#allocation5 + $0x10] sm:$0xff]
    %v87 = vld [vmem:[#allocation5 + $0x18] sm:$0xff]
    %v88 = vld [vmem:[#allocation7] ss:$4 sm:$0x3]
    %v90 = vperm.slane %v88, 0
    %v91 = vperm.slane %v88, 1
    %vm94 = vcmask 130048
    %v96 = vsel %vm94, %v83, 0
    %98 = vmatpush.msra.mxu0 0.0
    %99 = vmatpush.msra.mxu0 0.0
    %100 = vmatpush.msra.mxu0 0.0
    %101 = vmatpush.msra.mxu0 0.0
    %102 = vmatpush.msra.mxu0 0.0
    %103 = vmatpush.msra.mxu0 0.0
    %104 = vmatpush.msra.mxu0 0.0
    %105 = vmatpush.msra.mxu0 0.0
    %106 = vmatpush.msra.mxu0 0.0
    %107 = vmatpush.msra.mxu0 0.0
    %108 = vmatpush.msra.mxu0 0.0
    %109 = vmatpush.msra.mxu0 0.0
    %110 = vmatpush.msra.mxu0 0.0
    %111 = vmatpush.msra.mxu0 0.0
    %v112 = vand.u32 %v86, 4294901760
    %113 = vmatpush.msra.mxu0 %v112
    %v114 = vand.u32 %v84, 4294901760
    %115 = vmatpush.msra.mxu0 %v114
    %v116 = vand.u32 %v96, 4294901760
    %v117 = vsub.f32 %v96, %v116
    %v118 = vand.u32 %v117, 4294901760
    %v119 = vsub.f32 %v117, %v118
    %v120 = vand.u32 %v119, 4294901760
    %121 = vmatmul.f32.gmra.mxu0 %v120
    %v122 = vpop.f32.mrf.mxu0
    %v123 = vadd.f32 %v90, %v122
    %124 = vdwg.mxu0
    %125 = vmatpush.msra.mxu0 0.0
    %126 = vmatpush.msra.mxu0 0.0
    %127 = vmatpush.msra.mxu0 0.0
    %128 = vmatpush.msra.mxu0 0.0
    %129 = vmatpush.msra.mxu0 0.0
    %130 = vmatpush.msra.mxu0 0.0
    %131 = vmatpush.msra.mxu0 0.0
    %132 = vmatpush.msra.mxu0 0.0
    %133 = vmatpush.msra.mxu0 0.0
    %134 = vmatpush.msra.mxu0 0.0
    %135 = vmatpush.msra.mxu0 0.0
    %136 = vmatpush.msra.mxu0 0.0
    %137 = vmatpush.msra.mxu0 0.0
    %138 = vmatpush.msra.mxu0 0.0
    %v139 = vand.u32 %v86, 4294901760
    %v140 = vsub.f32 %v86, %v139
    %v141 = vand.u32 %v140, 4294901760
    %v142 = vsub.f32 %v140, %v141
    %v143 = vand.u32 %v142, 4294901760
    %144 = vmatpush.msra.mxu0 %v143
    %v145 = vand.u32 %v84, 4294901760
    %v146 = vsub.f32 %v84, %v145
    %v147 = vand.u32 %v146, 4294901760
    %v148 = vsub.f32 %v146, %v147
    %v149 = vand.u32 %v148, 4294901760
    %150 = vmatpush.msra.mxu0 %v149
    %v151 = vand.u32 %v96, 4294901760
    %152 = vmatmul.f32.gmra.mxu0 %v151
    %v153 = vpop.f32.mrf.mxu0
    %v154 = vadd.f32 %v123, %v153
    %155 = vdwg.mxu0
    %156 = vmatpush.msra.mxu0 0.0
    %157 = vmatpush.msra.mxu0 0.0
    %158 = vmatpush.msra.mxu0 0.0
    %159 = vmatpush.msra.mxu0 0.0
    %160 = vmatpush.msra.mxu0 0.0
    %161 = vmatpush.msra.mxu0 0.0
    %162 = vmatpush.msra.mxu0 0.0
    %163 = vmatpush.msra.mxu0 0.0
    %164 = vmatpush.msra.mxu0 0.0
    %165 = vmatpush.msra.mxu0 0.0
    %166 = vmatpush.msra.mxu0 0.0
    %167 = vmatpush.msra.mxu0 0.0
    %168 = vmatpush.msra.mxu0 0.0
    %169 = vmatpush.msra.mxu0 0.0
    %v170 = vand.u32 %v86, 4294901760
    %v171 = vsub.f32 %v86, %v170
    %172 = vmatpush.msra.mxu0 %v171
    %v173 = vand.u32 %v84, 4294901760
    %v174 = vsub.f32 %v84, %v173
    %175 = vmatpush.msra.mxu0 %v174
    %v176 = vand.u32 %v96, 4294901760
    %v177 = vsub.f32 %v96, %v176
    %178 = vmatmul.f32.gmra.mxu0 %v177
    %v179 = vpop.f32.mrf.mxu0
    %v180 = vadd.f32 %v154, %v179
    %181 = vdwg.mxu0
    %182 = vmatpush.msra.mxu0 0.0
    %183 = vmatpush.msra.mxu0 0.0
    %184 = vmatpush.msra.mxu0 0.0
    %185 = vmatpush.msra.mxu0 0.0
    %186 = vmatpush.msra.mxu0 0.0
    %187 = vmatpush.msra.mxu0 0.0
    %188 = vmatpush.msra.mxu0 0.0
    %189 = vmatpush.msra.mxu0 0.0
    %190 = vmatpush.msra.mxu0 0.0
    %191 = vmatpush.msra.mxu0 0.0
    %192 = vmatpush.msra.mxu0 0.0
    %193 = vmatpush.msra.mxu0 0.0
    %194 = vmatpush.msra.mxu0 0.0
    %195 = vmatpush.msra.mxu0 0.0
    %v196 = vand.u32 %v86, 4294901760
    %197 = vmatpush.msra.mxu0 %v196
    %v198 = vand.u32 %v84, 4294901760
    %199 = vmatpush.msra.mxu0 %v198
    %v200 = vand.u32 %v96, 4294901760
    %v201 = vsub.f32 %v96, %v200
    %v202 = vand.u32 %v201, 4294901760
    %203 = vmatmul.f32.gmra.mxu0 %v202
    %v204 = vpop.f32.mrf.mxu0
    %v205 = vadd.f32 %v180, %v204
    %206 = vdwg.mxu0
    %207 = vmatpush.msra.mxu0 0.0
    %208 = vmatpush.msra.mxu0 0.0
    %209 = vmatpush.msra.mxu0 0.0
    %210 = vmatpush.msra.mxu0 0.0
    %211 = vmatpush.msra.mxu0 0.0
    %212 = vmatpush.msra.mxu0 0.0
    %213 = vmatpush.msra.mxu0 0.0
    %214 = vmatpush.msra.mxu0 0.0
    %215 = vmatpush.msra.mxu0 0.0
    %216 = vmatpush.msra.mxu0 0.0
    %217 = vmatpush.msra.mxu0 0.0
    %218 = vmatpush.msra.mxu0 0.0
    %219 = vmatpush.msra.mxu0 0.0
    %220 = vmatpush.msra.mxu0 0.0
    %v221 = vand.u32 %v86, 4294901760
    %v222 = vsub.f32 %v86, %v221
    %v223 = vand.u32 %v222, 4294901760
    %224 = vmatpush.msra.mxu0 %v223
    %v225 = vand.u32 %v84, 4294901760
    %v226 = vsub.f32 %v84, %v225
    %v227 = vand.u32 %v226, 4294901760
    %228 = vmatpush.msra.mxu0 %v227
    %v229 = vand.u32 %v96, 4294901760
    %230 = vmatmul.f32.gmra.mxu0 %v229
    %v231 = vpop.f32.mrf.mxu0
    %v232 = vadd.f32 %v205, %v231
    %233 = vdwg.mxu0
    %234 = vmatpush.msra.mxu0 0.0
    %235 = vmatpush.msra.mxu0 0.0
    %236 = vmatpush.msra.mxu0 0.0
    %237 = vmatpush.msra.mxu0 0.0
    %238 = vmatpush.msra.mxu0 0.0
    %239 = vmatpush.msra.mxu0 0.0
    %240 = vmatpush.msra.mxu0 0.0
    %241 = vmatpush.msra.mxu0 0.0
    %242 = vmatpush.msra.mxu0 0.0
    %243 = vmatpush.msra.mxu0 0.0
    %244 = vmatpush.msra.mxu0 0.0
    %245 = vmatpush.msra.mxu0 0.0
    %246 = vmatpush.msra.mxu0 0.0
    %247 = vmatpush.msra.mxu0 0.0
    %v248 = vand.u32 %v86, 4294901760
    %249 = vmatpush.msra.mxu0 %v248
    %v250 = vand.u32 %v84, 4294901760
    %251 = vmatpush.msra.mxu0 %v250
    %v252 = vand.u32 %v96, 4294901760
    %253 = vmatmul.f32.gmra.mxu0 %v252
    %v254 = vpop.f32.mrf.mxu0
    %v255 = vadd.f32 %v232, %v254
    %256 = vdwg.mxu0
    %257 = vmatpush.msra.mxu0 0.0
    %258 = vmatpush.msra.mxu0 0.0
    %259 = vmatpush.msra.mxu0 0.0
    %260 = vmatpush.msra.mxu0 0.0
    %261 = vmatpush.msra.mxu0 0.0
    %262 = vmatpush.msra.mxu0 0.0
    %263 = vmatpush.msra.mxu0 0.0
    %264 = vmatpush.msra.mxu0 0.0
    %265 = vmatpush.msra.mxu0 0.0
    %266 = vmatpush.msra.mxu0 0.0
    %267 = vmatpush.msra.mxu0 0.0
    %268 = vmatpush.msra.mxu0 0.0
    %269 = vmatpush.msra.mxu0 0.0
    %270 = vmatpush.msra.mxu0 0.0
    %v271 = vand.u32 %v87, 4294901760
    %272 = vmatpush.msra.mxu0 %v271
    %v273 = vand.u32 %v85, 4294901760
    %274 = vmatpush.msra.mxu0 %v273
    %v275 = vand.u32 %v96, 4294901760
    %v276 = vsub.f32 %v96, %v275
    %v277 = vand.u32 %v276, 4294901760
    %v278 = vsub.f32 %v276, %v277
    %v279 = vand.u32 %v278, 4294901760
    %280 = vmatmul.f32.gmra.mxu0 %v279
    %v281 = vpop.f32.mrf.mxu0
    %v282 = vadd.f32 %v91, %v281
    %283 = vdwg.mxu0
    %284 = vmatpush.msra.mxu0 0.0
    %285 = vmatpush.msra.mxu0 0.0
    %286 = vmatpush.msra.mxu0 0.0
    %287 = vmatpush.msra.mxu0 0.0
    %288 = vmatpush.msra.mxu0 0.0
    %289 = vmatpush.msra.mxu0 0.0
    %290 = vmatpush.msra.mxu0 0.0
    %291 = vmatpush.msra.mxu0 0.0
    %292 = vmatpush.msra.mxu0 0.0
    %293 = vmatpush.msra.mxu0 0.0
    %294 = vmatpush.msra.mxu0 0.0
    %295 = vmatpush.msra.mxu0 0.0
    %296 = vmatpush.msra.mxu0 0.0
    %297 = vmatpush.msra.mxu0 0.0
    %v298 = vand.u32 %v87, 4294901760
    %v299 = vsub.f32 %v87, %v298
    %v300 = vand.u32 %v299, 4294901760
    %v301 = vsub.f32 %v299, %v300
    %v302 = vand.u32 %v301, 4294901760
    %303 = vmatpush.msra.mxu0 %v302
    %v304 = vand.u32 %v85, 4294901760
    %v305 = vsub.f32 %v85, %v304
    %v306 = vand.u32 %v305, 4294901760
    %v307 = vsub.f32 %v305, %v306
    %v308 = vand.u32 %v307, 4294901760
    %309 = vmatpush.msra.mxu0 %v308
    %v310 = vand.u32 %v96, 4294901760
    %311 = vmatmul.f32.gmra.mxu0 %v310
    %v312 = vpop.f32.mrf.mxu0
    %v313 = vadd.f32 %v282, %v312
    %314 = vdwg.mxu0
    %315 = vmatpush.msra.mxu0 0.0
    %316 = vmatpush.msra.mxu0 0.0
    %317 = vmatpush.msra.mxu0 0.0
    %318 = vmatpush.msra.mxu0 0.0
    %319 = vmatpush.msra.mxu0 0.0
    %320 = vmatpush.msra.mxu0 0.0
    %321 = vmatpush.msra.mxu0 0.0
    %322 = vmatpush.msra.mxu0 0.0
    %323 = vmatpush.msra.mxu0 0.0
    %324 = vmatpush.msra.mxu0 0.0
    %325 = vmatpush.msra.mxu0 0.0
    %326 = vmatpush.msra.mxu0 0.0
    %327 = vmatpush.msra.mxu0 0.0
    %328 = vmatpush.msra.mxu0 0.0
    %v329 = vand.u32 %v87, 4294901760
    %v330 = vsub.f32 %v87, %v329
    %331 = vmatpush.msra.mxu0 %v330
    %v332 = vand.u32 %v85, 4294901760
    %v333 = vsub.f32 %v85, %v332
    %334 = vmatpush.msra.mxu0 %v333
    %v335 = vand.u32 %v96, 4294901760
    %v336 = vsub.f32 %v96, %v335
    %337 = vmatmul.f32.gmra.mxu0 %v336
    %v338 = vpop.f32.mrf.mxu0
    %v339 = vadd.f32 %v313, %v338
    %340 = vdwg.mxu0
    %341 = vmatpush.msra.mxu0 0.0
    %342 = vmatpush.msra.mxu0 0.0
    %343 = vmatpush.msra.mxu0 0.0
    %344 = vmatpush.msra.mxu0 0.0
    %345 = vmatpush.msra.mxu0 0.0
    %346 = vmatpush.msra.mxu0 0.0
    %347 = vmatpush.msra.mxu0 0.0
    %348 = vmatpush.msra.mxu0 0.0
    %349 = vmatpush.msra.mxu0 0.0
    %350 = vmatpush.msra.mxu0 0.0
    %351 = vmatpush.msra.mxu0 0.0
    %352 = vmatpush.msra.mxu0 0.0
    %353 = vmatpush.msra.mxu0 0.0
    %354 = vmatpush.msra.mxu0 0.0
    %v355 = vand.u32 %v87, 4294901760
    %356 = vmatpush.msra.mxu0 %v355
    %v357 = vand.u32 %v85, 4294901760
    %358 = vmatpush.msra.mxu0 %v357
    %v359 = vand.u32 %v96, 4294901760
    %v360 = vsub.f32 %v96, %v359
    %v361 = vand.u32 %v360, 4294901760
    %362 = vmatmul.f32.gmra.mxu0 %v361
    %v363 = vpop.f32.mrf.mxu0
    %v364 = vadd.f32 %v339, %v363
    %365 = vdwg.mxu0
    %366 = vmatpush.msra.mxu0 0.0
    %367 = vmatpush.msra.mxu0 0.0
    %368 = vmatpush.msra.mxu0 0.0
    %369 = vmatpush.msra.mxu0 0.0
    %370 = vmatpush.msra.mxu0 0.0
    %371 = vmatpush.msra.mxu0 0.0
    %372 = vmatpush.msra.mxu0 0.0
    %373 = vmatpush.msra.mxu0 0.0
    %374 = vmatpush.msra.mxu0 0.0
    %375 = vmatpush.msra.mxu0 0.0
    %376 = vmatpush.msra.mxu0 0.0
    %377 = vmatpush.msra.mxu0 0.0
    %378 = vmatpush.msra.mxu0 0.0
    %379 = vmatpush.msra.mxu0 0.0
    %v380 = vand.u32 %v87, 4294901760
    %v381 = vsub.f32 %v87, %v380
    %v382 = vand.u32 %v381, 4294901760
    %383 = vmatpush.msra.mxu0 %v382
    %v384 = vand.u32 %v85, 4294901760
    %v385 = vsub.f32 %v85, %v384
    %v386 = vand.u32 %v385, 4294901760
    %387 = vmatpush.msra.mxu0 %v386
    %v388 = vand.u32 %v96, 4294901760
    %389 = vmatmul.f32.gmra.mxu0 %v388
    %v390 = vpop.f32.mrf.mxu0
    %v391 = vadd.f32 %v364, %v390
    %392 = vdwg.mxu0
    %393 = vmatpush.msra.mxu0 0.0
    %394 = vmatpush.msra.mxu0 0.0
    %395 = vmatpush.msra.mxu0 0.0
    %396 = vmatpush.msra.mxu0 0.0
    %397 = vmatpush.msra.mxu0 0.0
    %398 = vmatpush.msra.mxu0 0.0
    %399 = vmatpush.msra.mxu0 0.0
    %400 = vmatpush.msra.mxu0 0.0
    %401 = vmatpush.msra.mxu0 0.0
    %402 = vmatpush.msra.mxu0 0.0
    %403 = vmatpush.msra.mxu0 0.0
    %404 = vmatpush.msra.mxu0 0.0
    %405 = vmatpush.msra.mxu0 0.0
    %406 = vmatpush.msra.mxu0 0.0
    %v407 = vand.u32 %v87, 4294901760
    %408 = vmatpush.msra.mxu0 %v407
    %v409 = vand.u32 %v85, 4294901760
    %410 = vmatpush.msra.mxu0 %v409
    %v411 = vand.u32 %v96, 4294901760
    %412 = vmatmul.f32.gmra.mxu0 %v411
    %v413 = vpop.f32.mrf.mxu0
    %v414 = vadd.f32 %v391, %v413
    %415 = vdwg.mxu0
    %v416 = vtanh.pop %v255
    %v417 = vtanh.pop %v414
    %v418 = vld [vmem:[#allocation5 + $0x20] sm:$0xff]
    %v419 = vld [vmem:[#allocation5 + $0x28] sm:$0xff]
    %v420 = vld [vmem:[#allocation5 + $0x30] sm:$0xff]
    %v421 = vld [vmem:[#allocation5 + $0x38] sm:$0xff]
    %v422 = vld [vmem:[#allocation5 + $0x40] sm:$0xff]
    %v423 = vld [vmem:[#allocation5 + $0x48] sm:$0xff]
    %v424 = vld [vmem:[#allocation5 + $0x50] sm:$0xff]
    %v425 = vld [vmem:[#allocation5 + $0x58] sm:$0xff]
    %v426 = vld [vmem:[#allocation5 + $0x60] sm:$0xff]
    %v427 = vld [vmem:[#allocation5 + $0x68] sm:$0xff]
    %v428 = vld [vmem:[#allocation5 + $0x70] sm:$0xff]
    %v429 = vld [vmem:[#allocation5 + $0x78] sm:$0xff]
    %v430 = vld [vmem:[#allocation5 + $0x80] sm:$0xff]
    %v431 = vld [vmem:[#allocation5 + $0x88] sm:$0xff]
    %v432 = vld [vmem:[#allocation5 + $0x90] sm:$0xff]
    %v433 = vld [vmem:[#allocation5 + $0x98] sm:$0xff]
    %v434 = vld [vmem:[#allocation5 + $0xa0] sm:$0xff]
    %v435 = vld [vmem:[#allocation5 + $0xa8] sm:$0xff]
    %v436 = vld [vmem:[#allocation5 + $0xb0] sm:$0xff]
    %v437 = vld [vmem:[#allocation5 + $0xb8] sm:$0xff]
    %v438 = vld [vmem:[#allocation5 + $0xc0] sm:$0xff]
    %v439 = vld [vmem:[#allocation5 + $0xc8] sm:$0xff]
    %v440 = vld [vmem:[#allocation5 + $0xd0] sm:$0xff]
    %v441 = vld [vmem:[#allocation5 + $0xd8] sm:$0xff]
    %v442 = vld [vmem:[#allocation5 + $0xe0] sm:$0xff]
    %v443 = vld [vmem:[#allocation5 + $0xe8] sm:$0xff]
    %v444 = vld [vmem:[#allocation5 + $0xf0] sm:$0xff]
    %v445 = vld [vmem:[#allocation5 + $0xf8] sm:$0xff]
    %v446 = vld [vmem:[#allocation5 + $0x100] sm:$0xff]
    %v447 = vld [vmem:[#allocation5 + $0x108] sm:$0xff]
    %v448 = vld [vmem:[#allocation5 + $0x110] sm:$0xff]
    %v449 = vld [vmem:[#allocation5 + $0x118] sm:$0xff]
    %v450 = vld [vmem:[#allocation5 + $0x120] sm:$0xff]
    %v451 = vld [vmem:[#allocation5 + $0x128] sm:$0xff]
    %v452 = vld [vmem:[#allocation5 + $0x130] sm:$0xff]
    %v453 = vld [vmem:[#allocation5 + $0x138] sm:$0xff]
    %v454 = vld [vmem:[#allocation5 + $0x140] sm:$0xff]
    %v455 = vld [vmem:[#allocation5 + $0x148] sm:$0xff]
    %v456 = vld [vmem:[#allocation5 + $0x150] sm:$0xff]
    %v457 = vld [vmem:[#allocation5 + $0x158] sm:$0xff]
    %v458 = vld [vmem:[#allocation5 + $0x160] sm:$0xff]
    %v459 = vld [vmem:[#allocation5 + $0x168] sm:$0xff]
    %v460 = vld [vmem:[#allocation5 + $0x170] sm:$0xff]
    %v461 = vld [vmem:[#allocation5 + $0x178] sm:$0xff]
    %v462 = vld [vmem:[#allocation5 + $0x180] sm:$0xff]
    %v463 = vld [vmem:[#allocation5 + $0x188] sm:$0xff]
    %v464 = vld [vmem:[#allocation5 + $0x190] sm:$0xff]
    %v465 = vld [vmem:[#allocation5 + $0x198] sm:$0xff]
    %v466 = vld [vmem:[#allocation5 + $0x1a0] sm:$0xff]
    %v467 = vld [vmem:[#allocation5 + $0x1a8] sm:$0xff]
    %v468 = vld [vmem:[#allocation5 + $0x1b0] sm:$0xff]
    %v469 = vld [vmem:[#allocation5 + $0x1b8] sm:$0xff]
    %v470 = vld [vmem:[#allocation5 + $0x1c0] sm:$0xff]
    %v471 = vld [vmem:[#allocation5 + $0x1c8] sm:$0xff]
    %v472 = vld [vmem:[#allocation5 + $0x1d0] sm:$0xff]
    %v473 = vld [vmem:[#allocation5 + $0x1d8] sm:$0xff]
    %v474 = vld [vmem:[#allocation5 + $0x1e0] sm:$0xff]
    %v475 = vld [vmem:[#allocation5 + $0x1e8] sm:$0xff]
    %v476 = vld [vmem:[#allocation5 + $0x1f0] sm:$0xff]
    %v477 = vld [vmem:[#allocation5 + $0x1f8] sm:$0xff]
    %v478 = vld [vmem:[#allocation5 + $0x200] sm:$0xff]
    %v479 = vld [vmem:[#allocation5 + $0x208] sm:$0xff]
    %v480 = vld [vmem:[#allocation5 + $0x210] sm:$0xff]
    %v481 = vld [vmem:[#allocation5 + $0x218] sm:$0xff]
    %s482 = scalar_lea.vmem [#allocation7], 1
    %v483 = vld [vmem:[%s482] ss:$4 sm:$0x3]
    %v485 = vperm.slane %v483, 0
    %v486 = vperm.slane %v483, 1
    %v489 = vand.u32 %v448, 4294901760
    %490 = vmatpush.msra.mxu0 %v489
    %v491 = vand.u32 %v446, 4294901760
    %492 = vmatpush.msra.mxu0 %v491
    %v493 = vand.u32 %v444, 4294901760
    %494 = vmatpush.msra.mxu0 %v493
    %v495 = vand.u32 %v442, 4294901760
    %496 = vmatpush.msra.mxu0 %v495
    %v497 = vand.u32 %v440, 4294901760
    %498 = vmatpush.msra.mxu0 %v497
    %v499 = vand.u32 %v438, 4294901760
    %500 = vmatpush.msra.mxu0 %v499
    %v501 = vand.u32 %v436, 4294901760
    %502 = vmatpush.msra.mxu0 %v501
    %v503 = vand.u32 %v434, 4294901760
    %504 = vmatpush.msra.mxu0 %v503
    %v505 = vand.u32 %v432, 4294901760
    %506 = vmatpush.msra.mxu0 %v505
    %v507 = vand.u32 %v430, 4294901760
    %508 = vmatpush.msra.mxu0 %v507
    %v509 = vand.u32 %v428, 4294901760
    %510 = vmatpush.msra.mxu0 %v509
    %v511 = vand.u32 %v426, 4294901760
    %512 = vmatpush.msra.mxu0 %v511
    %v513 = vand.u32 %v424, 4294901760
    %514 = vmatpush.msra.mxu0 %v513
    %v515 = vand.u32 %v422, 4294901760
    %516 = vmatpush.msra.mxu0 %v515
    %v517 = vand.u32 %v420, 4294901760
    %518 = vmatpush.msra.mxu0 %v517
    %v519 = vand.u32 %v418, 4294901760
    %520 = vmatpush.msra.mxu0 %v519
    %v521 = vand.u32 %v416, 4294901760
    %v522 = vsub.f32 %v416, %v521
    %v523 = vand.u32 %v522, 4294901760
    %v524 = vsub.f32 %v522, %v523
    %v525 = vand.u32 %v524, 4294901760
    %526 = vmatmul.f32.gmra.mxu0 %v525
    %v527 = vpop.f32.mrf.mxu0
    %v528 = vadd.f32 %v485, %v527
    %529 = vdwg.mxu0
    %v530 = vand.u32 %v448, 4294901760
    %v531 = vsub.f32 %v448, %v530
    %v532 = vand.u32 %v531, 4294901760
    %v533 = vsub.f32 %v531, %v532
    %v534 = vand.u32 %v533, 4294901760
    %535 = vmatpush.msra.mxu0 %v534
    %v536 = vand.u32 %v446, 4294901760
    %v537 = vsub.f32 %v446, %v536
    %v538 = vand.u32 %v537, 4294901760
    %v539 = vsub.f32 %v537, %v538
    %v540 = vand.u32 %v539, 4294901760
    %541 = vmatpush.msra.mxu0 %v540
    %v542 = vand.u32 %v444, 4294901760
    %v543 = vsub.f32 %v444, %v542
    %v544 = vand.u32 %v543, 4294901760
    %v545 = vsub.f32 %v543, %v544
    %v546 = vand.u32 %v545, 4294901760
    %547 = vmatpush.msra.mxu0 %v546
    %v548 = vand.u32 %v442, 4294901760
    %v549 = vsub.f32 %v442, %v548
    %v550 = vand.u32 %v549, 4294901760
    %v551 = vsub.f32 %v549, %v550
    %v552 = vand.u32 %v551, 4294901760
    %553 = vmatpush.msra.mxu0 %v552
    %v554 = vand.u32 %v440, 4294901760
    %v555 = vsub.f32 %v440, %v554
    %v556 = vand.u32 %v555, 4294901760
    %v557 = vsub.f32 %v555, %v556
    %v558 = vand.u32 %v557, 4294901760
    %559 = vmatpush.msra.mxu0 %v558
    %v560 = vand.u32 %v438, 4294901760
    %v561 = vsub.f32 %v438, %v560
    %v562 = vand.u32 %v561, 4294901760
    %v563 = vsub.f32 %v561, %v562
    %v564 = vand.u32 %v563, 4294901760
    %565 = vmatpush.msra.mxu0 %v564
    %v566 = vand.u32 %v436, 4294901760
    %v567 = vsub.f32 %v436, %v566
    %v568 = vand.u32 %v567, 4294901760
    %v569 = vsub.f32 %v567, %v568
    %v570 = vand.u32 %v569, 4294901760
    %571 = vmatpush.msra.mxu0 %v570
    %v572 = vand.u32 %v434, 4294901760
    %v573 = vsub.f32 %v434, %v572
    %v574 = vand.u32 %v573, 4294901760
    %v575 = vsub.f32 %v573, %v574
    %v576 = vand.u32 %v575, 4294901760
    %577 = vmatpush.msra.mxu0 %v576
    %v578 = vand.u32 %v432, 4294901760
    %v579 = vsub.f32 %v432, %v578
    %v580 = vand.u32 %v579, 4294901760
    %v581 = vsub.f32 %v579, %v580
    %v582 = vand.u32 %v581, 4294901760
    %583 = vmatpush.msra.mxu0 %v582
    %v584 = vand.u32 %v430, 4294901760
    %v585 = vsub.f32 %v430, %v584
    %v586 = vand.u32 %v585, 4294901760
    %v587 = vsub.f32 %v585, %v586
    %v588 = vand.u32 %v587, 4294901760
    %589 = vmatpush.msra.mxu0 %v588
    %v590 = vand.u32 %v428, 4294901760
    %v591 = vsub.f32 %v428, %v590
    %v592 = vand.u32 %v591, 4294901760
    %v593 = vsub.f32 %v591, %v592
    %v594 = vand.u32 %v593, 4294901760
    %595 = vmatpush.msra.mxu0 %v594
    %v596 = vand.u32 %v426, 4294901760
    %v597 = vsub.f32 %v426, %v596
    %v598 = vand.u32 %v597, 4294901760
    %v599 = vsub.f32 %v597, %v598
    %v600 = vand.u32 %v599, 4294901760
    %601 = vmatpush.msra.mxu0 %v600
    %v602 = vand.u32 %v424, 4294901760
    %v603 = vsub.f32 %v424, %v602
    %v604 = vand.u32 %v603, 4294901760
    %v605 = vsub.f32 %v603, %v604
    %v606 = vand.u32 %v605, 4294901760
    %607 = vmatpush.msra.mxu0 %v606
    %v608 = vand.u32 %v422, 4294901760
    %v609 = vsub.f32 %v422, %v608
    %v610 = vand.u32 %v609, 4294901760
    %v611 = vsub.f32 %v609, %v610
    %v612 = vand.u32 %v611, 4294901760
    %613 = vmatpush.msra.mxu0 %v612
    %v614 = vand.u32 %v420, 4294901760
    %v615 = vsub.f32 %v420, %v614
    %v616 = vand.u32 %v615, 4294901760
    %v617 = vsub.f32 %v615, %v616
    %v618 = vand.u32 %v617, 4294901760
    %619 = vmatpush.msra.mxu0 %v618
    %v620 = vand.u32 %v418, 4294901760
    %v621 = vsub.f32 %v418, %v620
    %v622 = vand.u32 %v621, 4294901760
    %v623 = vsub.f32 %v621, %v622
    %v624 = vand.u32 %v623, 4294901760
    %625 = vmatpush.msra.mxu0 %v624
    %v626 = vand.u32 %v416, 4294901760
    %627 = vmatmul.f32.gmra.mxu0 %v626
    %v628 = vpop.f32.mrf.mxu0
    %v629 = vadd.f32 %v528, %v628
    %630 = vdwg.mxu0
    %v631 = vand.u32 %v448, 4294901760
    %v632 = vsub.f32 %v448, %v631
    %633 = vmatpush.msra.mxu0 %v632
    %v634 = vand.u32 %v446, 4294901760
    %v635 = vsub.f32 %v446, %v634
    %636 = vmatpush.msra.mxu0 %v635
    %v637 = vand.u32 %v444, 4294901760
    %v638 = vsub.f32 %v444, %v637
    %639 = vmatpush.msra.mxu0 %v638
    %v640 = vand.u32 %v442, 4294901760
    %v641 = vsub.f32 %v442, %v640
    %642 = vmatpush.msra.mxu0 %v641
    %v643 = vand.u32 %v440, 4294901760
    %v644 = vsub.f32 %v440, %v643
    %645 = vmatpush.msra.mxu0 %v644
    %v646 = vand.u32 %v438, 4294901760
    %v647 = vsub.f32 %v438, %v646
    %648 = vmatpush.msra.mxu0 %v647
    %v649 = vand.u32 %v436, 4294901760
    %v650 = vsub.f32 %v436, %v649
    %651 = vmatpush.msra.mxu0 %v650
    %v652 = vand.u32 %v434, 4294901760
    %v653 = vsub.f32 %v434, %v652
    %654 = vmatpush.msra.mxu0 %v653
    %v655 = vand.u32 %v432, 4294901760
    %v656 = vsub.f32 %v432, %v655
    %657 = vmatpush.msra.mxu0 %v656
    %v658 = vand.u32 %v430, 4294901760
    %v659 = vsub.f32 %v430, %v658
    %660 = vmatpush.msra.mxu0 %v659
    %v661 = vand.u32 %v428, 4294901760
    %v662 = vsub.f32 %v428, %v661
    %663 = vmatpush.msra.mxu0 %v662
    %v664 = vand.u32 %v426, 4294901760
    %v665 = vsub.f32 %v426, %v664
    %666 = vmatpush.msra.mxu0 %v665
    %v667 = vand.u32 %v424, 4294901760
    %v668 = vsub.f32 %v424, %v667
    %669 = vmatpush.msra.mxu0 %v668
    %v670 = vand.u32 %v422, 4294901760
    %v671 = vsub.f32 %v422, %v670
    %672 = vmatpush.msra.mxu0 %v671
    %v673 = vand.u32 %v420, 4294901760
    %v674 = vsub.f32 %v420, %v673
    %675 = vmatpush.msra.mxu0 %v674
    %v676 = vand.u32 %v418, 4294901760
    %v677 = vsub.f32 %v418, %v676
    %678 = vmatpush.msra.mxu0 %v677
    %v679 = vand.u32 %v416, 4294901760
    %v680 = vsub.f32 %v416, %v679
    %681 = vmatmul.f32.gmra.mxu0 %v680
    %v682 = vpop.f32.mrf.mxu0
    %v683 = vadd.f32 %v629, %v682
    %684 = vdwg.mxu0
    %v685 = vand.u32 %v448, 4294901760
    %686 = vmatpush.msra.mxu0 %v685
    %v687 = vand.u32 %v446, 4294901760
    %688 = vmatpush.msra.mxu0 %v687
    %v689 = vand.u32 %v444, 4294901760
    %690 = vmatpush.msra.mxu0 %v689
    %v691 = vand.u32 %v442, 4294901760
    %692 = vmatpush.msra.mxu0 %v691
    %v693 = vand.u32 %v440, 4294901760
    %694 = vmatpush.msra.mxu0 %v693
    %v695 = vand.u32 %v438, 4294901760
    %696 = vmatpush.msra.mxu0 %v695
    %v697 = vand.u32 %v436, 4294901760
    %698 = vmatpush.msra.mxu0 %v697
    %v699 = vand.u32 %v434, 4294901760
    %700 = vmatpush.msra.mxu0 %v699
    %v701 = vand.u32 %v432, 4294901760
    %702 = vmatpush.msra.mxu0 %v701
    %v703 = vand.u32 %v430, 4294901760
    %704 = vmatpush.msra.mxu0 %v703
    %v705 = vand.u32 %v428, 4294901760
    %706 = vmatpush.msra.mxu0 %v705
    %v707 = vand.u32 %v426, 4294901760
    %708 = vmatpush.msra.mxu0 %v707
    %v709 = vand.u32 %v424, 4294901760
    %710 = vmatpush.msra.mxu0 %v709
    %v711 = vand.u32 %v422, 4294901760
    %712 = vmatpush.msra.mxu0 %v711
    %v713 = vand.u32 %v420, 4294901760
    %714 = vmatpush.msra.mxu0 %v713
    %v715 = vand.u32 %v418, 4294901760
    %716 = vmatpush.msra.mxu0 %v715
    %v717 = vand.u32 %v416, 4294901760
    %v718 = vsub.f32 %v416, %v717
    %v719 = vand.u32 %v718, 4294901760
    %720 = vmatmul.f32.gmra.mxu0 %v719
    %v721 = vpop.f32.mrf.mxu0
    %v722 = vadd.f32 %v683, %v721
    %723 = vdwg.mxu0
    %v724 = vand.u32 %v448, 4294901760
    %v725 = vsub.f32 %v448, %v724
    %v726 = vand.u32 %v725, 4294901760
    %727 = vmatpush.msra.mxu0 %v726
    %v728 = vand.u32 %v446, 4294901760
    %v729 = vsub.f32 %v446, %v728
    %v730 = vand.u32 %v729, 4294901760
    %731 = vmatpush.msra.mxu0 %v730
    %v732 = vand.u32 %v444, 4294901760
    %v733 = vsub.f32 %v444, %v732
    %v734 = vand.u32 %v733, 4294901760
    %735 = vmatpush.msra.mxu0 %v734
    %v736 = vand.u32 %v442, 4294901760
    %v737 = vsub.f32 %v442, %v736
    %v738 = vand.u32 %v737, 4294901760
    %739 = vmatpush.msra.mxu0 %v738
    %v740 = vand.u32 %v440, 4294901760
    %v741 = vsub.f32 %v440, %v740
    %v742 = vand.u32 %v741, 4294901760
    %743 = vmatpush.msra.mxu0 %v742
    %v744 = vand.u32 %v438, 4294901760
    %v745 = vsub.f32 %v438, %v744
    %v746 = vand.u32 %v745, 4294901760
    %747 = vmatpush.msra.mxu0 %v746
    %v748 = vand.u32 %v436, 4294901760
    %v749 = vsub.f32 %v436, %v748
    %v750 = vand.u32 %v749, 4294901760
    %751 = vmatpush.msra.mxu0 %v750
    %v752 = vand.u32 %v434, 4294901760
    %v753 = vsub.f32 %v434, %v752
    %v754 = vand.u32 %v753, 4294901760
    %755 = vmatpush.msra.mxu0 %v754
    %v756 = vand.u32 %v432, 4294901760
    %v757 = vsub.f32 %v432, %v756
    %v758 = vand.u32 %v757, 4294901760
    %759 = vmatpush.msra.mxu0 %v758
    %v760 = vand.u32 %v430, 4294901760
    %v761 = vsub.f32 %v430, %v760
    %v762 = vand.u32 %v761, 4294901760
    %763 = vmatpush.msra.mxu0 %v762
    %v764 = vand.u32 %v428, 4294901760
    %v765 = vsub.f32 %v428, %v764
    %v766 = vand.u32 %v765, 4294901760
    %767 = vmatpush.msra.mxu0 %v766
    %v768 = vand.u32 %v426, 4294901760
    %v769 = vsub.f32 %v426, %v768
    %v770 = vand.u32 %v769, 4294901760
    %771 = vmatpush.msra.mxu0 %v770
    %v772 = vand.u32 %v424, 4294901760
    %v773 = vsub.f32 %v424, %v772
    %v774 = vand.u32 %v773, 4294901760
    %775 = vmatpush.msra.mxu0 %v774
    %v776 = vand.u32 %v422, 4294901760
    %v777 = vsub.f32 %v422, %v776
    %v778 = vand.u32 %v777, 4294901760
    %779 = vmatpush.msra.mxu0 %v778
    %v780 = vand.u32 %v420, 4294901760
    %v781 = vsub.f32 %v420, %v780
    %v782 = vand.u32 %v781, 4294901760
    %783 = vmatpush.msra.mxu0 %v782
    %v784 = vand.u32 %v418, 4294901760
    %v785 = vsub.f32 %v418, %v784
    %v786 = vand.u32 %v785, 4294901760
    %787 = vmatpush.msra.mxu0 %v786
    %v788 = vand.u32 %v416, 4294901760
    %789 = vmatmul.f32.gmra.mxu0 %v788
    %v790 = vpop.f32.mrf.mxu0
    %v791 = vadd.f32 %v722, %v790
    %792 = vdwg.mxu0
    %v793 = vand.u32 %v448, 4294901760
    %794 = vmatpush.msra.mxu0 %v793
    %v795 = vand.u32 %v446, 4294901760
    %796 = vmatpush.msra.mxu0 %v795
    %v797 = vand.u32 %v444, 4294901760
    %798 = vmatpush.msra.mxu0 %v797
    %v799 = vand.u32 %v442, 4294901760
    %800 = vmatpush.msra.mxu0 %v799
    %v801 = vand.u32 %v440, 4294901760
    %802 = vmatpush.msra.mxu0 %v801
    %v803 = vand.u32 %v438, 4294901760
    %804 = vmatpush.msra.mxu0 %v803
    %v805 = vand.u32 %v436, 4294901760
    %806 = vmatpush.msra.mxu0 %v805
    %v807 = vand.u32 %v434, 4294901760
    %808 = vmatpush.msra.mxu0 %v807
    %v809 = vand.u32 %v432, 4294901760
    %810 = vmatpush.msra.mxu0 %v809
    %v811 = vand.u32 %v430, 4294901760
    %812 = vmatpush.msra.mxu0 %v811
    %v813 = vand.u32 %v428, 4294901760
    %814 = vmatpush.msra.mxu0 %v813
    %v815 = vand.u32 %v426, 4294901760
    %816 = vmatpush.msra.mxu0 %v815
    %v817 = vand.u32 %v424, 4294901760
    %818 = vmatpush.msra.mxu0 %v817
    %v819 = vand.u32 %v422, 4294901760
    %820 = vmatpush.msra.mxu0 %v819
    %v821 = vand.u32 %v420, 4294901760
    %822 = vmatpush.msra.mxu0 %v821
    %v823 = vand.u32 %v418, 4294901760
    %824 = vmatpush.msra.mxu0 %v823
    %v825 = vand.u32 %v416, 4294901760
    %826 = vmatmul.f32.gmra.mxu0 %v825
    %v827 = vpop.f32.mrf.mxu0
    %v828 = vadd.f32 %v791, %v827
    %829 = vdwg.mxu0
    %v830 = vand.u32 %v480, 4294901760
    %831 = vmatpush.msra.mxu0 %v830
    %v832 = vand.u32 %v478, 4294901760
    %833 = vmatpush.msra.mxu0 %v832
    %v834 = vand.u32 %v476, 4294901760
    %835 = vmatpush.msra.mxu0 %v834
    %v836 = vand.u32 %v474, 4294901760
    %837 = vmatpush.msra.mxu0 %v836
    %v838 = vand.u32 %v472, 4294901760
    %839 = vmatpush.msra.mxu0 %v838
    %v840 = vand.u32 %v470, 4294901760
    %841 = vmatpush.msra.mxu0 %v840
    %v842 = vand.u32 %v468, 4294901760
    %843 = vmatpush.msra.mxu0 %v842
    %v844 = vand.u32 %v466, 4294901760
    %845 = vmatpush.msra.mxu0 %v844
    %v846 = vand.u32 %v464, 4294901760
    %847 = vmatpush.msra.mxu0 %v846
    %v848 = vand.u32 %v462, 4294901760
    %849 = vmatpush.msra.mxu0 %v848
    %v850 = vand.u32 %v460, 4294901760
    %851 = vmatpush.msra.mxu0 %v850
    %v852 = vand.u32 %v458, 4294901760
    %853 = vmatpush.msra.mxu0 %v852
    %v854 = vand.u32 %v456, 4294901760
    %855 = vmatpush.msra.mxu0 %v854
    %v856 = vand.u32 %v454, 4294901760
    %857 = vmatpush.msra.mxu0 %v856
    %v858 = vand.u32 %v452, 4294901760
    %859 = vmatpush.msra.mxu0 %v858
    %v860 = vand.u32 %v450, 4294901760
    %861 = vmatpush.msra.mxu0 %v860
    %v862 = vand.u32 %v417, 4294901760
    %v863 = vsub.f32 %v417, %v862
    %v864 = vand.u32 %v863, 4294901760
    %v865 = vsub.f32 %v863, %v864
    %v866 = vand.u32 %v865, 4294901760
    %867 = vmatmul.f32.gmra.mxu0 %v866
    %v868 = vpop.f32.mrf.mxu0
    %v869 = vadd.f32 %v828, %v868
    %870 = vdwg.mxu0
    %v871 = vand.u32 %v480, 4294901760
    %v872 = vsub.f32 %v480, %v871
    %v873 = vand.u32 %v872, 4294901760
    %v874 = vsub.f32 %v872, %v873
    %v875 = vand.u32 %v874, 4294901760
    %876 = vmatpush.msra.mxu0 %v875
    %v877 = vand.u32 %v478, 4294901760
    %v878 = vsub.f32 %v478, %v877
    %v879 = vand.u32 %v878, 4294901760
    %v880 = vsub.f32 %v878, %v879
    %v881 = vand.u32 %v880, 4294901760
    %882 = vmatpush.msra.mxu0 %v881
    %v883 = vand.u32 %v476, 4294901760
    %v884 = vsub.f32 %v476, %v883
    %v885 = vand.u32 %v884, 4294901760
    %v886 = vsub.f32 %v884, %v885
    %v887 = vand.u32 %v886, 4294901760
    %888 = vmatpush.msra.mxu0 %v887
    %v889 = vand.u32 %v474, 4294901760
    %v890 = vsub.f32 %v474, %v889
    %v891 = vand.u32 %v890, 4294901760
    %v892 = vsub.f32 %v890, %v891
    %v893 = vand.u32 %v892, 4294901760
    %894 = vmatpush.msra.mxu0 %v893
    %v895 = vand.u32 %v472, 4294901760
    %v896 = vsub.f32 %v472, %v895
    %v897 = vand.u32 %v896, 4294901760
    %v898 = vsub.f32 %v896, %v897
    %v899 = vand.u32 %v898, 4294901760
    %900 = vmatpush.msra.mxu0 %v899
    %v901 = vand.u32 %v470, 4294901760
    %v902 = vsub.f32 %v470, %v901
    %v903 = vand.u32 %v902, 4294901760
    %v904 = vsub.f32 %v902, %v903
    %v905 = vand.u32 %v904, 4294901760
    %906 = vmatpush.msra.mxu0 %v905
    %v907 = vand.u32 %v468, 4294901760
    %v908 = vsub.f32 %v468, %v907
    %v909 = vand.u32 %v908, 4294901760
    %v910 = vsub.f32 %v908, %v909
    %v911 = vand.u32 %v910, 4294901760
    %912 = vmatpush.msra.mxu0 %v911
    %v913 = vand.u32 %v466, 4294901760
    %v914 = vsub.f32 %v466, %v913
    %v915 = vand.u32 %v914, 4294901760
    %v916 = vsub.f32 %v914, %v915
    %v917 = vand.u32 %v916, 4294901760
    %918 = vmatpush.msra.mxu0 %v917
    %v919 = vand.u32 %v464, 4294901760
    %v920 = vsub.f32 %v464, %v919
    %v921 = vand.u32 %v920, 4294901760
    %v922 = vsub.f32 %v920, %v921
    %v923 = vand.u32 %v922, 4294901760
    %924 = vmatpush.msra.mxu0 %v923
    %v925 = vand.u32 %v462, 4294901760
    %v926 = vsub.f32 %v462, %v925
    %v927 = vand.u32 %v926, 4294901760
    %v928 = vsub.f32 %v926, %v927
    %v929 = vand.u32 %v928, 4294901760
    %930 = vmatpush.msra.mxu0 %v929
    %v931 = vand.u32 %v460, 4294901760
    %v932 = vsub.f32 %v460, %v931
    %v933 = vand.u32 %v932, 4294901760
    %v934 = vsub.f32 %v932, %v933
    %v935 = vand.u32 %v934, 4294901760
    %936 = vmatpush.msra.mxu0 %v935
    %v937 = vand.u32 %v458, 4294901760
    %v938 = vsub.f32 %v458, %v937
    %v939 = vand.u32 %v938, 4294901760
    %v940 = vsub.f32 %v938, %v939
    %v941 = vand.u32 %v940, 4294901760
    %942 = vmatpush.msra.mxu0 %v941
    %v943 = vand.u32 %v456, 4294901760
    %v944 = vsub.f32 %v456, %v943
    %v945 = vand.u32 %v944, 4294901760
    %v946 = vsub.f32 %v944, %v945
    %v947 = vand.u32 %v946, 4294901760
    %948 = vmatpush.msra.mxu0 %v947
    %v949 = vand.u32 %v454, 4294901760
    %v950 = vsub.f32 %v454, %v949
    %v951 = vand.u32 %v950, 4294901760
    %v952 = vsub.f32 %v950, %v951
    %v953 = vand.u32 %v952, 4294901760
    %954 = vmatpush.msra.mxu0 %v953
    %v955 = vand.u32 %v452, 4294901760
    %v956 = vsub.f32 %v452, %v955
    %v957 = vand.u32 %v956, 4294901760
    %v958 = vsub.f32 %v956, %v957
    %v959 = vand.u32 %v958, 4294901760
    %960 = vmatpush.msra.mxu0 %v959
    %v961 = vand.u32 %v450, 4294901760
    %v962 = vsub.f32 %v450, %v961
    %v963 = vand.u32 %v962, 4294901760
    %v964 = vsub.f32 %v962, %v963
    %v965 = vand.u32 %v964, 4294901760
    %966 = vmatpush.msra.mxu0 %v965
    %v967 = vand.u32 %v417, 4294901760
    %968 = vmatmul.f32.gmra.mxu0 %v967
    %v969 = vpop.f32.mrf.mxu0
    %v970 = vadd.f32 %v869, %v969
    %971 = vdwg.mxu0
    %v972 = vand.u32 %v480, 4294901760
    %v973 = vsub.f32 %v480, %v972
    %974 = vmatpush.msra.mxu0 %v973
    %v975 = vand.u32 %v478, 4294901760
    %v976 = vsub.f32 %v478, %v975
    %977 = vmatpush.msra.mxu0 %v976
    %v978 = vand.u32 %v476, 4294901760
    %v979 = vsub.f32 %v476, %v978
    %980 = vmatpush.msra.mxu0 %v979
    %v981 = vand.u32 %v474, 4294901760
    %v982 = vsub.f32 %v474, %v981
    %983 = vmatpush.msra.mxu0 %v982
    %v984 = vand.u32 %v472, 4294901760
    %v985 = vsub.f32 %v472, %v984
    %986 = vmatpush.msra.mxu0 %v985
    %v987 = vand.u32 %v470, 4294901760
    %v988 = vsub.f32 %v470, %v987
    %989 = vmatpush.msra.mxu0 %v988
    %v990 = vand.u32 %v468, 4294901760
    %v991 = vsub.f32 %v468, %v990
    %992 = vmatpush.msra.mxu0 %v991
    %v993 = vand.u32 %v466, 4294901760
    %v994 = vsub.f32 %v466, %v993
    %995 = vmatpush.msra.mxu0 %v994
    %v996 = vand.u32 %v464, 4294901760
    %v997 = vsub.f32 %v464, %v996
    %998 = vmatpush.msra.mxu0 %v997
    %v999 = vand.u32 %v462, 4294901760
    %v1000 = vsub.f32 %v462, %v999
    %1001 = vmatpush.msra.mxu0 %v1000
    %v1002 = vand.u32 %v460, 4294901760
    %v1003 = vsub.f32 %v460, %v1002
    %1004 = vmatpush.msra.mxu0 %v1003
    %v1005 = vand.u32 %v458, 4294901760
    %v1006 = vsub.f32 %v458, %v1005
    %1007 = vmatpush.msra.mxu0 %v1006
    %v1008 = vand.u32 %v456, 4294901760
    %v1009 = vsub.f32 %v456, %v1008
    %1010 = vmatpush.msra.mxu0 %v1009
    %v1011 = vand.u32 %v454, 4294901760
    %v1012 = vsub.f32 %v454, %v1011
    %1013 = vmatpush.msra.mxu0 %v1012
    %v1014 = vand.u32 %v452, 4294901760
    %v1015 = vsub.f32 %v452, %v1014
    %1016 = vmatpush.msra.mxu0 %v1015
    %v1017 = vand.u32 %v450, 4294901760
    %v1018 = vsub.f32 %v450, %v1017
    %1019 = vmatpush.msra.mxu0 %v1018
    %v1020 = vand.u32 %v417, 4294901760
    %v1021 = vsub.f32 %v417, %v1020
    %1022 = vmatmul.f32.gmra.mxu0 %v1021
    %v1023 = vpop.f32.mrf.mxu0
    %v1024 = vadd.f32 %v970, %v1023
    %1025 = vdwg.mxu0
    %v1026 = vand.u32 %v480, 4294901760
    %1027 = vmatpush.msra.mxu0 %v1026
    %v1028 = vand.u32 %v478, 4294901760
    %1029 = vmatpush.msra.mxu0 %v1028
    %v1030 = vand.u32 %v476, 4294901760
    %1031 = vmatpush.msra.mxu0 %v1030
    %v1032 = vand.u32 %v474, 4294901760
    %1033 = vmatpush.msra.mxu0 %v1032
    %v1034 = vand.u32 %v472, 4294901760
    %1035 = vmatpush.msra.mxu0 %v1034
    %v1036 = vand.u32 %v470, 4294901760
    %1037 = vmatpush.msra.mxu0 %v1036
    %v1038 = vand.u32 %v468, 4294901760
    %1039 = vmatpush.msra.mxu0 %v1038
    %v1040 = vand.u32 %v466, 4294901760
    %1041 = vmatpush.msra.mxu0 %v1040
    %v1042 = vand.u32 %v464, 4294901760
    %1043 = vmatpush.msra.mxu0 %v1042
    %v1044 = vand.u32 %v462, 4294901760
    %1045 = vmatpush.msra.mxu0 %v1044
    %v1046 = vand.u32 %v460, 4294901760
    %1047 = vmatpush.msra.mxu0 %v1046
    %v1048 = vand.u32 %v458, 4294901760
    %1049 = vmatpush.msra.mxu0 %v1048
    %v1050 = vand.u32 %v456, 4294901760
    %1051 = vmatpush.msra.mxu0 %v1050
    %v1052 = vand.u32 %v454, 4294901760
    %1053 = vmatpush.msra.mxu0 %v1052
    %v1054 = vand.u32 %v452, 4294901760
    %1055 = vmatpush.msra.mxu0 %v1054
    %v1056 = vand.u32 %v450, 4294901760
    %1057 = vmatpush.msra.mxu0 %v1056
    %v1058 = vand.u32 %v417, 4294901760
    %v1059 = vsub.f32 %v417, %v1058
    %v1060 = vand.u32 %v1059, 4294901760
    %1061 = vmatmul.f32.gmra.mxu0 %v1060
    %v1062 = vpop.f32.mrf.mxu0
    %v1063 = vadd.f32 %v1024, %v1062
    %1064 = vdwg.mxu0
    %v1065 = vand.u32 %v480, 4294901760
    %v1066 = vsub.f32 %v480, %v1065
    %v1067 = vand.u32 %v1066, 4294901760
    %1068 = vmatpush.msra.mxu0 %v1067
    %v1069 = vand.u32 %v478, 4294901760
    %v1070 = vsub.f32 %v478, %v1069
    %v1071 = vand.u32 %v1070, 4294901760
    %1072 = vmatpush.msra.mxu0 %v1071
    %v1073 = vand.u32 %v476, 4294901760
    %v1074 = vsub.f32 %v476, %v1073
    %v1075 = vand.u32 %v1074, 4294901760
    %1076 = vmatpush.msra.mxu0 %v1075
    %v1077 = vand.u32 %v474, 4294901760
    %v1078 = vsub.f32 %v474, %v1077
    %v1079 = vand.u32 %v1078, 4294901760
    %1080 = vmatpush.msra.mxu0 %v1079
    %v1081 = vand.u32 %v472, 4294901760
    %v1082 = vsub.f32 %v472, %v1081
    %v1083 = vand.u32 %v1082, 4294901760
    %1084 = vmatpush.msra.mxu0 %v1083
    %v1085 = vand.u32 %v470, 4294901760
    %v1086 = vsub.f32 %v470, %v1085
    %v1087 = vand.u32 %v1086, 4294901760
    %1088 = vmatpush.msra.mxu0 %v1087
    %v1089 = vand.u32 %v468, 4294901760
    %v1090 = vsub.f32 %v468, %v1089
    %v1091 = vand.u32 %v1090, 4294901760
    %1092 = vmatpush.msra.mxu0 %v1091
    %v1093 = vand.u32 %v466, 4294901760
    %v1094 = vsub.f32 %v466, %v1093
    %v1095 = vand.u32 %v1094, 4294901760
    %1096 = vmatpush.msra.mxu0 %v1095
    %v1097 = vand.u32 %v464, 4294901760
    %v1098 = vsub.f32 %v464, %v1097
    %v1099 = vand.u32 %v1098, 4294901760
    %1100 = vmatpush.msra.mxu0 %v1099
    %v1101 = vand.u32 %v462, 4294901760
    %v1102 = vsub.f32 %v462, %v1101
    %v1103 = vand.u32 %v1102, 4294901760
    %1104 = vmatpush.msra.mxu0 %v1103
    %v1105 = vand.u32 %v460, 4294901760
    %v1106 = vsub.f32 %v460, %v1105
    %v1107 = vand.u32 %v1106, 4294901760
    %1108 = vmatpush.msra.mxu0 %v1107
    %v1109 = vand.u32 %v458, 4294901760
    %v1110 = vsub.f32 %v458, %v1109
    %v1111 = vand.u32 %v1110, 4294901760
    %1112 = vmatpush.msra.mxu0 %v1111
    %v1113 = vand.u32 %v456, 4294901760
    %v1114 = vsub.f32 %v456, %v1113
    %v1115 = vand.u32 %v1114, 4294901760
    %1116 = vmatpush.msra.mxu0 %v1115
    %v1117 = vand.u32 %v454, 4294901760
    %v1118 = vsub.f32 %v454, %v1117
    %v1119 = vand.u32 %v1118, 4294901760
    %1120 = vmatpush.msra.mxu0 %v1119
    %v1121 = vand.u32 %v452, 4294901760
    %v1122 = vsub.f32 %v452, %v1121
    %v1123 = vand.u32 %v1122, 4294901760
    %1124 = vmatpush.msra.mxu0 %v1123
    %v1125 = vand.u32 %v450, 4294901760
    %v1126 = vsub.f32 %v450, %v1125
    %v1127 = vand.u32 %v1126, 4294901760
    %1128 = vmatpush.msra.mxu0 %v1127
    %v1129 = vand.u32 %v417, 4294901760
    %1130 = vmatmul.f32.gmra.mxu0 %v1129
    %v1131 = vpop.f32.mrf.mxu0
    %v1132 = vadd.f32 %v1063, %v1131
    %1133 = vdwg.mxu0
    %v1134 = vand.u32 %v480, 4294901760
    %1135 = vmatpush.msra.mxu0 %v1134
    %v1136 = vand.u32 %v478, 4294901760
    %1137 = vmatpush.msra.mxu0 %v1136
    %v1138 = vand.u32 %v476, 4294901760
    %1139 = vmatpush.msra.mxu0 %v1138
    %v1140 = vand.u32 %v474, 4294901760
    %1141 = vmatpush.msra.mxu0 %v1140
    %v1142 = vand.u32 %v472, 4294901760
    %1143 = vmatpush.msra.mxu0 %v1142
    %v1144 = vand.u32 %v470, 4294901760
    %1145 = vmatpush.msra.mxu0 %v1144
    %v1146 = vand.u32 %v468, 4294901760
    %1147 = vmatpush.msra.mxu0 %v1146
    %v1148 = vand.u32 %v466, 4294901760
    %1149 = vmatpush.msra.mxu0 %v1148
    %v1150 = vand.u32 %v464, 4294901760
    %1151 = vmatpush.msra.mxu0 %v1150
    %v1152 = vand.u32 %v462, 4294901760
    %1153 = vmatpush.msra.mxu0 %v1152
    %v1154 = vand.u32 %v460, 4294901760
    %1155 = vmatpush.msra.mxu0 %v1154
    %v1156 = vand.u32 %v458, 4294901760
    %1157 = vmatpush.msra.mxu0 %v1156
    %v1158 = vand.u32 %v456, 4294901760
    %1159 = vmatpush.msra.mxu0 %v1158
    %v1160 = vand.u32 %v454, 4294901760
    %1161 = vmatpush.msra.mxu0 %v1160
    %v1162 = vand.u32 %v452, 4294901760
    %1163 = vmatpush.msra.mxu0 %v1162
    %v1164 = vand.u32 %v450, 4294901760
    %1165 = vmatpush.msra.mxu0 %v1164
    %v1166 = vand.u32 %v417, 4294901760
    %1167 = vmatmul.f32.gmra.mxu0 %v1166
    %v1168 = vpop.f32.mrf.mxu0
    %v1169 = vadd.f32 %v1132, %v1168
    %1170 = vdwg.mxu0
    %v1171 = vand.u32 %v449, 4294901760
    %1172 = vmatpush.msra.mxu0 %v1171
    %v1173 = vand.u32 %v447, 4294901760
    %1174 = vmatpush.msra.mxu0 %v1173
    %v1175 = vand.u32 %v445, 4294901760
    %1176 = vmatpush.msra.mxu0 %v1175
    %v1177 = vand.u32 %v443, 4294901760
    %1178 = vmatpush.msra.mxu0 %v1177
    %v1179 = vand.u32 %v441, 4294901760
    %1180 = vmatpush.msra.mxu0 %v1179
    %v1181 = vand.u32 %v439, 4294901760
    %1182 = vmatpush.msra.mxu0 %v1181
    %v1183 = vand.u32 %v437, 4294901760
    %1184 = vmatpush.msra.mxu0 %v1183
    %v1185 = vand.u32 %v435, 4294901760
    %1186 = vmatpush.msra.mxu0 %v1185
    %v1187 = vand.u32 %v433, 4294901760
    %1188 = vmatpush.msra.mxu0 %v1187
    %v1189 = vand.u32 %v431, 4294901760
    %1190 = vmatpush.msra.mxu0 %v1189
    %v1191 = vand.u32 %v429, 4294901760
    %1192 = vmatpush.msra.mxu0 %v1191
    %v1193 = vand.u32 %v427, 4294901760
    %1194 = vmatpush.msra.mxu0 %v1193
    %v1195 = vand.u32 %v425, 4294901760
    %1196 = vmatpush.msra.mxu0 %v1195
    %v1197 = vand.u32 %v423, 4294901760
    %1198 = vmatpush.msra.mxu0 %v1197
    %v1199 = vand.u32 %v421, 4294901760
    %1200 = vmatpush.msra.mxu0 %v1199
    %v1201 = vand.u32 %v419, 4294901760
    %1202 = vmatpush.msra.mxu0 %v1201
    %v1203 = vand.u32 %v416, 4294901760
    %v1204 = vsub.f32 %v416, %v1203
    %v1205 = vand.u32 %v1204, 4294901760
    %v1206 = vsub.f32 %v1204, %v1205
    %v1207 = vand.u32 %v1206, 4294901760
    %1208 = vmatmul.f32.gmra.mxu0 %v1207
    %v1209 = vpop.f32.mrf.mxu0
    %v1210 = vadd.f32 %v486, %v1209
    %1211 = vdwg.mxu0
    %v1212 = vand.u32 %v449, 4294901760
    %v1213 = vsub.f32 %v449, %v1212
    %v1214 = vand.u32 %v1213, 4294901760
    %v1215 = vsub.f32 %v1213, %v1214
    %v1216 = vand.u32 %v1215, 4294901760
    %1217 = vmatpush.msra.mxu0 %v1216
    %v1218 = vand.u32 %v447, 4294901760
    %v1219 = vsub.f32 %v447, %v1218
    %v1220 = vand.u32 %v1219, 4294901760
    %v1221 = vsub.f32 %v1219, %v1220
    %v1222 = vand.u32 %v1221, 4294901760
    %1223 = vmatpush.msra.mxu0 %v1222
    %v1224 = vand.u32 %v445, 4294901760
    %v1225 = vsub.f32 %v445, %v1224
    %v1226 = vand.u32 %v1225, 4294901760
    %v1227 = vsub.f32 %v1225, %v1226
    %v1228 = vand.u32 %v1227, 4294901760
    %1229 = vmatpush.msra.mxu0 %v1228
    %v1230 = vand.u32 %v443, 4294901760
    %v1231 = vsub.f32 %v443, %v1230
    %v1232 = vand.u32 %v1231, 4294901760
    %v1233 = vsub.f32 %v1231, %v1232
    %v1234 = vand.u32 %v1233, 4294901760
    %1235 = vmatpush.msra.mxu0 %v1234
    %v1236 = vand.u32 %v441, 4294901760
    %v1237 = vsub.f32 %v441, %v1236
    %v1238 = vand.u32 %v1237, 4294901760
    %v1239 = vsub.f32 %v1237, %v1238
    %v1240 = vand.u32 %v1239, 4294901760
    %1241 = vmatpush.msra.mxu0 %v1240
    %v1242 = vand.u32 %v439, 4294901760
    %v1243 = vsub.f32 %v439, %v1242
    %v1244 = vand.u32 %v1243, 4294901760
    %v1245 = vsub.f32 %v1243, %v1244
    %v1246 = vand.u32 %v1245, 4294901760
    %1247 = vmatpush.msra.mxu0 %v1246
    %v1248 = vand.u32 %v437, 4294901760
    %v1249 = vsub.f32 %v437, %v1248
    %v1250 = vand.u32 %v1249, 4294901760
    %v1251 = vsub.f32 %v1249, %v1250
    %v1252 = vand.u32 %v1251, 4294901760
    %1253 = vmatpush.msra.mxu0 %v1252
    %v1254 = vand.u32 %v435, 4294901760
    %v1255 = vsub.f32 %v435, %v1254
    %v1256 = vand.u32 %v1255, 4294901760
    %v1257 = vsub.f32 %v1255, %v1256
    %v1258 = vand.u32 %v1257, 4294901760
    %1259 = vmatpush.msra.mxu0 %v1258
    %v1260 = vand.u32 %v433, 4294901760
    %v1261 = vsub.f32 %v433, %v1260
    %v1262 = vand.u32 %v1261, 4294901760
    %v1263 = vsub.f32 %v1261, %v1262
    %v1264 = vand.u32 %v1263, 4294901760
    %1265 = vmatpush.msra.mxu0 %v1264
    %v1266 = vand.u32 %v431, 4294901760
    %v1267 = vsub.f32 %v431, %v1266
    %v1268 = vand.u32 %v1267, 4294901760
    %v1269 = vsub.f32 %v1267, %v1268
    %v1270 = vand.u32 %v1269, 4294901760
    %1271 = vmatpush.msra.mxu0 %v1270
    %v1272 = vand.u32 %v429, 4294901760
    %v1273 = vsub.f32 %v429, %v1272
    %v1274 = vand.u32 %v1273, 4294901760
    %v1275 = vsub.f32 %v1273, %v1274
    %v1276 = vand.u32 %v1275, 4294901760
    %1277 = vmatpush.msra.mxu0 %v1276
    %v1278 = vand.u32 %v427, 4294901760
    %v1279 = vsub.f32 %v427, %v1278
    %v1280 = vand.u32 %v1279, 4294901760
    %v1281 = vsub.f32 %v1279, %v1280
    %v1282 = vand.u32 %v1281, 4294901760
    %1283 = vmatpush.msra.mxu0 %v1282
    %v1284 = vand.u32 %v425, 4294901760
    %v1285 = vsub.f32 %v425, %v1284
    %v1286 = vand.u32 %v1285, 4294901760
    %v1287 = vsub.f32 %v1285, %v1286
    %v1288 = vand.u32 %v1287, 4294901760
    %1289 = vmatpush.msra.mxu0 %v1288
    %v1290 = vand.u32 %v423, 4294901760
    %v1291 = vsub.f32 %v423, %v1290
    %v1292 = vand.u32 %v1291, 4294901760
    %v1293 = vsub.f32 %v1291, %v1292
    %v1294 = vand.u32 %v1293, 4294901760
    %1295 = vmatpush.msra.mxu0 %v1294
    %v1296 = vand.u32 %v421, 4294901760
    %v1297 = vsub.f32 %v421, %v1296
    %v1298 = vand.u32 %v1297, 4294901760
    %v1299 = vsub.f32 %v1297, %v1298
    %v1300 = vand.u32 %v1299, 4294901760
    %1301 = vmatpush.msra.mxu0 %v1300
    %v1302 = vand.u32 %v419, 4294901760
    %v1303 = vsub.f32 %v419, %v1302
    %v1304 = vand.u32 %v1303, 4294901760
    %v1305 = vsub.f32 %v1303, %v1304
    %v1306 = vand.u32 %v1305, 4294901760
    %1307 = vmatpush.msra.mxu0 %v1306
    %v1308 = vand.u32 %v416, 4294901760
    %1309 = vmatmul.f32.gmra.mxu0 %v1308
    %v1310 = vpop.f32.mrf.mxu0
    %v1311 = vadd.f32 %v1210, %v1310
    %1312 = vdwg.mxu0
    %v1313 = vand.u32 %v449, 4294901760
    %v1314 = vsub.f32 %v449, %v1313
    %1315 = vmatpush.msra.mxu0 %v1314
    %v1316 = vand.u32 %v447, 4294901760
    %v1317 = vsub.f32 %v447, %v1316
    %1318 = vmatpush.msra.mxu0 %v1317
    %v1319 = vand.u32 %v445, 4294901760
    %v1320 = vsub.f32 %v445, %v1319
    %1321 = vmatpush.msra.mxu0 %v1320
    %v1322 = vand.u32 %v443, 4294901760
    %v1323 = vsub.f32 %v443, %v1322
    %1324 = vmatpush.msra.mxu0 %v1323
    %v1325 = vand.u32 %v441, 4294901760
    %v1326 = vsub.f32 %v441, %v1325
    %1327 = vmatpush.msra.mxu0 %v1326
    %v1328 = vand.u32 %v439, 4294901760
    %v1329 = vsub.f32 %v439, %v1328
    %1330 = vmatpush.msra.mxu0 %v1329
    %v1331 = vand.u32 %v437, 4294901760
    %v1332 = vsub.f32 %v437, %v1331
    %1333 = vmatpush.msra.mxu0 %v1332
    %v1334 = vand.u32 %v435, 4294901760
    %v1335 = vsub.f32 %v435, %v1334
    %1336 = vmatpush.msra.mxu0 %v1335
    %v1337 = vand.u32 %v433, 4294901760
    %v1338 = vsub.f32 %v433, %v1337
    %1339 = vmatpush.msra.mxu0 %v1338
    %v1340 = vand.u32 %v431, 4294901760
    %v1341 = vsub.f32 %v431, %v1340
    %1342 = vmatpush.msra.mxu0 %v1341
    %v1343 = vand.u32 %v429, 4294901760
    %v1344 = vsub.f32 %v429, %v1343
    %1345 = vmatpush.msra.mxu0 %v1344
    %v1346 = vand.u32 %v427, 4294901760
    %v1347 = vsub.f32 %v427, %v1346
    %1348 = vmatpush.msra.mxu0 %v1347
    %v1349 = vand.u32 %v425, 4294901760
    %v1350 = vsub.f32 %v425, %v1349
    %1351 = vmatpush.msra.mxu0 %v1350
    %v1352 = vand.u32 %v423, 4294901760
    %v1353 = vsub.f32 %v423, %v1352
    %1354 = vmatpush.msra.mxu0 %v1353
    %v1355 = vand.u32 %v421, 4294901760
    %v1356 = vsub.f32 %v421, %v1355
    %1357 = vmatpush.msra.mxu0 %v1356
    %v1358 = vand.u32 %v419, 4294901760
    %v1359 = vsub.f32 %v419, %v1358
    %1360 = vmatpush.msra.mxu0 %v1359
    %v1361 = vand.u32 %v416, 4294901760
    %v1362 = vsub.f32 %v416, %v1361
    %1363 = vmatmul.f32.gmra.mxu0 %v1362
    %v1364 = vpop.f32.mrf.mxu0
    %v1365 = vadd.f32 %v1311, %v1364
    %1366 = vdwg.mxu0
    %v1367 = vand.u32 %v449, 4294901760
    %1368 = vmatpush.msra.mxu0 %v1367
    %v1369 = vand.u32 %v447, 4294901760
    %1370 = vmatpush.msra.mxu0 %v1369
    %v1371 = vand.u32 %v445, 4294901760
    %1372 = vmatpush.msra.mxu0 %v1371
    %v1373 = vand.u32 %v443, 4294901760
    %1374 = vmatpush.msra.mxu0 %v1373
    %v1375 = vand.u32 %v441, 4294901760
    %1376 = vmatpush.msra.mxu0 %v1375
    %v1377 = vand.u32 %v439, 4294901760
    %1378 = vmatpush.msra.mxu0 %v1377
    %v1379 = vand.u32 %v437, 4294901760
    %1380 = vmatpush.msra.mxu0 %v1379
    %v1381 = vand.u32 %v435, 4294901760
    %1382 = vmatpush.msra.mxu0 %v1381
    %v1383 = vand.u32 %v433, 4294901760
    %1384 = vmatpush.msra.mxu0 %v1383
    %v1385 = vand.u32 %v431, 4294901760
    %1386 = vmatpush.msra.mxu0 %v1385
    %v1387 = vand.u32 %v429, 4294901760
    %1388 = vmatpush.msra.mxu0 %v1387
    %v1389 = vand.u32 %v427, 4294901760
    %1390 = vmatpush.msra.mxu0 %v1389
    %v1391 = vand.u32 %v425, 4294901760
    %1392 = vmatpush.msra.mxu0 %v1391
    %v1393 = vand.u32 %v423, 4294901760
    %1394 = vmatpush.msra.mxu0 %v1393
    %v1395 = vand.u32 %v421, 4294901760
    %1396 = vmatpush.msra.mxu0 %v1395
    %v1397 = vand.u32 %v419, 4294901760
    %1398 = vmatpush.msra.mxu0 %v1397
    %v1399 = vand.u32 %v416, 4294901760
    %v1400 = vsub.f32 %v416, %v1399
    %v1401 = vand.u32 %v1400, 4294901760
    %1402 = vmatmul.f32.gmra.mxu0 %v1401
    %v1403 = vpop.f32.mrf.mxu0
    %v1404 = vadd.f32 %v1365, %v1403
    %1405 = vdwg.mxu0
    %v1406 = vand.u32 %v449, 4294901760
    %v1407 = vsub.f32 %v449, %v1406
    %v1408 = vand.u32 %v1407, 4294901760
    %1409 = vmatpush.msra.mxu0 %v1408
    %v1410 = vand.u32 %v447, 4294901760
    %v1411 = vsub.f32 %v447, %v1410
    %v1412 = vand.u32 %v1411, 4294901760
    %1413 = vmatpush.msra.mxu0 %v1412
    %v1414 = vand.u32 %v445, 4294901760
    %v1415 = vsub.f32 %v445, %v1414
    %v1416 = vand.u32 %v1415, 4294901760
    %1417 = vmatpush.msra.mxu0 %v1416
    %v1418 = vand.u32 %v443, 4294901760
    %v1419 = vsub.f32 %v443, %v1418
    %v1420 = vand.u32 %v1419, 4294901760
    %1421 = vmatpush.msra.mxu0 %v1420
    %v1422 = vand.u32 %v441, 4294901760
    %v1423 = vsub.f32 %v441, %v1422
    %v1424 = vand.u32 %v1423, 4294901760
    %1425 = vmatpush.msra.mxu0 %v1424
    %v1426 = vand.u32 %v439, 4294901760
    %v1427 = vsub.f32 %v439, %v1426
    %v1428 = vand.u32 %v1427, 4294901760
    %1429 = vmatpush.msra.mxu0 %v1428
    %v1430 = vand.u32 %v437, 4294901760
    %v1431 = vsub.f32 %v437, %v1430
    %v1432 = vand.u32 %v1431, 4294901760
    %1433 = vmatpush.msra.mxu0 %v1432
    %v1434 = vand.u32 %v435, 4294901760
    %v1435 = vsub.f32 %v435, %v1434
    %v1436 = vand.u32 %v1435, 4294901760
    %1437 = vmatpush.msra.mxu0 %v1436
    %v1438 = vand.u32 %v433, 4294901760
    %v1439 = vsub.f32 %v433, %v1438
    %v1440 = vand.u32 %v1439, 4294901760
    %1441 = vmatpush.msra.mxu0 %v1440
    %v1442 = vand.u32 %v431, 4294901760
    %v1443 = vsub.f32 %v431, %v1442
    %v1444 = vand.u32 %v1443, 4294901760
    %1445 = vmatpush.msra.mxu0 %v1444
    %v1446 = vand.u32 %v429, 4294901760
    %v1447 = vsub.f32 %v429, %v1446
    %v1448 = vand.u32 %v1447, 4294901760
    %1449 = vmatpush.msra.mxu0 %v1448
    %v1450 = vand.u32 %v427, 4294901760
    %v1451 = vsub.f32 %v427, %v1450
    %v1452 = vand.u32 %v1451, 4294901760
    %1453 = vmatpush.msra.mxu0 %v1452
    %v1454 = vand.u32 %v425, 4294901760
    %v1455 = vsub.f32 %v425, %v1454
    %v1456 = vand.u32 %v1455, 4294901760
    %1457 = vmatpush.msra.mxu0 %v1456
    %v1458 = vand.u32 %v423, 4294901760
    %v1459 = vsub.f32 %v423, %v1458
    %v1460 = vand.u32 %v1459, 4294901760
    %1461 = vmatpush.msra.mxu0 %v1460
    %v1462 = vand.u32 %v421, 4294901760
    %v1463 = vsub.f32 %v421, %v1462
    %v1464 = vand.u32 %v1463, 4294901760
    %1465 = vmatpush.msra.mxu0 %v1464
    %v1466 = vand.u32 %v419, 4294901760
    %v1467 = vsub.f32 %v419, %v1466
    %v1468 = vand.u32 %v1467, 4294901760
    %1469 = vmatpush.msra.mxu0 %v1468
    %v1470 = vand.u32 %v416, 4294901760
    %1471 = vmatmul.f32.gmra.mxu0 %v1470
    %v1472 = vpop.f32.mrf.mxu0
    %v1473 = vadd.f32 %v1404, %v1472
    %1474 = vdwg.mxu0
    %v1475 = vand.u32 %v449, 4294901760
    %1476 = vmatpush.msra.mxu0 %v1475
    %v1477 = vand.u32 %v447, 4294901760
    %1478 = vmatpush.msra.mxu0 %v1477
    %v1479 = vand.u32 %v445, 4294901760
    %1480 = vmatpush.msra.mxu0 %v1479
    %v1481 = vand.u32 %v443, 4294901760
    %1482 = vmatpush.msra.mxu0 %v1481
    %v1483 = vand.u32 %v441, 4294901760
    %1484 = vmatpush.msra.mxu0 %v1483
    %v1485 = vand.u32 %v439, 4294901760
    %1486 = vmatpush.msra.mxu0 %v1485
    %v1487 = vand.u32 %v437, 4294901760
    %1488 = vmatpush.msra.mxu0 %v1487
    %v1489 = vand.u32 %v435, 4294901760
    %1490 = vmatpush.msra.mxu0 %v1489
    %v1491 = vand.u32 %v433, 4294901760
    %1492 = vmatpush.msra.mxu0 %v1491
    %v1493 = vand.u32 %v431, 4294901760
    %1494 = vmatpush.msra.mxu0 %v1493
    %v1495 = vand.u32 %v429, 4294901760
    %1496 = vmatpush.msra.mxu0 %v1495
    %v1497 = vand.u32 %v427, 4294901760
    %1498 = vmatpush.msra.mxu0 %v1497
    %v1499 = vand.u32 %v425, 4294901760
    %1500 = vmatpush.msra.mxu0 %v1499
    %v1501 = vand.u32 %v423, 4294901760
    %1502 = vmatpush.msra.mxu0 %v1501
    %v1503 = vand.u32 %v421, 4294901760
    %1504 = vmatpush.msra.mxu0 %v1503
    %v1505 = vand.u32 %v419, 4294901760
    %1506 = vmatpush.msra.mxu0 %v1505
    %v1507 = vand.u32 %v416, 4294901760
    %1508 = vmatmul.f32.gmra.mxu0 %v1507
    %v1509 = vpop.f32.mrf.mxu0
    %v1510 = vadd.f32 %v1473, %v1509
    %1511 = vdwg.mxu0
    %v1512 = vand.u32 %v481, 4294901760
    %1513 = vmatpush.msra.mxu0 %v1512
    %v1514 = vand.u32 %v479, 4294901760
    %1515 = vmatpush.msra.mxu0 %v1514
    %v1516 = vand.u32 %v477, 4294901760
    %1517 = vmatpush.msra.mxu0 %v1516
    %v1518 = vand.u32 %v475, 4294901760
    %1519 = vmatpush.msra.mxu0 %v1518
    %v1520 = vand.u32 %v473, 4294901760
    %1521 = vmatpush.msra.mxu0 %v1520
    %v1522 = vand.u32 %v471, 4294901760
    %1523 = vmatpush.msra.mxu0 %v1522
    %v1524 = vand.u32 %v469, 4294901760
    %1525 = vmatpush.msra.mxu0 %v1524
    %v1526 = vand.u32 %v467, 4294901760
    %1527 = vmatpush.msra.mxu0 %v1526
    %v1528 = vand.u32 %v465, 4294901760
    %1529 = vmatpush.msra.mxu0 %v1528
    %v1530 = vand.u32 %v463, 4294901760
    %1531 = vmatpush.msra.mxu0 %v1530
    %v1532 = vand.u32 %v461, 4294901760
    %1533 = vmatpush.msra.mxu0 %v1532
    %v1534 = vand.u32 %v459, 4294901760
    %1535 = vmatpush.msra.mxu0 %v1534
    %v1536 = vand.u32 %v457, 4294901760
    %1537 = vmatpush.msra.mxu0 %v1536
    %v1538 = vand.u32 %v455, 4294901760
    %1539 = vmatpush.msra.mxu0 %v1538
    %v1540 = vand.u32 %v453, 4294901760
    %1541 = vmatpush.msra.mxu0 %v1540
    %v1542 = vand.u32 %v451, 4294901760
    %1543 = vmatpush.msra.mxu0 %v1542
    %v1544 = vand.u32 %v417, 4294901760
    %v1545 = vsub.f32 %v417, %v1544
    %v1546 = vand.u32 %v1545, 4294901760
    %v1547 = vsub.f32 %v1545, %v1546
    %v1548 = vand.u32 %v1547, 4294901760
    %1549 = vmatmul.f32.gmra.mxu0 %v1548
    %v1550 = vpop.f32.mrf.mxu0
    %v1551 = vadd.f32 %v1510, %v1550
    %1552 = vdwg.mxu0
    %v1553 = vand.u32 %v481, 4294901760
    %v1554 = vsub.f32 %v481, %v1553
    %v1555 = vand.u32 %v1554, 4294901760
    %v1556 = vsub.f32 %v1554, %v1555
    %v1557 = vand.u32 %v1556, 4294901760
    %1558 = vmatpush.msra.mxu0 %v1557
    %v1559 = vand.u32 %v479, 4294901760
    %v1560 = vsub.f32 %v479, %v1559
    %v1561 = vand.u32 %v1560, 4294901760
    %v1562 = vsub.f32 %v1560, %v1561
    %v1563 = vand.u32 %v1562, 4294901760
    %1564 = vmatpush.msra.mxu0 %v1563
    %v1565 = vand.u32 %v477, 4294901760
    %v1566 = vsub.f32 %v477, %v1565
    %v1567 = vand.u32 %v1566, 4294901760
    %v1568 = vsub.f32 %v1566, %v1567
    %v1569 = vand.u32 %v1568, 4294901760
    %1570 = vmatpush.msra.mxu0 %v1569
    %v1571 = vand.u32 %v475, 4294901760
    %v1572 = vsub.f32 %v475, %v1571
    %v1573 = vand.u32 %v1572, 4294901760
    %v1574 = vsub.f32 %v1572, %v1573
    %v1575 = vand.u32 %v1574, 4294901760
    %1576 = vmatpush.msra.mxu0 %v1575
    %v1577 = vand.u32 %v473, 4294901760
    %v1578 = vsub.f32 %v473, %v1577
    %v1579 = vand.u32 %v1578, 4294901760
    %v1580 = vsub.f32 %v1578, %v1579
    %v1581 = vand.u32 %v1580, 4294901760
    %1582 = vmatpush.msra.mxu0 %v1581
    %v1583 = vand.u32 %v471, 4294901760
    %v1584 = vsub.f32 %v471, %v1583
    %v1585 = vand.u32 %v1584, 4294901760
    %v1586 = vsub.f32 %v1584, %v1585
    %v1587 = vand.u32 %v1586, 4294901760
    %1588 = vmatpush.msra.mxu0 %v1587
    %v1589 = vand.u32 %v469, 4294901760
    %v1590 = vsub.f32 %v469, %v1589
    %v1591 = vand.u32 %v1590, 4294901760
    %v1592 = vsub.f32 %v1590, %v1591
    %v1593 = vand.u32 %v1592, 4294901760
    %1594 = vmatpush.msra.mxu0 %v1593
    %v1595 = vand.u32 %v467, 4294901760
    %v1596 = vsub.f32 %v467, %v1595
    %v1597 = vand.u32 %v1596, 4294901760
    %v1598 = vsub.f32 %v1596, %v1597
    %v1599 = vand.u32 %v1598, 4294901760
    %1600 = vmatpush.msra.mxu0 %v1599
    %v1601 = vand.u32 %v465, 4294901760
    %v1602 = vsub.f32 %v465, %v1601
    %v1603 = vand.u32 %v1602, 4294901760
    %v1604 = vsub.f32 %v1602, %v1603
    %v1605 = vand.u32 %v1604, 4294901760
    %1606 = vmatpush.msra.mxu0 %v1605
    %v1607 = vand.u32 %v463, 4294901760
    %v1608 = vsub.f32 %v463, %v1607
    %v1609 = vand.u32 %v1608, 4294901760
    %v1610 = vsub.f32 %v1608, %v1609
    %v1611 = vand.u32 %v1610, 4294901760
    %1612 = vmatpush.msra.mxu0 %v1611
    %v1613 = vand.u32 %v461, 4294901760
    %v1614 = vsub.f32 %v461, %v1613
    %v1615 = vand.u32 %v1614, 4294901760
    %v1616 = vsub.f32 %v1614, %v1615
    %v1617 = vand.u32 %v1616, 4294901760
    %1618 = vmatpush.msra.mxu0 %v1617
    %v1619 = vand.u32 %v459, 4294901760
    %v1620 = vsub.f32 %v459, %v1619
    %v1621 = vand.u32 %v1620, 4294901760
    %v1622 = vsub.f32 %v1620, %v1621
    %v1623 = vand.u32 %v1622, 4294901760
    %1624 = vmatpush.msra.mxu0 %v1623
    %v1625 = vand.u32 %v457, 4294901760
    %v1626 = vsub.f32 %v457, %v1625
    %v1627 = vand.u32 %v1626, 4294901760
    %v1628 = vsub.f32 %v1626, %v1627
    %v1629 = vand.u32 %v1628, 4294901760
    %1630 = vmatpush.msra.mxu0 %v1629
    %v1631 = vand.u32 %v455, 4294901760
    %v1632 = vsub.f32 %v455, %v1631
    %v1633 = vand.u32 %v1632, 4294901760
    %v1634 = vsub.f32 %v1632, %v1633
    %v1635 = vand.u32 %v1634, 4294901760
    %1636 = vmatpush.msra.mxu0 %v1635
    %v1637 = vand.u32 %v453, 4294901760
    %v1638 = vsub.f32 %v453, %v1637
    %v1639 = vand.u32 %v1638, 4294901760
    %v1640 = vsub.f32 %v1638, %v1639
    %v1641 = vand.u32 %v1640, 4294901760
    %1642 = vmatpush.msra.mxu0 %v1641
    %v1643 = vand.u32 %v451, 4294901760
    %v1644 = vsub.f32 %v451, %v1643
    %v1645 = vand.u32 %v1644, 4294901760
    %v1646 = vsub.f32 %v1644, %v1645
    %v1647 = vand.u32 %v1646, 4294901760
    %1648 = vmatpush.msra.mxu0 %v1647
    %v1649 = vand.u32 %v417, 4294901760
    %1650 = vmatmul.f32.gmra.mxu0 %v1649
    %v1651 = vpop.f32.mrf.mxu0
    %v1652 = vadd.f32 %v1551, %v1651
    %1653 = vdwg.mxu0
    %v1654 = vand.u32 %v481, 4294901760
    %v1655 = vsub.f32 %v481, %v1654
    %1656 = vmatpush.msra.mxu0 %v1655
    %v1657 = vand.u32 %v479, 4294901760
    %v1658 = vsub.f32 %v479, %v1657
    %1659 = vmatpush.msra.mxu0 %v1658
    %v1660 = vand.u32 %v477, 4294901760
    %v1661 = vsub.f32 %v477, %v1660
    %1662 = vmatpush.msra.mxu0 %v1661
    %v1663 = vand.u32 %v475, 4294901760
    %v1664 = vsub.f32 %v475, %v1663
    %1665 = vmatpush.msra.mxu0 %v1664
    %v1666 = vand.u32 %v473, 4294901760
    %v1667 = vsub.f32 %v473, %v1666
    %1668 = vmatpush.msra.mxu0 %v1667
    %v1669 = vand.u32 %v471, 4294901760
    %v1670 = vsub.f32 %v471, %v1669
    %1671 = vmatpush.msra.mxu0 %v1670
    %v1672 = vand.u32 %v469, 4294901760
    %v1673 = vsub.f32 %v469, %v1672
    %1674 = vmatpush.msra.mxu0 %v1673
    %v1675 = vand.u32 %v467, 4294901760
    %v1676 = vsub.f32 %v467, %v1675
    %1677 = vmatpush.msra.mxu0 %v1676
    %v1678 = vand.u32 %v465, 4294901760
    %v1679 = vsub.f32 %v465, %v1678
    %1680 = vmatpush.msra.mxu0 %v1679
    %v1681 = vand.u32 %v463, 4294901760
    %v1682 = vsub.f32 %v463, %v1681
    %1683 = vmatpush.msra.mxu0 %v1682
    %v1684 = vand.u32 %v461, 4294901760
    %v1685 = vsub.f32 %v461, %v1684
    %1686 = vmatpush.msra.mxu0 %v1685
    %v1687 = vand.u32 %v459, 4294901760
    %v1688 = vsub.f32 %v459, %v1687
    %1689 = vmatpush.msra.mxu0 %v1688
    %v1690 = vand.u32 %v457, 4294901760
    %v1691 = vsub.f32 %v457, %v1690
    %1692 = vmatpush.msra.mxu0 %v1691
    %v1693 = vand.u32 %v455, 4294901760
    %v1694 = vsub.f32 %v455, %v1693
    %1695 = vmatpush.msra.mxu0 %v1694
    %v1696 = vand.u32 %v453, 4294901760
    %v1697 = vsub.f32 %v453, %v1696
    %1698 = vmatpush.msra.mxu0 %v1697
    %v1699 = vand.u32 %v451, 4294901760
    %v1700 = vsub.f32 %v451, %v1699
    %1701 = vmatpush.msra.mxu0 %v1700
    %v1702 = vand.u32 %v417, 4294901760
    %v1703 = vsub.f32 %v417, %v1702
    %1704 = vmatmul.f32.gmra.mxu0 %v1703
    %v1705 = vpop.f32.mrf.mxu0
    %v1706 = vadd.f32 %v1652, %v1705
    %1707 = vdwg.mxu0
    %v1708 = vand.u32 %v481, 4294901760
    %1709 = vmatpush.msra.mxu0 %v1708
    %v1710 = vand.u32 %v479, 4294901760
    %1711 = vmatpush.msra.mxu0 %v1710
    %v1712 = vand.u32 %v477, 4294901760
    %1713 = vmatpush.msra.mxu0 %v1712
    %v1714 = vand.u32 %v475, 4294901760
    %1715 = vmatpush.msra.mxu0 %v1714
    %v1716 = vand.u32 %v473, 4294901760
    %1717 = vmatpush.msra.mxu0 %v1716
    %v1718 = vand.u32 %v471, 4294901760
    %1719 = vmatpush.msra.mxu0 %v1718
    %v1720 = vand.u32 %v469, 4294901760
    %1721 = vmatpush.msra.mxu0 %v1720
    %v1722 = vand.u32 %v467, 4294901760
    %1723 = vmatpush.msra.mxu0 %v1722
    %v1724 = vand.u32 %v465, 4294901760
    %1725 = vmatpush.msra.mxu0 %v1724
    %v1726 = vand.u32 %v463, 4294901760
    %1727 = vmatpush.msra.mxu0 %v1726
    %v1728 = vand.u32 %v461, 4294901760
    %1729 = vmatpush.msra.mxu0 %v1728
    %v1730 = vand.u32 %v459, 4294901760
    %1731 = vmatpush.msra.mxu0 %v1730
    %v1732 = vand.u32 %v457, 4294901760
    %1733 = vmatpush.msra.mxu0 %v1732
    %v1734 = vand.u32 %v455, 4294901760
    %1735 = vmatpush.msra.mxu0 %v1734
    %v1736 = vand.u32 %v453, 4294901760
    %1737 = vmatpush.msra.mxu0 %v1736
    %v1738 = vand.u32 %v451, 4294901760
    %1739 = vmatpush.msra.mxu0 %v1738
    %v1740 = vand.u32 %v417, 4294901760
    %v1741 = vsub.f32 %v417, %v1740
    %v1742 = vand.u32 %v1741, 4294901760
    %1743 = vmatmul.f32.gmra.mxu0 %v1742
    %v1744 = vpop.f32.mrf.mxu0
    %v1745 = vadd.f32 %v1706, %v1744
    %1746 = vdwg.mxu0
    %v1747 = vand.u32 %v481, 4294901760
    %v1748 = vsub.f32 %v481, %v1747
    %v1749 = vand.u32 %v1748, 4294901760
    %1750 = vmatpush.msra.mxu0 %v1749
    %v1751 = vand.u32 %v479, 4294901760
    %v1752 = vsub.f32 %v479, %v1751
    %v1753 = vand.u32 %v1752, 4294901760
    %1754 = vmatpush.msra.mxu0 %v1753
    %v1755 = vand.u32 %v477, 4294901760
    %v1756 = vsub.f32 %v477, %v1755
    %v1757 = vand.u32 %v1756, 4294901760
    %1758 = vmatpush.msra.mxu0 %v1757
    %v1759 = vand.u32 %v475, 4294901760
    %v1760 = vsub.f32 %v475, %v1759
    %v1761 = vand.u32 %v1760, 4294901760
    %1762 = vmatpush.msra.mxu0 %v1761
    %v1763 = vand.u32 %v473, 4294901760
    %v1764 = vsub.f32 %v473, %v1763
    %v1765 = vand.u32 %v1764, 4294901760
    %1766 = vmatpush.msra.mxu0 %v1765
    %v1767 = vand.u32 %v471, 4294901760
    %v1768 = vsub.f32 %v471, %v1767
    %v1769 = vand.u32 %v1768, 4294901760
    %1770 = vmatpush.msra.mxu0 %v1769
    %v1771 = vand.u32 %v469, 4294901760
    %v1772 = vsub.f32 %v469, %v1771
    %v1773 = vand.u32 %v1772, 4294901760
    %1774 = vmatpush.msra.mxu0 %v1773
    %v1775 = vand.u32 %v467, 4294901760
    %v1776 = vsub.f32 %v467, %v1775
    %v1777 = vand.u32 %v1776, 4294901760
    %1778 = vmatpush.msra.mxu0 %v1777
    %v1779 = vand.u32 %v465, 4294901760
    %v1780 = vsub.f32 %v465, %v1779
    %v1781 = vand.u32 %v1780, 4294901760
    %1782 = vmatpush.msra.mxu0 %v1781
    %v1783 = vand.u32 %v463, 4294901760
    %v1784 = vsub.f32 %v463, %v1783
    %v1785 = vand.u32 %v1784, 4294901760
    %1786 = vmatpush.msra.mxu0 %v1785
    %v1787 = vand.u32 %v461, 4294901760
    %v1788 = vsub.f32 %v461, %v1787
    %v1789 = vand.u32 %v1788, 4294901760
    %1790 = vmatpush.msra.mxu0 %v1789
    %v1791 = vand.u32 %v459, 4294901760
    %v1792 = vsub.f32 %v459, %v1791
    %v1793 = vand.u32 %v1792, 4294901760
    %1794 = vmatpush.msra.mxu0 %v1793
    %v1795 = vand.u32 %v457, 4294901760
    %v1796 = vsub.f32 %v457, %v1795
    %v1797 = vand.u32 %v1796, 4294901760
    %1798 = vmatpush.msra.mxu0 %v1797
    %v1799 = vand.u32 %v455, 4294901760
    %v1800 = vsub.f32 %v455, %v1799
    %v1801 = vand.u32 %v1800, 4294901760
    %1802 = vmatpush.msra.mxu0 %v1801
    %v1803 = vand.u32 %v453, 4294901760
    %v1804 = vsub.f32 %v453, %v1803
    %v1805 = vand.u32 %v1804, 4294901760
    %1806 = vmatpush.msra.mxu0 %v1805
    %v1807 = vand.u32 %v451, 4294901760
    %v1808 = vsub.f32 %v451, %v1807
    %v1809 = vand.u32 %v1808, 4294901760
    %1810 = vmatpush.msra.mxu0 %v1809
    %v1811 = vand.u32 %v417, 4294901760
    %1812 = vmatmul.f32.gmra.mxu0 %v1811
    %v1813 = vpop.f32.mrf.mxu0
    %v1814 = vadd.f32 %v1745, %v1813
    %1815 = vdwg.mxu0
    %v1816 = vand.u32 %v481, 4294901760
    %1817 = vmatpush.msra.mxu0 %v1816
    %v1818 = vand.u32 %v479, 4294901760
    %1819 = vmatpush.msra.mxu0 %v1818
    %v1820 = vand.u32 %v477, 4294901760
    %1821 = vmatpush.msra.mxu0 %v1820
    %v1822 = vand.u32 %v475, 4294901760
    %1823 = vmatpush.msra.mxu0 %v1822
    %v1824 = vand.u32 %v473, 4294901760
    %1825 = vmatpush.msra.mxu0 %v1824
    %v1826 = vand.u32 %v471, 4294901760
    %1827 = vmatpush.msra.mxu0 %v1826
    %v1828 = vand.u32 %v469, 4294901760
    %1829 = vmatpush.msra.mxu0 %v1828
    %v1830 = vand.u32 %v467, 4294901760
    %1831 = vmatpush.msra.mxu0 %v1830
    %v1832 = vand.u32 %v465, 4294901760
    %1833 = vmatpush.msra.mxu0 %v1832
    %v1834 = vand.u32 %v463, 4294901760
    %1835 = vmatpush.msra.mxu0 %v1834
    %v1836 = vand.u32 %v461, 4294901760
    %1837 = vmatpush.msra.mxu0 %v1836
    %v1838 = vand.u32 %v459, 4294901760
    %1839 = vmatpush.msra.mxu0 %v1838
    %v1840 = vand.u32 %v457, 4294901760
    %1841 = vmatpush.msra.mxu0 %v1840
    %v1842 = vand.u32 %v455, 4294901760
    %1843 = vmatpush.msra.mxu0 %v1842
    %v1844 = vand.u32 %v453, 4294901760
    %1845 = vmatpush.msra.mxu0 %v1844
    %v1846 = vand.u32 %v451, 4294901760
    %1847 = vmatpush.msra.mxu0 %v1846
    %v1848 = vand.u32 %v417, 4294901760
    %1849 = vmatmul.f32.gmra.mxu0 %v1848
    %v1850 = vpop.f32.mrf.mxu0
    %v1851 = vadd.f32 %v1814, %v1850
    %1852 = vdwg.mxu0
    %v1853 = vtanh.pop %v1169
    %v1854 = vtanh.pop %v1851
    %v1855 = vld [vmem:[#allocation8] sm:$0xff]
    %v1856 = vld [vmem:[#allocation8 + $0x8] sm:$0xff]
    %v1857 = vld [vmem:[#allocation8 + $0x10] sm:$0xff]
    %v1858 = vld [vmem:[#allocation8 + $0x18] sm:$0xff]
    %v1859 = vld [vmem:[#allocation8 + $0x20] sm:$0xff]
    %v1860 = vld [vmem:[#allocation8 + $0x28] sm:$0xff]
    %v1861 = vld [vmem:[#allocation8 + $0x30] sm:$0xff]
    %v1862 = vld [vmem:[#allocation8 + $0x38] sm:$0xff]
    %v1863 = vld [vmem:[#allocation8 + $0x40] sm:$0xff]
    %v1864 = vld [vmem:[#allocation8 + $0x48] sm:$0xff]
    %v1865 = vld [vmem:[#allocation8 + $0x50] sm:$0xff]
    %v1866 = vld [vmem:[#allocation8 + $0x58] sm:$0xff]
    %v1867 = vld [vmem:[#allocation8 + $0x60] sm:$0xff]
    %v1868 = vld [vmem:[#allocation8 + $0x68] sm:$0xff]
    %v1869 = vld [vmem:[#allocation8 + $0x70] sm:$0xff]
    %v1870 = vld [vmem:[#allocation8 + $0x78] sm:$0xff]
    %v1871 = vld [vmem:[#allocation8 + $0x80] sm:$0xff]
    %v1872 = vld [vmem:[#allocation8 + $0x88] sm:$0xff]
    %v1873 = vld [vmem:[#allocation8 + $0x90] sm:$0xff]
    %v1874 = vld [vmem:[#allocation8 + $0x98] sm:$0xff]
    %v1875 = vld [vmem:[#allocation8 + $0xa0] sm:$0xff]
    %v1876 = vld [vmem:[#allocation8 + $0xa8] sm:$0xff]
    %v1877 = vld [vmem:[#allocation8 + $0xb0] sm:$0xff]
    %v1878 = vld [vmem:[#allocation8 + $0xb8] sm:$0xff]
    %v1879 = vld [vmem:[#allocation8 + $0xc0] sm:$0xff]
    %v1880 = vld [vmem:[#allocation8 + $0xc8] sm:$0xff]
    %v1881 = vld [vmem:[#allocation8 + $0xd0] sm:$0xff]
    %v1882 = vld [vmem:[#allocation8 + $0xd8] sm:$0xff]
    %v1883 = vld [vmem:[#allocation8 + $0xe0] sm:$0xff]
    %v1884 = vld [vmem:[#allocation8 + $0xe8] sm:$0xff]
    %v1885 = vld [vmem:[#allocation8 + $0xf0] sm:$0xff]
    %v1886 = vld [vmem:[#allocation8 + $0xf8] sm:$0xff]
    %v1887 = vld [vmem:[#allocation8 + $0x100] sm:$0xff]
    %v1888 = vld [vmem:[#allocation8 + $0x108] sm:$0xff]
    %v1889 = vld [vmem:[#allocation8 + $0x110] sm:$0xff]
    %v1890 = vld [vmem:[#allocation8 + $0x118] sm:$0xff]
    %v1891 = vld [vmem:[#allocation8 + $0x120] sm:$0xff]
    %v1892 = vld [vmem:[#allocation8 + $0x128] sm:$0xff]
    %v1893 = vld [vmem:[#allocation8 + $0x130] sm:$0xff]
    %v1894 = vld [vmem:[#allocation8 + $0x138] sm:$0xff]
    %v1895 = vld [vmem:[#allocation8 + $0x140] sm:$0xff]
    %v1896 = vld [vmem:[#allocation8 + $0x148] sm:$0xff]
    %v1897 = vld [vmem:[#allocation8 + $0x150] sm:$0xff]
    %v1898 = vld [vmem:[#allocation8 + $0x158] sm:$0xff]
    %v1899 = vld [vmem:[#allocation8 + $0x160] sm:$0xff]
    %v1900 = vld [vmem:[#allocation8 + $0x168] sm:$0xff]
    %v1901 = vld [vmem:[#allocation8 + $0x170] sm:$0xff]
    %v1902 = vld [vmem:[#allocation8 + $0x178] sm:$0xff]
    %v1903 = vld [vmem:[#allocation8 + $0x180] sm:$0xff]
    %v1904 = vld [vmem:[#allocation8 + $0x188] sm:$0xff]
    %v1905 = vld [vmem:[#allocation8 + $0x190] sm:$0xff]
    %v1906 = vld [vmem:[#allocation8 + $0x198] sm:$0xff]
    %v1907 = vld [vmem:[#allocation8 + $0x1a0] sm:$0xff]
    %v1908 = vld [vmem:[#allocation8 + $0x1a8] sm:$0xff]
    %v1909 = vld [vmem:[#allocation8 + $0x1b0] sm:$0xff]
    %v1910 = vld [vmem:[#allocation8 + $0x1b8] sm:$0xff]
    %v1911 = vld [vmem:[#allocation8 + $0x1c0] sm:$0xff]
    %v1912 = vld [vmem:[#allocation8 + $0x1c8] sm:$0xff]
    %v1913 = vld [vmem:[#allocation8 + $0x1d0] sm:$0xff]
    %v1914 = vld [vmem:[#allocation8 + $0x1d8] sm:$0xff]
    %v1915 = vld [vmem:[#allocation8 + $0x1e0] sm:$0xff]
    %v1916 = vld [vmem:[#allocation8 + $0x1e8] sm:$0xff]
    %v1917 = vld [vmem:[#allocation8 + $0x1f0] sm:$0xff]
    %v1918 = vld [vmem:[#allocation8 + $0x1f8] sm:$0xff]
    %v1919 = vld [vmem:[%s4] sm:$0x3]
    %v1921 = vperm.slane %v1919, 0
    %v1922 = vperm.slane %v1919, 1
    %v1925 = vand.u32 %v1885, 4294901760
    %1926 = vmatpush.msra.mxu0 %v1925
    %v1927 = vand.u32 %v1883, 4294901760
    %1928 = vmatpush.msra.mxu0 %v1927
    %v1929 = vand.u32 %v1881, 4294901760
    %1930 = vmatpush.msra.mxu0 %v1929
    %v1931 = vand.u32 %v1879, 4294901760
    %1932 = vmatpush.msra.mxu0 %v1931
    %v1933 = vand.u32 %v1877, 4294901760
    %1934 = vmatpush.msra.mxu0 %v1933
    %v1935 = vand.u32 %v1875, 4294901760
    %1936 = vmatpush.msra.mxu0 %v1935
    %v1937 = vand.u32 %v1873, 4294901760
    %1938 = vmatpush.msra.mxu0 %v1937
    %v1939 = vand.u32 %v1871, 4294901760
    %1940 = vmatpush.msra.mxu0 %v1939
    %v1941 = vand.u32 %v1869, 4294901760
    %1942 = vmatpush.msra.mxu0 %v1941
    %v1943 = vand.u32 %v1867, 4294901760
    %1944 = vmatpush.msra.mxu0 %v1943
    %v1945 = vand.u32 %v1865, 4294901760
    %1946 = vmatpush.msra.mxu0 %v1945
    %v1947 = vand.u32 %v1863, 4294901760
    %1948 = vmatpush.msra.mxu0 %v1947
    %v1949 = vand.u32 %v1861, 4294901760
    %1950 = vmatpush.msra.mxu0 %v1949
    %v1951 = vand.u32 %v1859, 4294901760
    %1952 = vmatpush.msra.mxu0 %v1951
    %v1953 = vand.u32 %v1857, 4294901760
    %1954 = vmatpush.msra.mxu0 %v1953
    %v1955 = vand.u32 %v1855, 4294901760
    %1956 = vmatpush.msra.mxu0 %v1955
    %v1957 = vand.u32 %v1853, 4294901760
    %v1958 = vsub.f32 %v1853, %v1957
    %v1959 = vand.u32 %v1958, 4294901760
    %v1960 = vsub.f32 %v1958, %v1959
    %v1961 = vand.u32 %v1960, 4294901760
    %1962 = vmatmul.f32.gmra.mxu0 %v1961
    %v1963 = vpop.f32.mrf.mxu0
    %v1964 = vadd.f32 %v1921, %v1963
    %1965 = vdwg.mxu0
    %v1966 = vand.u32 %v1885, 4294901760
    %v1967 = vsub.f32 %v1885, %v1966
    %v1968 = vand.u32 %v1967, 4294901760
    %v1969 = vsub.f32 %v1967, %v1968
    %v1970 = vand.u32 %v1969, 4294901760
    %1971 = vmatpush.msra.mxu0 %v1970
    %v1972 = vand.u32 %v1883, 4294901760
    %v1973 = vsub.f32 %v1883, %v1972
    %v1974 = vand.u32 %v1973, 4294901760
    %v1975 = vsub.f32 %v1973, %v1974
    %v1976 = vand.u32 %v1975, 4294901760
    %1977 = vmatpush.msra.mxu0 %v1976
    %v1978 = vand.u32 %v1881, 4294901760
    %v1979 = vsub.f32 %v1881, %v1978
    %v1980 = vand.u32 %v1979, 4294901760
    %v1981 = vsub.f32 %v1979, %v1980
    %v1982 = vand.u32 %v1981, 4294901760
    %1983 = vmatpush.msra.mxu0 %v1982
    %v1984 = vand.u32 %v1879, 4294901760
    %v1985 = vsub.f32 %v1879, %v1984
    %v1986 = vand.u32 %v1985, 4294901760
    %v1987 = vsub.f32 %v1985, %v1986
    %v1988 = vand.u32 %v1987, 4294901760
    %1989 = vmatpush.msra.mxu0 %v1988
    %v1990 = vand.u32 %v1877, 4294901760
    %v1991 = vsub.f32 %v1877, %v1990
    %v1992 = vand.u32 %v1991, 4294901760
    %v1993 = vsub.f32 %v1991, %v1992
    %v1994 = vand.u32 %v1993, 4294901760
    %1995 = vmatpush.msra.mxu0 %v1994
    %v1996 = vand.u32 %v1875, 4294901760
    %v1997 = vsub.f32 %v1875, %v1996
    %v1998 = vand.u32 %v1997, 4294901760
    %v1999 = vsub.f32 %v1997, %v1998
    %v2000 = vand.u32 %v1999, 4294901760
    %2001 = vmatpush.msra.mxu0 %v2000
    %v2002 = vand.u32 %v1873, 4294901760
    %v2003 = vsub.f32 %v1873, %v2002
    %v2004 = vand.u32 %v2003, 4294901760
    %v2005 = vsub.f32 %v2003, %v2004
    %v2006 = vand.u32 %v2005, 4294901760
    %2007 = vmatpush.msra.mxu0 %v2006
    %v2008 = vand.u32 %v1871, 4294901760
    %v2009 = vsub.f32 %v1871, %v2008
    %v2010 = vand.u32 %v2009, 4294901760
    %v2011 = vsub.f32 %v2009, %v2010
    %v2012 = vand.u32 %v2011, 4294901760
    %2013 = vmatpush.msra.mxu0 %v2012
    %v2014 = vand.u32 %v1869, 4294901760
    %v2015 = vsub.f32 %v1869, %v2014
    %v2016 = vand.u32 %v2015, 4294901760
    %v2017 = vsub.f32 %v2015, %v2016
    %v2018 = vand.u32 %v2017, 4294901760
    %2019 = vmatpush.msra.mxu0 %v2018
    %v2020 = vand.u32 %v1867, 4294901760
    %v2021 = vsub.f32 %v1867, %v2020
    %v2022 = vand.u32 %v2021, 4294901760
    %v2023 = vsub.f32 %v2021, %v2022
    %v2024 = vand.u32 %v2023, 4294901760
    %2025 = vmatpush.msra.mxu0 %v2024
    %v2026 = vand.u32 %v1865, 4294901760
    %v2027 = vsub.f32 %v1865, %v2026
    %v2028 = vand.u32 %v2027, 4294901760
    %v2029 = vsub.f32 %v2027, %v2028
    %v2030 = vand.u32 %v2029, 4294901760
    %2031 = vmatpush.msra.mxu0 %v2030
    %v2032 = vand.u32 %v1863, 4294901760
    %v2033 = vsub.f32 %v1863, %v2032
    %v2034 = vand.u32 %v2033, 4294901760
    %v2035 = vsub.f32 %v2033, %v2034
    %v2036 = vand.u32 %v2035, 4294901760
    %2037 = vmatpush.msra.mxu0 %v2036
    %v2038 = vand.u32 %v1861, 4294901760
    %v2039 = vsub.f32 %v1861, %v2038
    %v2040 = vand.u32 %v2039, 4294901760
    %v2041 = vsub.f32 %v2039, %v2040
    %v2042 = vand.u32 %v2041, 4294901760
    %2043 = vmatpush.msra.mxu0 %v2042
    %v2044 = vand.u32 %v1859, 4294901760
    %v2045 = vsub.f32 %v1859, %v2044
    %v2046 = vand.u32 %v2045, 4294901760
    %v2047 = vsub.f32 %v2045, %v2046
    %v2048 = vand.u32 %v2047, 4294901760
    %2049 = vmatpush.msra.mxu0 %v2048
    %v2050 = vand.u32 %v1857, 4294901760
    %v2051 = vsub.f32 %v1857, %v2050
    %v2052 = vand.u32 %v2051, 4294901760
    %v2053 = vsub.f32 %v2051, %v2052
    %v2054 = vand.u32 %v2053, 4294901760
    %2055 = vmatpush.msra.mxu0 %v2054
    %v2056 = vand.u32 %v1855, 4294901760
    %v2057 = vsub.f32 %v1855, %v2056
    %v2058 = vand.u32 %v2057, 4294901760
    %v2059 = vsub.f32 %v2057, %v2058
    %v2060 = vand.u32 %v2059, 4294901760
    %2061 = vmatpush.msra.mxu0 %v2060
    %v2062 = vand.u32 %v1853, 4294901760
    %2063 = vmatmul.f32.gmra.mxu0 %v2062
    %v2064 = vpop.f32.mrf.mxu0
    %v2065 = vadd.f32 %v1964, %v2064
    %2066 = vdwg.mxu0
    %v2067 = vand.u32 %v1885, 4294901760
    %v2068 = vsub.f32 %v1885, %v2067
    %2069 = vmatpush.msra.mxu0 %v2068
    %v2070 = vand.u32 %v1883, 4294901760
    %v2071 = vsub.f32 %v1883, %v2070
    %2072 = vmatpush.msra.mxu0 %v2071
    %v2073 = vand.u32 %v1881, 4294901760
    %v2074 = vsub.f32 %v1881, %v2073
    %2075 = vmatpush.msra.mxu0 %v2074
    %v2076 = vand.u32 %v1879, 4294901760
    %v2077 = vsub.f32 %v1879, %v2076
    %2078 = vmatpush.msra.mxu0 %v2077
    %v2079 = vand.u32 %v1877, 4294901760
    %v2080 = vsub.f32 %v1877, %v2079
    %2081 = vmatpush.msra.mxu0 %v2080
    %v2082 = vand.u32 %v1875, 4294901760
    %v2083 = vsub.f32 %v1875, %v2082
    %2084 = vmatpush.msra.mxu0 %v2083
    %v2085 = vand.u32 %v1873, 4294901760
    %v2086 = vsub.f32 %v1873, %v2085
    %2087 = vmatpush.msra.mxu0 %v2086
    %v2088 = vand.u32 %v1871, 4294901760
    %v2089 = vsub.f32 %v1871, %v2088
    %2090 = vmatpush.msra.mxu0 %v2089
    %v2091 = vand.u32 %v1869, 4294901760
    %v2092 = vsub.f32 %v1869, %v2091
    %2093 = vmatpush.msra.mxu0 %v2092
    %v2094 = vand.u32 %v1867, 4294901760
    %v2095 = vsub.f32 %v1867, %v2094
    %2096 = vmatpush.msra.mxu0 %v2095
    %v2097 = vand.u32 %v1865, 4294901760
    %v2098 = vsub.f32 %v1865, %v2097
    %2099 = vmatpush.msra.mxu0 %v2098
    %v2100 = vand.u32 %v1863, 4294901760
    %v2101 = vsub.f32 %v1863, %v2100
    %2102 = vmatpush.msra.mxu0 %v2101
    %v2103 = vand.u32 %v1861, 4294901760
    %v2104 = vsub.f32 %v1861, %v2103
    %2105 = vmatpush.msra.mxu0 %v2104
    %v2106 = vand.u32 %v1859, 4294901760
    %v2107 = vsub.f32 %v1859, %v2106
    %2108 = vmatpush.msra.mxu0 %v2107
    %v2109 = vand.u32 %v1857, 4294901760
    %v2110 = vsub.f32 %v1857, %v2109
    %2111 = vmatpush.msra.mxu0 %v2110
    %v2112 = vand.u32 %v1855, 4294901760
    %v2113 = vsub.f32 %v1855, %v2112
    %2114 = vmatpush.msra.mxu0 %v2113
    %v2115 = vand.u32 %v1853, 4294901760
    %v2116 = vsub.f32 %v1853, %v2115
    %2117 = vmatmul.f32.gmra.mxu0 %v2116
    %v2118 = vpop.f32.mrf.mxu0
    %v2119 = vadd.f32 %v2065, %v2118
    %2120 = vdwg.mxu0
    %v2121 = vand.u32 %v1885, 4294901760
    %2122 = vmatpush.msra.mxu0 %v2121
    %v2123 = vand.u32 %v1883, 4294901760
    %2124 = vmatpush.msra.mxu0 %v2123
    %v2125 = vand.u32 %v1881, 4294901760
    %2126 = vmatpush.msra.mxu0 %v2125
    %v2127 = vand.u32 %v1879, 4294901760
    %2128 = vmatpush.msra.mxu0 %v2127
    %v2129 = vand.u32 %v1877, 4294901760
    %2130 = vmatpush.msra.mxu0 %v2129
    %v2131 = vand.u32 %v1875, 4294901760
    %2132 = vmatpush.msra.mxu0 %v2131
    %v2133 = vand.u32 %v1873, 4294901760
    %2134 = vmatpush.msra.mxu0 %v2133
    %v2135 = vand.u32 %v1871, 4294901760
    %2136 = vmatpush.msra.mxu0 %v2135
    %v2137 = vand.u32 %v1869, 4294901760
    %2138 = vmatpush.msra.mxu0 %v2137
    %v2139 = vand.u32 %v1867, 4294901760
    %2140 = vmatpush.msra.mxu0 %v2139
    %v2141 = vand.u32 %v1865, 4294901760
    %2142 = vmatpush.msra.mxu0 %v2141
    %v2143 = vand.u32 %v1863, 4294901760
    %2144 = vmatpush.msra.mxu0 %v2143
    %v2145 = vand.u32 %v1861, 4294901760
    %2146 = vmatpush.msra.mxu0 %v2145
    %v2147 = vand.u32 %v1859, 4294901760
    %2148 = vmatpush.msra.mxu0 %v2147
    %v2149 = vand.u32 %v1857, 4294901760
    %2150 = vmatpush.msra.mxu0 %v2149
    %v2151 = vand.u32 %v1855, 4294901760
    %2152 = vmatpush.msra.mxu0 %v2151
    %v2153 = vand.u32 %v1853, 4294901760
    %v2154 = vsub.f32 %v1853, %v2153
    %v2155 = vand.u32 %v2154, 4294901760
    %2156 = vmatmul.f32.gmra.mxu0 %v2155
    %v2157 = vpop.f32.mrf.mxu0
    %v2158 = vadd.f32 %v2119, %v2157
    %2159 = vdwg.mxu0
    %v2160 = vand.u32 %v1885, 4294901760
    %v2161 = vsub.f32 %v1885, %v2160
    %v2162 = vand.u32 %v2161, 4294901760
    %2163 = vmatpush.msra.mxu0 %v2162
    %v2164 = vand.u32 %v1883, 4294901760
    %v2165 = vsub.f32 %v1883, %v2164
    %v2166 = vand.u32 %v2165, 4294901760
    %2167 = vmatpush.msra.mxu0 %v2166
    %v2168 = vand.u32 %v1881, 4294901760
    %v2169 = vsub.f32 %v1881, %v2168
    %v2170 = vand.u32 %v2169, 4294901760
    %2171 = vmatpush.msra.mxu0 %v2170
    %v2172 = vand.u32 %v1879, 4294901760
    %v2173 = vsub.f32 %v1879, %v2172
    %v2174 = vand.u32 %v2173, 4294901760
    %2175 = vmatpush.msra.mxu0 %v2174
    %v2176 = vand.u32 %v1877, 4294901760
    %v2177 = vsub.f32 %v1877, %v2176
    %v2178 = vand.u32 %v2177, 4294901760
    %2179 = vmatpush.msra.mxu0 %v2178
    %v2180 = vand.u32 %v1875, 4294901760
    %v2181 = vsub.f32 %v1875, %v2180
    %v2182 = vand.u32 %v2181, 4294901760
    %2183 = vmatpush.msra.mxu0 %v2182
    %v2184 = vand.u32 %v1873, 4294901760
    %v2185 = vsub.f32 %v1873, %v2184
    %v2186 = vand.u32 %v2185, 4294901760
    %2187 = vmatpush.msra.mxu0 %v2186
    %v2188 = vand.u32 %v1871, 4294901760
    %v2189 = vsub.f32 %v1871, %v2188
    %v2190 = vand.u32 %v2189, 4294901760
    %2191 = vmatpush.msra.mxu0 %v2190
    %v2192 = vand.u32 %v1869, 4294901760
    %v2193 = vsub.f32 %v1869, %v2192
    %v2194 = vand.u32 %v2193, 4294901760
    %2195 = vmatpush.msra.mxu0 %v2194
    %v2196 = vand.u32 %v1867, 4294901760
    %v2197 = vsub.f32 %v1867, %v2196
    %v2198 = vand.u32 %v2197, 4294901760
    %2199 = vmatpush.msra.mxu0 %v2198
    %v2200 = vand.u32 %v1865, 4294901760
    %v2201 = vsub.f32 %v1865, %v2200
    %v2202 = vand.u32 %v2201, 4294901760
    %2203 = vmatpush.msra.mxu0 %v2202
    %v2204 = vand.u32 %v1863, 4294901760
    %v2205 = vsub.f32 %v1863, %v2204
    %v2206 = vand.u32 %v2205, 4294901760
    %2207 = vmatpush.msra.mxu0 %v2206
    %v2208 = vand.u32 %v1861, 4294901760
    %v2209 = vsub.f32 %v1861, %v2208
    %v2210 = vand.u32 %v2209, 4294901760
    %2211 = vmatpush.msra.mxu0 %v2210
    %v2212 = vand.u32 %v1859, 4294901760
    %v2213 = vsub.f32 %v1859, %v2212
    %v2214 = vand.u32 %v2213, 4294901760
    %2215 = vmatpush.msra.mxu0 %v2214
    %v2216 = vand.u32 %v1857, 4294901760
    %v2217 = vsub.f32 %v1857, %v2216
    %v2218 = vand.u32 %v2217, 4294901760
    %2219 = vmatpush.msra.mxu0 %v2218
    %v2220 = vand.u32 %v1855, 4294901760
    %v2221 = vsub.f32 %v1855, %v2220
    %v2222 = vand.u32 %v2221, 4294901760
    %2223 = vmatpush.msra.mxu0 %v2222
    %v2224 = vand.u32 %v1853, 4294901760
    %2225 = vmatmul.f32.gmra.mxu0 %v2224
    %v2226 = vpop.f32.mrf.mxu0
    %v2227 = vadd.f32 %v2158, %v2226
    %2228 = vdwg.mxu0
    %v2229 = vand.u32 %v1885, 4294901760
    %2230 = vmatpush.msra.mxu0 %v2229
    %v2231 = vand.u32 %v1883, 4294901760
    %2232 = vmatpush.msra.mxu0 %v2231
    %v2233 = vand.u32 %v1881, 4294901760
    %2234 = vmatpush.msra.mxu0 %v2233
    %v2235 = vand.u32 %v1879, 4294901760
    %2236 = vmatpush.msra.mxu0 %v2235
    %v2237 = vand.u32 %v1877, 4294901760
    %2238 = vmatpush.msra.mxu0 %v2237
    %v2239 = vand.u32 %v1875, 4294901760
    %2240 = vmatpush.msra.mxu0 %v2239
    %v2241 = vand.u32 %v1873, 4294901760
    %2242 = vmatpush.msra.mxu0 %v2241
    %v2243 = vand.u32 %v1871, 4294901760
    %2244 = vmatpush.msra.mxu0 %v2243
    %v2245 = vand.u32 %v1869, 4294901760
    %2246 = vmatpush.msra.mxu0 %v2245
    %v2247 = vand.u32 %v1867, 4294901760
    %2248 = vmatpush.msra.mxu0 %v2247
    %v2249 = vand.u32 %v1865, 4294901760
    %2250 = vmatpush.msra.mxu0 %v2249
    %v2251 = vand.u32 %v1863, 4294901760
    %2252 = vmatpush.msra.mxu0 %v2251
    %v2253 = vand.u32 %v1861, 4294901760
    %2254 = vmatpush.msra.mxu0 %v2253
    %v2255 = vand.u32 %v1859, 4294901760
    %2256 = vmatpush.msra.mxu0 %v2255
    %v2257 = vand.u32 %v1857, 4294901760
    %2258 = vmatpush.msra.mxu0 %v2257
    %v2259 = vand.u32 %v1855, 4294901760
    %2260 = vmatpush.msra.mxu0 %v2259
    %v2261 = vand.u32 %v1853, 4294901760
    %2262 = vmatmul.f32.gmra.mxu0 %v2261
    %v2263 = vpop.f32.mrf.mxu0
    %v2264 = vadd.f32 %v2227, %v2263
    %2265 = vdwg.mxu0
    %v2266 = vand.u32 %v1917, 4294901760
    %2267 = vmatpush.msra.mxu0 %v2266
    %v2268 = vand.u32 %v1915, 4294901760
    %2269 = vmatpush.msra.mxu0 %v2268
    %v2270 = vand.u32 %v1913, 4294901760
    %2271 = vmatpush.msra.mxu0 %v2270
    %v2272 = vand.u32 %v1911, 4294901760
    %2273 = vmatpush.msra.mxu0 %v2272
    %v2274 = vand.u32 %v1909, 4294901760
    %2275 = vmatpush.msra.mxu0 %v2274
    %v2276 = vand.u32 %v1907, 4294901760
    %2277 = vmatpush.msra.mxu0 %v2276
    %v2278 = vand.u32 %v1905, 4294901760
    %2279 = vmatpush.msra.mxu0 %v2278
    %v2280 = vand.u32 %v1903, 4294901760
    %2281 = vmatpush.msra.mxu0 %v2280
    %v2282 = vand.u32 %v1901, 4294901760
    %2283 = vmatpush.msra.mxu0 %v2282
    %v2284 = vand.u32 %v1899, 4294901760
    %2285 = vmatpush.msra.mxu0 %v2284
    %v2286 = vand.u32 %v1897, 4294901760
    %2287 = vmatpush.msra.mxu0 %v2286
    %v2288 = vand.u32 %v1895, 4294901760
    %2289 = vmatpush.msra.mxu0 %v2288
    %v2290 = vand.u32 %v1893, 4294901760
    %2291 = vmatpush.msra.mxu0 %v2290
    %v2292 = vand.u32 %v1891, 4294901760
    %2293 = vmatpush.msra.mxu0 %v2292
    %v2294 = vand.u32 %v1889, 4294901760
    %2295 = vmatpush.msra.mxu0 %v2294
    %v2296 = vand.u32 %v1887, 4294901760
    %2297 = vmatpush.msra.mxu0 %v2296
    %v2298 = vand.u32 %v1854, 4294901760
    %v2299 = vsub.f32 %v1854, %v2298
    %v2300 = vand.u32 %v2299, 4294901760
    %v2301 = vsub.f32 %v2299, %v2300
    %v2302 = vand.u32 %v2301, 4294901760
    %2303 = vmatmul.f32.gmra.mxu0 %v2302
    %v2304 = vpop.f32.mrf.mxu0
    %v2305 = vadd.f32 %v2264, %v2304
    %2306 = vdwg.mxu0
    %v2307 = vand.u32 %v1917, 4294901760
    %v2308 = vsub.f32 %v1917, %v2307
    %v2309 = vand.u32 %v2308, 4294901760
    %v2310 = vsub.f32 %v2308, %v2309
    %v2311 = vand.u32 %v2310, 4294901760
    %2312 = vmatpush.msra.mxu0 %v2311
    %v2313 = vand.u32 %v1915, 4294901760
    %v2314 = vsub.f32 %v1915, %v2313
    %v2315 = vand.u32 %v2314, 4294901760
    %v2316 = vsub.f32 %v2314, %v2315
    %v2317 = vand.u32 %v2316, 4294901760
    %2318 = vmatpush.msra.mxu0 %v2317
    %v2319 = vand.u32 %v1913, 4294901760
    %v2320 = vsub.f32 %v1913, %v2319
    %v2321 = vand.u32 %v2320, 4294901760
    %v2322 = vsub.f32 %v2320, %v2321
    %v2323 = vand.u32 %v2322, 4294901760
    %2324 = vmatpush.msra.mxu0 %v2323
    %v2325 = vand.u32 %v1911, 4294901760
    %v2326 = vsub.f32 %v1911, %v2325
    %v2327 = vand.u32 %v2326, 4294901760
    %v2328 = vsub.f32 %v2326, %v2327
    %v2329 = vand.u32 %v2328, 4294901760
    %2330 = vmatpush.msra.mxu0 %v2329
    %v2331 = vand.u32 %v1909, 4294901760
    %v2332 = vsub.f32 %v1909, %v2331
    %v2333 = vand.u32 %v2332, 4294901760
    %v2334 = vsub.f32 %v2332, %v2333
    %v2335 = vand.u32 %v2334, 4294901760
    %2336 = vmatpush.msra.mxu0 %v2335
    %v2337 = vand.u32 %v1907, 4294901760
    %v2338 = vsub.f32 %v1907, %v2337
    %v2339 = vand.u32 %v2338, 4294901760
    %v2340 = vsub.f32 %v2338, %v2339
    %v2341 = vand.u32 %v2340, 4294901760
    %2342 = vmatpush.msra.mxu0 %v2341
    %v2343 = vand.u32 %v1905, 4294901760
    %v2344 = vsub.f32 %v1905, %v2343
    %v2345 = vand.u32 %v2344, 4294901760
    %v2346 = vsub.f32 %v2344, %v2345
    %v2347 = vand.u32 %v2346, 4294901760
    %2348 = vmatpush.msra.mxu0 %v2347
    %v2349 = vand.u32 %v1903, 4294901760
    %v2350 = vsub.f32 %v1903, %v2349
    %v2351 = vand.u32 %v2350, 4294901760
    %v2352 = vsub.f32 %v2350, %v2351
    %v2353 = vand.u32 %v2352, 4294901760
    %2354 = vmatpush.msra.mxu0 %v2353
    %v2355 = vand.u32 %v1901, 4294901760
    %v2356 = vsub.f32 %v1901, %v2355
    %v2357 = vand.u32 %v2356, 4294901760
    %v2358 = vsub.f32 %v2356, %v2357
    %v2359 = vand.u32 %v2358, 4294901760
    %2360 = vmatpush.msra.mxu0 %v2359
    %v2361 = vand.u32 %v1899, 4294901760
    %v2362 = vsub.f32 %v1899, %v2361
    %v2363 = vand.u32 %v2362, 4294901760
    %v2364 = vsub.f32 %v2362, %v2363
    %v2365 = vand.u32 %v2364, 4294901760
    %2366 = vmatpush.msra.mxu0 %v2365
    %v2367 = vand.u32 %v1897, 4294901760
    %v2368 = vsub.f32 %v1897, %v2367
    %v2369 = vand.u32 %v2368, 4294901760
    %v2370 = vsub.f32 %v2368, %v2369
    %v2371 = vand.u32 %v2370, 4294901760
    %2372 = vmatpush.msra.mxu0 %v2371
    %v2373 = vand.u32 %v1895, 4294901760
    %v2374 = vsub.f32 %v1895, %v2373
    %v2375 = vand.u32 %v2374, 4294901760
    %v2376 = vsub.f32 %v2374, %v2375
    %v2377 = vand.u32 %v2376, 4294901760
    %2378 = vmatpush.msra.mxu0 %v2377
    %v2379 = vand.u32 %v1893, 4294901760
    %v2380 = vsub.f32 %v1893, %v2379
    %v2381 = vand.u32 %v2380, 4294901760
    %v2382 = vsub.f32 %v2380, %v2381
    %v2383 = vand.u32 %v2382, 4294901760
    %2384 = vmatpush.msra.mxu0 %v2383
    %v2385 = vand.u32 %v1891, 4294901760
    %v2386 = vsub.f32 %v1891, %v2385
    %v2387 = vand.u32 %v2386, 4294901760
    %v2388 = vsub.f32 %v2386, %v2387
    %v2389 = vand.u32 %v2388, 4294901760
    %2390 = vmatpush.msra.mxu0 %v2389
    %v2391 = vand.u32 %v1889, 4294901760
    %v2392 = vsub.f32 %v1889, %v2391
    %v2393 = vand.u32 %v2392, 4294901760
    %v2394 = vsub.f32 %v2392, %v2393
    %v2395 = vand.u32 %v2394, 4294901760
    %2396 = vmatpush.msra.mxu0 %v2395
    %v2397 = vand.u32 %v1887, 4294901760
    %v2398 = vsub.f32 %v1887, %v2397
    %v2399 = vand.u32 %v2398, 4294901760
    %v2400 = vsub.f32 %v2398, %v2399
    %v2401 = vand.u32 %v2400, 4294901760
    %2402 = vmatpush.msra.mxu0 %v2401
    %v2403 = vand.u32 %v1854, 4294901760
    %2404 = vmatmul.f32.gmra.mxu0 %v2403
    %v2405 = vpop.f32.mrf.mxu0
    %v2406 = vadd.f32 %v2305, %v2405
    %2407 = vdwg.mxu0
    %v2408 = vand.u32 %v1917, 4294901760
    %v2409 = vsub.f32 %v1917, %v2408
    %2410 = vmatpush.msra.mxu0 %v2409
    %v2411 = vand.u32 %v1915, 4294901760
    %v2412 = vsub.f32 %v1915, %v2411
    %2413 = vmatpush.msra.mxu0 %v2412
    %v2414 = vand.u32 %v1913, 4294901760
    %v2415 = vsub.f32 %v1913, %v2414
    %2416 = vmatpush.msra.mxu0 %v2415
    %v2417 = vand.u32 %v1911, 4294901760
    %v2418 = vsub.f32 %v1911, %v2417
    %2419 = vmatpush.msra.mxu0 %v2418
    %v2420 = vand.u32 %v1909, 4294901760
    %v2421 = vsub.f32 %v1909, %v2420
    %2422 = vmatpush.msra.mxu0 %v2421
    %v2423 = vand.u32 %v1907, 4294901760
    %v2424 = vsub.f32 %v1907, %v2423
    %2425 = vmatpush.msra.mxu0 %v2424
    %v2426 = vand.u32 %v1905, 4294901760
    %v2427 = vsub.f32 %v1905, %v2426
    %2428 = vmatpush.msra.mxu0 %v2427
    %v2429 = vand.u32 %v1903, 4294901760
    %v2430 = vsub.f32 %v1903, %v2429
    %2431 = vmatpush.msra.mxu0 %v2430
    %v2432 = vand.u32 %v1901, 4294901760
    %v2433 = vsub.f32 %v1901, %v2432
    %2434 = vmatpush.msra.mxu0 %v2433
    %v2435 = vand.u32 %v1899, 4294901760
    %v2436 = vsub.f32 %v1899, %v2435
    %2437 = vmatpush.msra.mxu0 %v2436
    %v2438 = vand.u32 %v1897, 4294901760
    %v2439 = vsub.f32 %v1897, %v2438
    %2440 = vmatpush.msra.mxu0 %v2439
    %v2441 = vand.u32 %v1895, 4294901760
    %v2442 = vsub.f32 %v1895, %v2441
    %2443 = vmatpush.msra.mxu0 %v2442
    %v2444 = vand.u32 %v1893, 4294901760
    %v2445 = vsub.f32 %v1893, %v2444
    %2446 = vmatpush.msra.mxu0 %v2445
    %v2447 = vand.u32 %v1891, 4294901760
    %v2448 = vsub.f32 %v1891, %v2447
    %2449 = vmatpush.msra.mxu0 %v2448
    %v2450 = vand.u32 %v1889, 4294901760
    %v2451 = vsub.f32 %v1889, %v2450
    %2452 = vmatpush.msra.mxu0 %v2451
    %v2453 = vand.u32 %v1887, 4294901760
    %v2454 = vsub.f32 %v1887, %v2453
    %2455 = vmatpush.msra.mxu0 %v2454
    %v2456 = vand.u32 %v1854, 4294901760
    %v2457 = vsub.f32 %v1854, %v2456
    %2458 = vmatmul.f32.gmra.mxu0 %v2457
    %v2459 = vpop.f32.mrf.mxu0
    %v2460 = vadd.f32 %v2406, %v2459
    %2461 = vdwg.mxu0
    %v2462 = vand.u32 %v1917, 4294901760
    %2463 = vmatpush.msra.mxu0 %v2462
    %v2464 = vand.u32 %v1915, 4294901760
    %2465 = vmatpush.msra.mxu0 %v2464
    %v2466 = vand.u32 %v1913, 4294901760
    %2467 = vmatpush.msra.mxu0 %v2466
    %v2468 = vand.u32 %v1911, 4294901760
    %2469 = vmatpush.msra.mxu0 %v2468
    %v2470 = vand.u32 %v1909, 4294901760
    %2471 = vmatpush.msra.mxu0 %v2470
    %v2472 = vand.u32 %v1907, 4294901760
    %2473 = vmatpush.msra.mxu0 %v2472
    %v2474 = vand.u32 %v1905, 4294901760
    %2475 = vmatpush.msra.mxu0 %v2474
    %v2476 = vand.u32 %v1903, 4294901760
    %2477 = vmatpush.msra.mxu0 %v2476
    %v2478 = vand.u32 %v1901, 4294901760
    %2479 = vmatpush.msra.mxu0 %v2478
    %v2480 = vand.u32 %v1899, 4294901760
    %2481 = vmatpush.msra.mxu0 %v2480
    %v2482 = vand.u32 %v1897, 4294901760
    %2483 = vmatpush.msra.mxu0 %v2482
    %v2484 = vand.u32 %v1895, 4294901760
    %2485 = vmatpush.msra.mxu0 %v2484
    %v2486 = vand.u32 %v1893, 4294901760
    %2487 = vmatpush.msra.mxu0 %v2486
    %v2488 = vand.u32 %v1891, 4294901760
    %2489 = vmatpush.msra.mxu0 %v2488
    %v2490 = vand.u32 %v1889, 4294901760
    %2491 = vmatpush.msra.mxu0 %v2490
    %v2492 = vand.u32 %v1887, 4294901760
    %2493 = vmatpush.msra.mxu0 %v2492
    %v2494 = vand.u32 %v1854, 4294901760
    %v2495 = vsub.f32 %v1854, %v2494
    %v2496 = vand.u32 %v2495, 4294901760
    %2497 = vmatmul.f32.gmra.mxu0 %v2496
    %v2498 = vpop.f32.mrf.mxu0
    %v2499 = vadd.f32 %v2460, %v2498
    %2500 = vdwg.mxu0
    %v2501 = vand.u32 %v1917, 4294901760
    %v2502 = vsub.f32 %v1917, %v2501
    %v2503 = vand.u32 %v2502, 4294901760
    %2504 = vmatpush.msra.mxu0 %v2503
    %v2505 = vand.u32 %v1915, 4294901760
    %v2506 = vsub.f32 %v1915, %v2505
    %v2507 = vand.u32 %v2506, 4294901760
    %2508 = vmatpush.msra.mxu0 %v2507
    %v2509 = vand.u32 %v1913, 4294901760
    %v2510 = vsub.f32 %v1913, %v2509
    %v2511 = vand.u32 %v2510, 4294901760
    %2512 = vmatpush.msra.mxu0 %v2511
    %v2513 = vand.u32 %v1911, 4294901760
    %v2514 = vsub.f32 %v1911, %v2513
    %v2515 = vand.u32 %v2514, 4294901760
    %2516 = vmatpush.msra.mxu0 %v2515
    %v2517 = vand.u32 %v1909, 4294901760
    %v2518 = vsub.f32 %v1909, %v2517
    %v2519 = vand.u32 %v2518, 4294901760
    %2520 = vmatpush.msra.mxu0 %v2519
    %v2521 = vand.u32 %v1907, 4294901760
    %v2522 = vsub.f32 %v1907, %v2521
    %v2523 = vand.u32 %v2522, 4294901760
    %2524 = vmatpush.msra.mxu0 %v2523
    %v2525 = vand.u32 %v1905, 4294901760
    %v2526 = vsub.f32 %v1905, %v2525
    %v2527 = vand.u32 %v2526, 4294901760
    %2528 = vmatpush.msra.mxu0 %v2527
    %v2529 = vand.u32 %v1903, 4294901760
    %v2530 = vsub.f32 %v1903, %v2529
    %v2531 = vand.u32 %v2530, 4294901760
    %2532 = vmatpush.msra.mxu0 %v2531
    %v2533 = vand.u32 %v1901, 4294901760
    %v2534 = vsub.f32 %v1901, %v2533
    %v2535 = vand.u32 %v2534, 4294901760
    %2536 = vmatpush.msra.mxu0 %v2535
    %v2537 = vand.u32 %v1899, 4294901760
    %v2538 = vsub.f32 %v1899, %v2537
    %v2539 = vand.u32 %v2538, 4294901760
    %2540 = vmatpush.msra.mxu0 %v2539
    %v2541 = vand.u32 %v1897, 4294901760
    %v2542 = vsub.f32 %v1897, %v2541
    %v2543 = vand.u32 %v2542, 4294901760
    %2544 = vmatpush.msra.mxu0 %v2543
    %v2545 = vand.u32 %v1895, 4294901760
    %v2546 = vsub.f32 %v1895, %v2545
    %v2547 = vand.u32 %v2546, 4294901760
    %2548 = vmatpush.msra.mxu0 %v2547
    %v2549 = vand.u32 %v1893, 4294901760
    %v2550 = vsub.f32 %v1893, %v2549
    %v2551 = vand.u32 %v2550, 4294901760
    %2552 = vmatpush.msra.mxu0 %v2551
    %v2553 = vand.u32 %v1891, 4294901760
    %v2554 = vsub.f32 %v1891, %v2553
    %v2555 = vand.u32 %v2554, 4294901760
    %2556 = vmatpush.msra.mxu0 %v2555
    %v2557 = vand.u32 %v1889, 4294901760
    %v2558 = vsub.f32 %v1889, %v2557
    %v2559 = vand.u32 %v2558, 4294901760
    %2560 = vmatpush.msra.mxu0 %v2559
    %v2561 = vand.u32 %v1887, 4294901760
    %v2562 = vsub.f32 %v1887, %v2561
    %v2563 = vand.u32 %v2562, 4294901760
    %2564 = vmatpush.msra.mxu0 %v2563
    %v2565 = vand.u32 %v1854, 4294901760
    %2566 = vmatmul.f32.gmra.mxu0 %v2565
    %v2567 = vpop.f32.mrf.mxu0
    %v2568 = vadd.f32 %v2499, %v2567
    %2569 = vdwg.mxu0
    %v2570 = vand.u32 %v1917, 4294901760
    %2571 = vmatpush.msra.mxu0 %v2570
    %v2572 = vand.u32 %v1915, 4294901760
    %2573 = vmatpush.msra.mxu0 %v2572
    %v2574 = vand.u32 %v1913, 4294901760
    %2575 = vmatpush.msra.mxu0 %v2574
    %v2576 = vand.u32 %v1911, 4294901760
    %2577 = vmatpush.msra.mxu0 %v2576
    %v2578 = vand.u32 %v1909, 4294901760
    %2579 = vmatpush.msra.mxu0 %v2578
    %v2580 = vand.u32 %v1907, 4294901760
    %2581 = vmatpush.msra.mxu0 %v2580
    %v2582 = vand.u32 %v1905, 4294901760
    %2583 = vmatpush.msra.mxu0 %v2582
    %v2584 = vand.u32 %v1903, 4294901760
    %2585 = vmatpush.msra.mxu0 %v2584
    %v2586 = vand.u32 %v1901, 4294901760
    %2587 = vmatpush.msra.mxu0 %v2586
    %v2588 = vand.u32 %v1899, 4294901760
    %2589 = vmatpush.msra.mxu0 %v2588
    %v2590 = vand.u32 %v1897, 4294901760
    %2591 = vmatpush.msra.mxu0 %v2590
    %v2592 = vand.u32 %v1895, 4294901760
    %2593 = vmatpush.msra.mxu0 %v2592
    %v2594 = vand.u32 %v1893, 4294901760
    %2595 = vmatpush.msra.mxu0 %v2594
    %v2596 = vand.u32 %v1891, 4294901760
    %2597 = vmatpush.msra.mxu0 %v2596
    %v2598 = vand.u32 %v1889, 4294901760
    %2599 = vmatpush.msra.mxu0 %v2598
    %v2600 = vand.u32 %v1887, 4294901760
    %2601 = vmatpush.msra.mxu0 %v2600
    %v2602 = vand.u32 %v1854, 4294901760
    %2603 = vmatmul.f32.gmra.mxu0 %v2602
    %v2604 = vpop.f32.mrf.mxu0
    %v2605 = vadd.f32 %v2568, %v2604
    %2606 = vdwg.mxu0
    %v2607 = vand.u32 %v1886, 4294901760
    %2608 = vmatpush.msra.mxu0 %v2607
    %v2609 = vand.u32 %v1884, 4294901760
    %2610 = vmatpush.msra.mxu0 %v2609
    %v2611 = vand.u32 %v1882, 4294901760
    %2612 = vmatpush.msra.mxu0 %v2611
    %v2613 = vand.u32 %v1880, 4294901760
    %2614 = vmatpush.msra.mxu0 %v2613
    %v2615 = vand.u32 %v1878, 4294901760
    %2616 = vmatpush.msra.mxu0 %v2615
    %v2617 = vand.u32 %v1876, 4294901760
    %2618 = vmatpush.msra.mxu0 %v2617
    %v2619 = vand.u32 %v1874, 4294901760
    %2620 = vmatpush.msra.mxu0 %v2619
    %v2621 = vand.u32 %v1872, 4294901760
    %2622 = vmatpush.msra.mxu0 %v2621
    %v2623 = vand.u32 %v1870, 4294901760
    %2624 = vmatpush.msra.mxu0 %v2623
    %v2625 = vand.u32 %v1868, 4294901760
    %2626 = vmatpush.msra.mxu0 %v2625
    %v2627 = vand.u32 %v1866, 4294901760
    %2628 = vmatpush.msra.mxu0 %v2627
    %v2629 = vand.u32 %v1864, 4294901760
    %2630 = vmatpush.msra.mxu0 %v2629
    %v2631 = vand.u32 %v1862, 4294901760
    %2632 = vmatpush.msra.mxu0 %v2631
    %v2633 = vand.u32 %v1860, 4294901760
    %2634 = vmatpush.msra.mxu0 %v2633
    %v2635 = vand.u32 %v1858, 4294901760
    %2636 = vmatpush.msra.mxu0 %v2635
    %v2637 = vand.u32 %v1856, 4294901760
    %2638 = vmatpush.msra.mxu0 %v2637
    %v2639 = vand.u32 %v1853, 4294901760
    %v2640 = vsub.f32 %v1853, %v2639
    %v2641 = vand.u32 %v2640, 4294901760
    %v2642 = vsub.f32 %v2640, %v2641
    %v2643 = vand.u32 %v2642, 4294901760
    %2644 = vmatmul.f32.gmra.mxu0 %v2643
    %v2645 = vpop.f32.mrf.mxu0
    %v2646 = vadd.f32 %v1922, %v2645
    %2647 = vdwg.mxu0
    %v2648 = vand.u32 %v1886, 4294901760
    %v2649 = vsub.f32 %v1886, %v2648
    %v2650 = vand.u32 %v2649, 4294901760
    %v2651 = vsub.f32 %v2649, %v2650
    %v2652 = vand.u32 %v2651, 4294901760
    %2653 = vmatpush.msra.mxu0 %v2652
    %v2654 = vand.u32 %v1884, 4294901760
    %v2655 = vsub.f32 %v1884, %v2654
    %v2656 = vand.u32 %v2655, 4294901760
    %v2657 = vsub.f32 %v2655, %v2656
    %v2658 = vand.u32 %v2657, 4294901760
    %2659 = vmatpush.msra.mxu0 %v2658
    %v2660 = vand.u32 %v1882, 4294901760
    %v2661 = vsub.f32 %v1882, %v2660
    %v2662 = vand.u32 %v2661, 4294901760
    %v2663 = vsub.f32 %v2661, %v2662
    %v2664 = vand.u32 %v2663, 4294901760
    %2665 = vmatpush.msra.mxu0 %v2664
    %v2666 = vand.u32 %v1880, 4294901760
    %v2667 = vsub.f32 %v1880, %v2666
    %v2668 = vand.u32 %v2667, 4294901760
    %v2669 = vsub.f32 %v2667, %v2668
    %v2670 = vand.u32 %v2669, 4294901760
    %2671 = vmatpush.msra.mxu0 %v2670
    %v2672 = vand.u32 %v1878, 4294901760
    %v2673 = vsub.f32 %v1878, %v2672
    %v2674 = vand.u32 %v2673, 4294901760
    %v2675 = vsub.f32 %v2673, %v2674
    %v2676 = vand.u32 %v2675, 4294901760
    %2677 = vmatpush.msra.mxu0 %v2676
    %v2678 = vand.u32 %v1876, 4294901760
    %v2679 = vsub.f32 %v1876, %v2678
    %v2680 = vand.u32 %v2679, 4294901760
    %v2681 = vsub.f32 %v2679, %v2680
    %v2682 = vand.u32 %v2681, 4294901760
    %2683 = vmatpush.msra.mxu0 %v2682
    %v2684 = vand.u32 %v1874, 4294901760
    %v2685 = vsub.f32 %v1874, %v2684
    %v2686 = vand.u32 %v2685, 4294901760
    %v2687 = vsub.f32 %v2685, %v2686
    %v2688 = vand.u32 %v2687, 4294901760
    %2689 = vmatpush.msra.mxu0 %v2688
    %v2690 = vand.u32 %v1872, 4294901760
    %v2691 = vsub.f32 %v1872, %v2690
    %v2692 = vand.u32 %v2691, 4294901760
    %v2693 = vsub.f32 %v2691, %v2692
    %v2694 = vand.u32 %v2693, 4294901760
    %2695 = vmatpush.msra.mxu0 %v2694
    %v2696 = vand.u32 %v1870, 4294901760
    %v2697 = vsub.f32 %v1870, %v2696
    %v2698 = vand.u32 %v2697, 4294901760
    %v2699 = vsub.f32 %v2697, %v2698
    %v2700 = vand.u32 %v2699, 4294901760
    %2701 = vmatpush.msra.mxu0 %v2700
    %v2702 = vand.u32 %v1868, 4294901760
    %v2703 = vsub.f32 %v1868, %v2702
    %v2704 = vand.u32 %v2703, 4294901760
    %v2705 = vsub.f32 %v2703, %v2704
    %v2706 = vand.u32 %v2705, 4294901760
    %2707 = vmatpush.msra.mxu0 %v2706
    %v2708 = vand.u32 %v1866, 4294901760
    %v2709 = vsub.f32 %v1866, %v2708
    %v2710 = vand.u32 %v2709, 4294901760
    %v2711 = vsub.f32 %v2709, %v2710
    %v2712 = vand.u32 %v2711, 4294901760
    %2713 = vmatpush.msra.mxu0 %v2712
    %v2714 = vand.u32 %v1864, 4294901760
    %v2715 = vsub.f32 %v1864, %v2714
    %v2716 = vand.u32 %v2715, 4294901760
    %v2717 = vsub.f32 %v2715, %v2716
    %v2718 = vand.u32 %v2717, 4294901760
    %2719 = vmatpush.msra.mxu0 %v2718
    %v2720 = vand.u32 %v1862, 4294901760
    %v2721 = vsub.f32 %v1862, %v2720
    %v2722 = vand.u32 %v2721, 4294901760
    %v2723 = vsub.f32 %v2721, %v2722
    %v2724 = vand.u32 %v2723, 4294901760
    %2725 = vmatpush.msra.mxu0 %v2724
    %v2726 = vand.u32 %v1860, 4294901760
    %v2727 = vsub.f32 %v1860, %v2726
    %v2728 = vand.u32 %v2727, 4294901760
    %v2729 = vsub.f32 %v2727, %v2728
    %v2730 = vand.u32 %v2729, 4294901760
    %2731 = vmatpush.msra.mxu0 %v2730
    %v2732 = vand.u32 %v1858, 4294901760
    %v2733 = vsub.f32 %v1858, %v2732
    %v2734 = vand.u32 %v2733, 4294901760
    %v2735 = vsub.f32 %v2733, %v2734
    %v2736 = vand.u32 %v2735, 4294901760
    %2737 = vmatpush.msra.mxu0 %v2736
    %v2738 = vand.u32 %v1856, 4294901760
    %v2739 = vsub.f32 %v1856, %v2738
    %v2740 = vand.u32 %v2739, 4294901760
    %v2741 = vsub.f32 %v2739, %v2740
    %v2742 = vand.u32 %v2741, 4294901760
    %2743 = vmatpush.msra.mxu0 %v2742
    %v2744 = vand.u32 %v1853, 4294901760
    %2745 = vmatmul.f32.gmra.mxu0 %v2744
    %v2746 = vpop.f32.mrf.mxu0
    %v2747 = vadd.f32 %v2646, %v2746
    %2748 = vdwg.mxu0
    %v2749 = vand.u32 %v1886, 4294901760
    %v2750 = vsub.f32 %v1886, %v2749
    %2751 = vmatpush.msra.mxu0 %v2750
    %v2752 = vand.u32 %v1884, 4294901760
    %v2753 = vsub.f32 %v1884, %v2752
    %2754 = vmatpush.msra.mxu0 %v2753
    %v2755 = vand.u32 %v1882, 4294901760
    %v2756 = vsub.f32 %v1882, %v2755
    %2757 = vmatpush.msra.mxu0 %v2756
    %v2758 = vand.u32 %v1880, 4294901760
    %v2759 = vsub.f32 %v1880, %v2758
    %2760 = vmatpush.msra.mxu0 %v2759
    %v2761 = vand.u32 %v1878, 4294901760
    %v2762 = vsub.f32 %v1878, %v2761
    %2763 = vmatpush.msra.mxu0 %v2762
    %v2764 = vand.u32 %v1876, 4294901760
    %v2765 = vsub.f32 %v1876, %v2764
    %2766 = vmatpush.msra.mxu0 %v2765
    %v2767 = vand.u32 %v1874, 4294901760
    %v2768 = vsub.f32 %v1874, %v2767
    %2769 = vmatpush.msra.mxu0 %v2768
    %v2770 = vand.u32 %v1872, 4294901760
    %v2771 = vsub.f32 %v1872, %v2770
    %2772 = vmatpush.msra.mxu0 %v2771
    %v2773 = vand.u32 %v1870, 4294901760
    %v2774 = vsub.f32 %v1870, %v2773
    %2775 = vmatpush.msra.mxu0 %v2774
    %v2776 = vand.u32 %v1868, 4294901760
    %v2777 = vsub.f32 %v1868, %v2776
    %2778 = vmatpush.msra.mxu0 %v2777
    %v2779 = vand.u32 %v1866, 4294901760
    %v2780 = vsub.f32 %v1866, %v2779
    %2781 = vmatpush.msra.mxu0 %v2780
    %v2782 = vand.u32 %v1864, 4294901760
    %v2783 = vsub.f32 %v1864, %v2782
    %2784 = vmatpush.msra.mxu0 %v2783
    %v2785 = vand.u32 %v1862, 4294901760
    %v2786 = vsub.f32 %v1862, %v2785
    %2787 = vmatpush.msra.mxu0 %v2786
    %v2788 = vand.u32 %v1860, 4294901760
    %v2789 = vsub.f32 %v1860, %v2788
    %2790 = vmatpush.msra.mxu0 %v2789
    %v2791 = vand.u32 %v1858, 4294901760
    %v2792 = vsub.f32 %v1858, %v2791
    %2793 = vmatpush.msra.mxu0 %v2792
    %v2794 = vand.u32 %v1856, 4294901760
    %v2795 = vsub.f32 %v1856, %v2794
    %2796 = vmatpush.msra.mxu0 %v2795
    %v2797 = vand.u32 %v1853, 4294901760
    %v2798 = vsub.f32 %v1853, %v2797
    %2799 = vmatmul.f32.gmra.mxu0 %v2798
    %v2800 = vpop.f32.mrf.mxu0
    %v2801 = vadd.f32 %v2747, %v2800
    %2802 = vdwg.mxu0
    %v2803 = vand.u32 %v1886, 4294901760
    %2804 = vmatpush.msra.mxu0 %v2803
    %v2805 = vand.u32 %v1884, 4294901760
    %2806 = vmatpush.msra.mxu0 %v2805
    %v2807 = vand.u32 %v1882, 4294901760
    %2808 = vmatpush.msra.mxu0 %v2807
    %v2809 = vand.u32 %v1880, 4294901760
    %2810 = vmatpush.msra.mxu0 %v2809
    %v2811 = vand.u32 %v1878, 4294901760
    %2812 = vmatpush.msra.mxu0 %v2811
    %v2813 = vand.u32 %v1876, 4294901760
    %2814 = vmatpush.msra.mxu0 %v2813
    %v2815 = vand.u32 %v1874, 4294901760
    %2816 = vmatpush.msra.mxu0 %v2815
    %v2817 = vand.u32 %v1872, 4294901760
    %2818 = vmatpush.msra.mxu0 %v2817
    %v2819 = vand.u32 %v1870, 4294901760
    %2820 = vmatpush.msra.mxu0 %v2819
    %v2821 = vand.u32 %v1868, 4294901760
    %2822 = vmatpush.msra.mxu0 %v2821
    %v2823 = vand.u32 %v1866, 4294901760
    %2824 = vmatpush.msra.mxu0 %v2823
    %v2825 = vand.u32 %v1864, 4294901760
    %2826 = vmatpush.msra.mxu0 %v2825
    %v2827 = vand.u32 %v1862, 4294901760
    %2828 = vmatpush.msra.mxu0 %v2827
    %v2829 = vand.u32 %v1860, 4294901760
    %2830 = vmatpush.msra.mxu0 %v2829
    %v2831 = vand.u32 %v1858, 4294901760
    %2832 = vmatpush.msra.mxu0 %v2831
    %v2833 = vand.u32 %v1856, 4294901760
    %2834 = vmatpush.msra.mxu0 %v2833
    %v2835 = vand.u32 %v1853, 4294901760
    %v2836 = vsub.f32 %v1853, %v2835
    %v2837 = vand.u32 %v2836, 4294901760
    %2838 = vmatmul.f32.gmra.mxu0 %v2837
    %v2839 = vpop.f32.mrf.mxu0
    %v2840 = vadd.f32 %v2801, %v2839
    %2841 = vdwg.mxu0
    %v2842 = vand.u32 %v1886, 4294901760
    %v2843 = vsub.f32 %v1886, %v2842
    %v2844 = vand.u32 %v2843, 4294901760
    %2845 = vmatpush.msra.mxu0 %v2844
    %v2846 = vand.u32 %v1884, 4294901760
    %v2847 = vsub.f32 %v1884, %v2846
    %v2848 = vand.u32 %v2847, 4294901760
    %2849 = vmatpush.msra.mxu0 %v2848
    %v2850 = vand.u32 %v1882, 4294901760
    %v2851 = vsub.f32 %v1882, %v2850
    %v2852 = vand.u32 %v2851, 4294901760
    %2853 = vmatpush.msra.mxu0 %v2852
    %v2854 = vand.u32 %v1880, 4294901760
    %v2855 = vsub.f32 %v1880, %v2854
    %v2856 = vand.u32 %v2855, 4294901760
    %2857 = vmatpush.msra.mxu0 %v2856
    %v2858 = vand.u32 %v1878, 4294901760
    %v2859 = vsub.f32 %v1878, %v2858
    %v2860 = vand.u32 %v2859, 4294901760
    %2861 = vmatpush.msra.mxu0 %v2860
    %v2862 = vand.u32 %v1876, 4294901760
    %v2863 = vsub.f32 %v1876, %v2862
    %v2864 = vand.u32 %v2863, 4294901760
    %2865 = vmatpush.msra.mxu0 %v2864
    %v2866 = vand.u32 %v1874, 4294901760
    %v2867 = vsub.f32 %v1874, %v2866
    %v2868 = vand.u32 %v2867, 4294901760
    %2869 = vmatpush.msra.mxu0 %v2868
    %v2870 = vand.u32 %v1872, 4294901760
    %v2871 = vsub.f32 %v1872, %v2870
    %v2872 = vand.u32 %v2871, 4294901760
    %2873 = vmatpush.msra.mxu0 %v2872
    %v2874 = vand.u32 %v1870, 4294901760
    %v2875 = vsub.f32 %v1870, %v2874
    %v2876 = vand.u32 %v2875, 4294901760
    %2877 = vmatpush.msra.mxu0 %v2876
    %v2878 = vand.u32 %v1868, 4294901760
    %v2879 = vsub.f32 %v1868, %v2878
    %v2880 = vand.u32 %v2879, 4294901760
    %2881 = vmatpush.msra.mxu0 %v2880
    %v2882 = vand.u32 %v1866, 4294901760
    %v2883 = vsub.f32 %v1866, %v2882
    %v2884 = vand.u32 %v2883, 4294901760
    %2885 = vmatpush.msra.mxu0 %v2884
    %v2886 = vand.u32 %v1864, 4294901760
    %v2887 = vsub.f32 %v1864, %v2886
    %v2888 = vand.u32 %v2887, 4294901760
    %2889 = vmatpush.msra.mxu0 %v2888
    %v2890 = vand.u32 %v1862, 4294901760
    %v2891 = vsub.f32 %v1862, %v2890
    %v2892 = vand.u32 %v2891, 4294901760
    %2893 = vmatpush.msra.mxu0 %v2892
    %v2894 = vand.u32 %v1860, 4294901760
    %v2895 = vsub.f32 %v1860, %v2894
    %v2896 = vand.u32 %v2895, 4294901760
    %2897 = vmatpush.msra.mxu0 %v2896
    %v2898 = vand.u32 %v1858, 4294901760
    %v2899 = vsub.f32 %v1858, %v2898
    %v2900 = vand.u32 %v2899, 4294901760
    %2901 = vmatpush.msra.mxu0 %v2900
    %v2902 = vand.u32 %v1856, 4294901760
    %v2903 = vsub.f32 %v1856, %v2902
    %v2904 = vand.u32 %v2903, 4294901760
    %2905 = vmatpush.msra.mxu0 %v2904
    %v2906 = vand.u32 %v1853, 4294901760
    %2907 = vmatmul.f32.gmra.mxu0 %v2906
    %v2908 = vpop.f32.mrf.mxu0
    %v2909 = vadd.f32 %v2840, %v2908
    %2910 = vdwg.mxu0
    %v2911 = vand.u32 %v1886, 4294901760
    %2912 = vmatpush.msra.mxu0 %v2911
    %v2913 = vand.u32 %v1884, 4294901760
    %2914 = vmatpush.msra.mxu0 %v2913
    %v2915 = vand.u32 %v1882, 4294901760
    %2916 = vmatpush.msra.mxu0 %v2915
    %v2917 = vand.u32 %v1880, 4294901760
    %2918 = vmatpush.msra.mxu0 %v2917
    %v2919 = vand.u32 %v1878, 4294901760
    %2920 = vmatpush.msra.mxu0 %v2919
    %v2921 = vand.u32 %v1876, 4294901760
    %2922 = vmatpush.msra.mxu0 %v2921
    %v2923 = vand.u32 %v1874, 4294901760
    %2924 = vmatpush.msra.mxu0 %v2923
    %v2925 = vand.u32 %v1872, 4294901760
    %2926 = vmatpush.msra.mxu0 %v2925
    %v2927 = vand.u32 %v1870, 4294901760
    %2928 = vmatpush.msra.mxu0 %v2927
    %v2929 = vand.u32 %v1868, 4294901760
    %2930 = vmatpush.msra.mxu0 %v2929
    %v2931 = vand.u32 %v1866, 4294901760
    %2932 = vmatpush.msra.mxu0 %v2931
    %v2933 = vand.u32 %v1864, 4294901760
    %2934 = vmatpush.msra.mxu0 %v2933
    %v2935 = vand.u32 %v1862, 4294901760
    %2936 = vmatpush.msra.mxu0 %v2935
    %v2937 = vand.u32 %v1860, 4294901760
    %2938 = vmatpush.msra.mxu0 %v2937
    %v2939 = vand.u32 %v1858, 4294901760
    %2940 = vmatpush.msra.mxu0 %v2939
    %v2941 = vand.u32 %v1856, 4294901760
    %2942 = vmatpush.msra.mxu0 %v2941
    %v2943 = vand.u32 %v1853, 4294901760
    %2944 = vmatmul.f32.gmra.mxu0 %v2943
    %v2945 = vpop.f32.mrf.mxu0
    %v2946 = vadd.f32 %v2909, %v2945
    %2947 = vdwg.mxu0
    %v2948 = vand.u32 %v1918, 4294901760
    %2949 = vmatpush.msra.mxu0 %v2948
    %v2950 = vand.u32 %v1916, 4294901760
    %2951 = vmatpush.msra.mxu0 %v2950
    %v2952 = vand.u32 %v1914, 4294901760
    %2953 = vmatpush.msra.mxu0 %v2952
    %v2954 = vand.u32 %v1912, 4294901760
    %2955 = vmatpush.msra.mxu0 %v2954
    %v2956 = vand.u32 %v1910, 4294901760
    %2957 = vmatpush.msra.mxu0 %v2956
    %v2958 = vand.u32 %v1908, 4294901760
    %2959 = vmatpush.msra.mxu0 %v2958
    %v2960 = vand.u32 %v1906, 4294901760
    %2961 = vmatpush.msra.mxu0 %v2960
    %v2962 = vand.u32 %v1904, 4294901760
    %2963 = vmatpush.msra.mxu0 %v2962
    %v2964 = vand.u32 %v1902, 4294901760
    %2965 = vmatpush.msra.mxu0 %v2964
    %v2966 = vand.u32 %v1900, 4294901760
    %2967 = vmatpush.msra.mxu0 %v2966
    %v2968 = vand.u32 %v1898, 4294901760
    %2969 = vmatpush.msra.mxu0 %v2968
    %v2970 = vand.u32 %v1896, 4294901760
    %2971 = vmatpush.msra.mxu0 %v2970
    %v2972 = vand.u32 %v1894, 4294901760
    %2973 = vmatpush.msra.mxu0 %v2972
    %v2974 = vand.u32 %v1892, 4294901760
    %2975 = vmatpush.msra.mxu0 %v2974
    %v2976 = vand.u32 %v1890, 4294901760
    %2977 = vmatpush.msra.mxu0 %v2976
    %v2978 = vand.u32 %v1888, 4294901760
    %2979 = vmatpush.msra.mxu0 %v2978
    %v2980 = vand.u32 %v1854, 4294901760
    %v2981 = vsub.f32 %v1854, %v2980
    %v2982 = vand.u32 %v2981, 4294901760
    %v2983 = vsub.f32 %v2981, %v2982
    %v2984 = vand.u32 %v2983, 4294901760
    %2985 = vmatmul.f32.gmra.mxu0 %v2984
    %v2986 = vpop.f32.mrf.mxu0
    %v2987 = vadd.f32 %v2946, %v2986
    %2988 = vdwg.mxu0
    %v2989 = vand.u32 %v1918, 4294901760
    %v2990 = vsub.f32 %v1918, %v2989
    %v2991 = vand.u32 %v2990, 4294901760
    %v2992 = vsub.f32 %v2990, %v2991
    %v2993 = vand.u32 %v2992, 4294901760
    %2994 = vmatpush.msra.mxu0 %v2993
    %v2995 = vand.u32 %v1916, 4294901760
    %v2996 = vsub.f32 %v1916, %v2995
    %v2997 = vand.u32 %v2996, 4294901760
    %v2998 = vsub.f32 %v2996, %v2997
    %v2999 = vand.u32 %v2998, 4294901760
    %3000 = vmatpush.msra.mxu0 %v2999
    %v3001 = vand.u32 %v1914, 4294901760
    %v3002 = vsub.f32 %v1914, %v3001
    %v3003 = vand.u32 %v3002, 4294901760
    %v3004 = vsub.f32 %v3002, %v3003
    %v3005 = vand.u32 %v3004, 4294901760
    %3006 = vmatpush.msra.mxu0 %v3005
    %v3007 = vand.u32 %v1912, 4294901760
    %v3008 = vsub.f32 %v1912, %v3007
    %v3009 = vand.u32 %v3008, 4294901760
    %v3010 = vsub.f32 %v3008, %v3009
    %v3011 = vand.u32 %v3010, 4294901760
    %3012 = vmatpush.msra.mxu0 %v3011
    %v3013 = vand.u32 %v1910, 4294901760
    %v3014 = vsub.f32 %v1910, %v3013
    %v3015 = vand.u32 %v3014, 4294901760
    %v3016 = vsub.f32 %v3014, %v3015
    %v3017 = vand.u32 %v3016, 4294901760
    %3018 = vmatpush.msra.mxu0 %v3017
    %v3019 = vand.u32 %v1908, 4294901760
    %v3020 = vsub.f32 %v1908, %v3019
    %v3021 = vand.u32 %v3020, 4294901760
    %v3022 = vsub.f32 %v3020, %v3021
    %v3023 = vand.u32 %v3022, 4294901760
    %3024 = vmatpush.msra.mxu0 %v3023
    %v3025 = vand.u32 %v1906, 4294901760
    %v3026 = vsub.f32 %v1906, %v3025
    %v3027 = vand.u32 %v3026, 4294901760
    %v3028 = vsub.f32 %v3026, %v3027
    %v3029 = vand.u32 %v3028, 4294901760
    %3030 = vmatpush.msra.mxu0 %v3029
    %v3031 = vand.u32 %v1904, 4294901760
    %v3032 = vsub.f32 %v1904, %v3031
    %v3033 = vand.u32 %v3032, 4294901760
    %v3034 = vsub.f32 %v3032, %v3033
    %v3035 = vand.u32 %v3034, 4294901760
    %3036 = vmatpush.msra.mxu0 %v3035
    %v3037 = vand.u32 %v1902, 4294901760
    %v3038 = vsub.f32 %v1902, %v3037
    %v3039 = vand.u32 %v3038, 4294901760
    %v3040 = vsub.f32 %v3038, %v3039
    %v3041 = vand.u32 %v3040, 4294901760
    %3042 = vmatpush.msra.mxu0 %v3041
    %v3043 = vand.u32 %v1900, 4294901760
    %v3044 = vsub.f32 %v1900, %v3043
    %v3045 = vand.u32 %v3044, 4294901760
    %v3046 = vsub.f32 %v3044, %v3045
    %v3047 = vand.u32 %v3046, 4294901760
    %3048 = vmatpush.msra.mxu0 %v3047
    %v3049 = vand.u32 %v1898, 4294901760
    %v3050 = vsub.f32 %v1898, %v3049
    %v3051 = vand.u32 %v3050, 4294901760
    %v3052 = vsub.f32 %v3050, %v3051
    %v3053 = vand.u32 %v3052, 4294901760
    %3054 = vmatpush.msra.mxu0 %v3053
    %v3055 = vand.u32 %v1896, 4294901760
    %v3056 = vsub.f32 %v1896, %v3055
    %v3057 = vand.u32 %v3056, 4294901760
    %v3058 = vsub.f32 %v3056, %v3057
    %v3059 = vand.u32 %v3058, 4294901760
    %3060 = vmatpush.msra.mxu0 %v3059
    %v3061 = vand.u32 %v1894, 4294901760
    %v3062 = vsub.f32 %v1894, %v3061
    %v3063 = vand.u32 %v3062, 4294901760
    %v3064 = vsub.f32 %v3062, %v3063
    %v3065 = vand.u32 %v3064, 4294901760
    %3066 = vmatpush.msra.mxu0 %v3065
    %v3067 = vand.u32 %v1892, 4294901760
    %v3068 = vsub.f32 %v1892, %v3067
    %v3069 = vand.u32 %v3068, 4294901760
    %v3070 = vsub.f32 %v3068, %v3069
    %v3071 = vand.u32 %v3070, 4294901760
    %3072 = vmatpush.msra.mxu0 %v3071
    %v3073 = vand.u32 %v1890, 4294901760
    %v3074 = vsub.f32 %v1890, %v3073
    %v3075 = vand.u32 %v3074, 4294901760
    %v3076 = vsub.f32 %v3074, %v3075
    %v3077 = vand.u32 %v3076, 4294901760
    %3078 = vmatpush.msra.mxu0 %v3077
    %v3079 = vand.u32 %v1888, 4294901760
    %v3080 = vsub.f32 %v1888, %v3079
    %v3081 = vand.u32 %v3080, 4294901760
    %v3082 = vsub.f32 %v3080, %v3081
    %v3083 = vand.u32 %v3082, 4294901760
    %3084 = vmatpush.msra.mxu0 %v3083
    %v3085 = vand.u32 %v1854, 4294901760
    %3086 = vmatmul.f32.gmra.mxu0 %v3085
    %v3087 = vpop.f32.mrf.mxu0
    %v3088 = vadd.f32 %v2987, %v3087
    %3089 = vdwg.mxu0
    %v3090 = vand.u32 %v1918, 4294901760
    %v3091 = vsub.f32 %v1918, %v3090
    %3092 = vmatpush.msra.mxu0 %v3091
    %v3093 = vand.u32 %v1916, 4294901760
    %v3094 = vsub.f32 %v1916, %v3093
    %3095 = vmatpush.msra.mxu0 %v3094
    %v3096 = vand.u32 %v1914, 4294901760
    %v3097 = vsub.f32 %v1914, %v3096
    %3098 = vmatpush.msra.mxu0 %v3097
    %v3099 = vand.u32 %v1912, 4294901760
    %v3100 = vsub.f32 %v1912, %v3099
    %3101 = vmatpush.msra.mxu0 %v3100
    %v3102 = vand.u32 %v1910, 4294901760
    %v3103 = vsub.f32 %v1910, %v3102
    %3104 = vmatpush.msra.mxu0 %v3103
    %v3105 = vand.u32 %v1908, 4294901760
    %v3106 = vsub.f32 %v1908, %v3105
    %3107 = vmatpush.msra.mxu0 %v3106
    %v3108 = vand.u32 %v1906, 4294901760
    %v3109 = vsub.f32 %v1906, %v3108
    %3110 = vmatpush.msra.mxu0 %v3109
    %v3111 = vand.u32 %v1904, 4294901760
    %v3112 = vsub.f32 %v1904, %v3111
    %3113 = vmatpush.msra.mxu0 %v3112
    %v3114 = vand.u32 %v1902, 4294901760
    %v3115 = vsub.f32 %v1902, %v3114
    %3116 = vmatpush.msra.mxu0 %v3115
    %v3117 = vand.u32 %v1900, 4294901760
    %v3118 = vsub.f32 %v1900, %v3117
    %3119 = vmatpush.msra.mxu0 %v3118
    %v3120 = vand.u32 %v1898, 4294901760
    %v3121 = vsub.f32 %v1898, %v3120
    %3122 = vmatpush.msra.mxu0 %v3121
    %v3123 = vand.u32 %v1896, 4294901760
    %v3124 = vsub.f32 %v1896, %v3123
    %3125 = vmatpush.msra.mxu0 %v3124
    %v3126 = vand.u32 %v1894, 4294901760
    %v3127 = vsub.f32 %v1894, %v3126
    %3128 = vmatpush.msra.mxu0 %v3127
    %v3129 = vand.u32 %v1892, 4294901760
    %v3130 = vsub.f32 %v1892, %v3129
    %3131 = vmatpush.msra.mxu0 %v3130
    %v3132 = vand.u32 %v1890, 4294901760
    %v3133 = vsub.f32 %v1890, %v3132
    %3134 = vmatpush.msra.mxu0 %v3133
    %v3135 = vand.u32 %v1888, 4294901760
    %v3136 = vsub.f32 %v1888, %v3135
    %3137 = vmatpush.msra.mxu0 %v3136
    %v3138 = vand.u32 %v1854, 4294901760
    %v3139 = vsub.f32 %v1854, %v3138
    %3140 = vmatmul.f32.gmra.mxu0 %v3139
    %v3141 = vpop.f32.mrf.mxu0
    %v3142 = vadd.f32 %v3088, %v3141
    %3143 = vdwg.mxu0
    %v3144 = vand.u32 %v1918, 4294901760
    %3145 = vmatpush.msra.mxu0 %v3144
    %v3146 = vand.u32 %v1916, 4294901760
    %3147 = vmatpush.msra.mxu0 %v3146
    %v3148 = vand.u32 %v1914, 4294901760
    %3149 = vmatpush.msra.mxu0 %v3148
    %v3150 = vand.u32 %v1912, 4294901760
    %3151 = vmatpush.msra.mxu0 %v3150
    %v3152 = vand.u32 %v1910, 4294901760
    %3153 = vmatpush.msra.mxu0 %v3152
    %v3154 = vand.u32 %v1908, 4294901760
    %3155 = vmatpush.msra.mxu0 %v3154
    %v3156 = vand.u32 %v1906, 4294901760
    %3157 = vmatpush.msra.mxu0 %v3156
    %v3158 = vand.u32 %v1904, 4294901760
    %3159 = vmatpush.msra.mxu0 %v3158
    %v3160 = vand.u32 %v1902, 4294901760
    %3161 = vmatpush.msra.mxu0 %v3160
    %v3162 = vand.u32 %v1900, 4294901760
    %3163 = vmatpush.msra.mxu0 %v3162
    %v3164 = vand.u32 %v1898, 4294901760
    %3165 = vmatpush.msra.mxu0 %v3164
    %v3166 = vand.u32 %v1896, 4294901760
    %3167 = vmatpush.msra.mxu0 %v3166
    %v3168 = vand.u32 %v1894, 4294901760
    %3169 = vmatpush.msra.mxu0 %v3168
    %v3170 = vand.u32 %v1892, 4294901760
    %3171 = vmatpush.msra.mxu0 %v3170
    %v3172 = vand.u32 %v1890, 4294901760
    %3173 = vmatpush.msra.mxu0 %v3172
    %v3174 = vand.u32 %v1888, 4294901760
    %3175 = vmatpush.msra.mxu0 %v3174
    %v3176 = vand.u32 %v1854, 4294901760
    %v3177 = vsub.f32 %v1854, %v3176
    %v3178 = vand.u32 %v3177, 4294901760
    %3179 = vmatmul.f32.gmra.mxu0 %v3178
    %v3180 = vpop.f32.mrf.mxu0
    %v3181 = vadd.f32 %v3142, %v3180
    %3182 = vdwg.mxu0
    %v3183 = vand.u32 %v1918, 4294901760
    %v3184 = vsub.f32 %v1918, %v3183
    %v3185 = vand.u32 %v3184, 4294901760
    %3186 = vmatpush.msra.mxu0 %v3185
    %v3187 = vand.u32 %v1916, 4294901760
    %v3188 = vsub.f32 %v1916, %v3187
    %v3189 = vand.u32 %v3188, 4294901760
    %3190 = vmatpush.msra.mxu0 %v3189
    %v3191 = vand.u32 %v1914, 4294901760
    %v3192 = vsub.f32 %v1914, %v3191
    %v3193 = vand.u32 %v3192, 4294901760
    %3194 = vmatpush.msra.mxu0 %v3193
    %v3195 = vand.u32 %v1912, 4294901760
    %v3196 = vsub.f32 %v1912, %v3195
    %v3197 = vand.u32 %v3196, 4294901760
    %3198 = vmatpush.msra.mxu0 %v3197
    %v3199 = vand.u32 %v1910, 4294901760
    %v3200 = vsub.f32 %v1910, %v3199
    %v3201 = vand.u32 %v3200, 4294901760
    %3202 = vmatpush.msra.mxu0 %v3201
    %v3203 = vand.u32 %v1908, 4294901760
    %v3204 = vsub.f32 %v1908, %v3203
    %v3205 = vand.u32 %v3204, 4294901760
    %3206 = vmatpush.msra.mxu0 %v3205
    %v3207 = vand.u32 %v1906, 4294901760
    %v3208 = vsub.f32 %v1906, %v3207
    %v3209 = vand.u32 %v3208, 4294901760
    %3210 = vmatpush.msra.mxu0 %v3209
    %v3211 = vand.u32 %v1904, 4294901760
    %v3212 = vsub.f32 %v1904, %v3211
    %v3213 = vand.u32 %v3212, 4294901760
    %3214 = vmatpush.msra.mxu0 %v3213
    %v3215 = vand.u32 %v1902, 4294901760
    %v3216 = vsub.f32 %v1902, %v3215
    %v3217 = vand.u32 %v3216, 4294901760
    %3218 = vmatpush.msra.mxu0 %v3217
    %v3219 = vand.u32 %v1900, 4294901760
    %v3220 = vsub.f32 %v1900, %v3219
    %v3221 = vand.u32 %v3220, 4294901760
    %3222 = vmatpush.msra.mxu0 %v3221
    %v3223 = vand.u32 %v1898, 4294901760
    %v3224 = vsub.f32 %v1898, %v3223
    %v3225 = vand.u32 %v3224, 4294901760
    %3226 = vmatpush.msra.mxu0 %v3225
    %v3227 = vand.u32 %v1896, 4294901760
    %v3228 = vsub.f32 %v1896, %v3227
    %v3229 = vand.u32 %v3228, 4294901760
    %3230 = vmatpush.msra.mxu0 %v3229
    %v3231 = vand.u32 %v1894, 4294901760
    %v3232 = vsub.f32 %v1894, %v3231
    %v3233 = vand.u32 %v3232, 4294901760
    %3234 = vmatpush.msra.mxu0 %v3233
    %v3235 = vand.u32 %v1892, 4294901760
    %v3236 = vsub.f32 %v1892, %v3235
    %v3237 = vand.u32 %v3236, 4294901760
    %3238 = vmatpush.msra.mxu0 %v3237
    %v3239 = vand.u32 %v1890, 4294901760
    %v3240 = vsub.f32 %v1890, %v3239
    %v3241 = vand.u32 %v3240, 4294901760
    %3242 = vmatpush.msra.mxu0 %v3241
    %v3243 = vand.u32 %v1888, 4294901760
    %v3244 = vsub.f32 %v1888, %v3243
    %v3245 = vand.u32 %v3244, 4294901760
    %3246 = vmatpush.msra.mxu0 %v3245
    %v3247 = vand.u32 %v1854, 4294901760
    %3248 = vmatmul.f32.gmra.mxu0 %v3247
    %v3249 = vpop.f32.mrf.mxu0
    %v3250 = vadd.f32 %v3181, %v3249
    %3251 = vdwg.mxu0
    %v3252 = vand.u32 %v1918, 4294901760
    %3253 = vmatpush.msra.mxu0 %v3252
    %v3254 = vand.u32 %v1916, 4294901760
    %3255 = vmatpush.msra.mxu0 %v3254
    %v3256 = vand.u32 %v1914, 4294901760
    %3257 = vmatpush.msra.mxu0 %v3256
    %v3258 = vand.u32 %v1912, 4294901760
    %3259 = vmatpush.msra.mxu0 %v3258
    %v3260 = vand.u32 %v1910, 4294901760
    %3261 = vmatpush.msra.mxu0 %v3260
    %v3262 = vand.u32 %v1908, 4294901760
    %3263 = vmatpush.msra.mxu0 %v3262
    %v3264 = vand.u32 %v1906, 4294901760
    %3265 = vmatpush.msra.mxu0 %v3264
    %v3266 = vand.u32 %v1904, 4294901760
    %3267 = vmatpush.msra.mxu0 %v3266
    %v3268 = vand.u32 %v1902, 4294901760
    %3269 = vmatpush.msra.mxu0 %v3268
    %v3270 = vand.u32 %v1900, 4294901760
    %3271 = vmatpush.msra.mxu0 %v3270
    %v3272 = vand.u32 %v1898, 4294901760
    %3273 = vmatpush.msra.mxu0 %v3272
    %v3274 = vand.u32 %v1896, 4294901760
    %3275 = vmatpush.msra.mxu0 %v3274
    %v3276 = vand.u32 %v1894, 4294901760
    %3277 = vmatpush.msra.mxu0 %v3276
    %v3278 = vand.u32 %v1892, 4294901760
    %3279 = vmatpush.msra.mxu0 %v3278
    %v3280 = vand.u32 %v1890, 4294901760
    %3281 = vmatpush.msra.mxu0 %v3280
    %v3282 = vand.u32 %v1888, 4294901760
    %3283 = vmatpush.msra.mxu0 %v3282
    %v3284 = vand.u32 %v1854, 4294901760
    %3285 = vmatmul.f32.gmra.mxu0 %v3284
    %v3286 = vpop.f32.mrf.mxu0
    %v3287 = vadd.f32 %v3250, %v3286
    %3288 = vdwg.mxu0
    %v3291 = vrot.slane %v3287, 6
    %vm3292 = vcmask 1041408
    %v3293 = vsel %vm3292, %v2605, %v3291
    %3295 = vst [vmem:[#allocation10] sm:$0xf] %v3293
    %v3296 = vld [vmem:[#allocation5 + $0x220] sm:$0xff]
    %v3297 = vld [vmem:[#allocation5 + $0x228] sm:$0xff]
    %v3298 = vld [vmem:[#allocation5 + $0x230] sm:$0xff]
    %v3299 = vld [vmem:[#allocation5 + $0x238] sm:$0xff]
    %s3300 = scalar_lea.vmem [#allocation7], 2
    %v3301 = vld [vmem:[%s3300] ss:$4 sm:$0x3]
    %v3303 = vperm.slane %v3301, 0
    %v3304 = vperm.slane %v3301, 1
    %3307 = vmatpush.msra.mxu0 0.0
    %3308 = vmatpush.msra.mxu0 0.0
    %3309 = vmatpush.msra.mxu0 0.0
    %3310 = vmatpush.msra.mxu0 0.0
    %3311 = vmatpush.msra.mxu0 0.0
    %3312 = vmatpush.msra.mxu0 0.0
    %3313 = vmatpush.msra.mxu0 0.0
    %3314 = vmatpush.msra.mxu0 0.0
    %3315 = vmatpush.msra.mxu0 0.0
    %3316 = vmatpush.msra.mxu0 0.0
    %3317 = vmatpush.msra.mxu0 0.0
    %3318 = vmatpush.msra.mxu0 0.0
    %3319 = vmatpush.msra.mxu0 0.0
    %3320 = vmatpush.msra.mxu0 0.0
    %v3321 = vand.u32 %v3298, 4294901760
    %3322 = vmatpush.msra.mxu0 %v3321
    %v3323 = vand.u32 %v3296, 4294901760
    %3324 = vmatpush.msra.mxu0 %v3323
    %v3325 = vand.u32 %v96, 4294901760
    %v3326 = vsub.f32 %v96, %v3325
    %v3327 = vand.u32 %v3326, 4294901760
    %v3328 = vsub.f32 %v3326, %v3327
    %v3329 = vand.u32 %v3328, 4294901760
    %3330 = vmatmul.f32.gmra.mxu0 %v3329
    %v3331 = vpop.f32.mrf.mxu0
    %v3332 = vadd.f32 %v3303, %v3331
    %3333 = vdwg.mxu0
    %3334 = vmatpush.msra.mxu0 0.0
    %3335 = vmatpush.msra.mxu0 0.0
    %3336 = vmatpush.msra.mxu0 0.0
    %3337 = vmatpush.msra.mxu0 0.0
    %3338 = vmatpush.msra.mxu0 0.0
    %3339 = vmatpush.msra.mxu0 0.0
    %3340 = vmatpush.msra.mxu0 0.0
    %3341 = vmatpush.msra.mxu0 0.0
    %3342 = vmatpush.msra.mxu0 0.0
    %3343 = vmatpush.msra.mxu0 0.0
    %3344 = vmatpush.msra.mxu0 0.0
    %3345 = vmatpush.msra.mxu0 0.0
    %3346 = vmatpush.msra.mxu0 0.0
    %3347 = vmatpush.msra.mxu0 0.0
    %v3348 = vand.u32 %v3298, 4294901760
    %v3349 = vsub.f32 %v3298, %v3348
    %v3350 = vand.u32 %v3349, 4294901760
    %v3351 = vsub.f32 %v3349, %v3350
    %v3352 = vand.u32 %v3351, 4294901760
    %3353 = vmatpush.msra.mxu0 %v3352
    %v3354 = vand.u32 %v3296, 4294901760
    %v3355 = vsub.f32 %v3296, %v3354
    %v3356 = vand.u32 %v3355, 4294901760
    %v3357 = vsub.f32 %v3355, %v3356
    %v3358 = vand.u32 %v3357, 4294901760
    %3359 = vmatpush.msra.mxu0 %v3358
    %v3360 = vand.u32 %v96, 4294901760
    %3361 = vmatmul.f32.gmra.mxu0 %v3360
    %v3362 = vpop.f32.mrf.mxu0
    %v3363 = vadd.f32 %v3332, %v3362
    %3364 = vdwg.mxu0
    %3365 = vmatpush.msra.mxu0 0.0
    %3366 = vmatpush.msra.mxu0 0.0
    %3367 = vmatpush.msra.mxu0 0.0
    %3368 = vmatpush.msra.mxu0 0.0
    %3369 = vmatpush.msra.mxu0 0.0
    %3370 = vmatpush.msra.mxu0 0.0
    %3371 = vmatpush.msra.mxu0 0.0
    %3372 = vmatpush.msra.mxu0 0.0
    %3373 = vmatpush.msra.mxu0 0.0
    %3374 = vmatpush.msra.mxu0 0.0
    %3375 = vmatpush.msra.mxu0 0.0
    %3376 = vmatpush.msra.mxu0 0.0
    %3377 = vmatpush.msra.mxu0 0.0
    %3378 = vmatpush.msra.mxu0 0.0
    %v3379 = vand.u32 %v3298, 4294901760
    %v3380 = vsub.f32 %v3298, %v3379
    %3381 = vmatpush.msra.mxu0 %v3380
    %v3382 = vand.u32 %v3296, 4294901760
    %v3383 = vsub.f32 %v3296, %v3382
    %3384 = vmatpush.msra.mxu0 %v3383
    %v3385 = vand.u32 %v96, 4294901760
    %v3386 = vsub.f32 %v96, %v3385
    %3387 = vmatmul.f32.gmra.mxu0 %v3386
    %v3388 = vpop.f32.mrf.mxu0
    %v3389 = vadd.f32 %v3363, %v3388
    %3390 = vdwg.mxu0
    %3391 = vmatpush.msra.mxu0 0.0
    %3392 = vmatpush.msra.mxu0 0.0
    %3393 = vmatpush.msra.mxu0 0.0
    %3394 = vmatpush.msra.mxu0 0.0
    %3395 = vmatpush.msra.mxu0 0.0
    %3396 = vmatpush.msra.mxu0 0.0
    %3397 = vmatpush.msra.mxu0 0.0
    %3398 = vmatpush.msra.mxu0 0.0
    %3399 = vmatpush.msra.mxu0 0.0
    %3400 = vmatpush.msra.mxu0 0.0
    %3401 = vmatpush.msra.mxu0 0.0
    %3402 = vmatpush.msra.mxu0 0.0
    %3403 = vmatpush.msra.mxu0 0.0
    %3404 = vmatpush.msra.mxu0 0.0
    %v3405 = vand.u32 %v3298, 4294901760
    %3406 = vmatpush.msra.mxu0 %v3405
    %v3407 = vand.u32 %v3296, 4294901760
    %3408 = vmatpush.msra.mxu0 %v3407
    %v3409 = vand.u32 %v96, 4294901760
    %v3410 = vsub.f32 %v96, %v3409
    %v3411 = vand.u32 %v3410, 4294901760
    %3412 = vmatmul.f32.gmra.mxu0 %v3411
    %v3413 = vpop.f32.mrf.mxu0
    %v3414 = vadd.f32 %v3389, %v3413
    %3415 = vdwg.mxu0
    %3416 = vmatpush.msra.mxu0 0.0
    %3417 = vmatpush.msra.mxu0 0.0
    %3418 = vmatpush.msra.mxu0 0.0
    %3419 = vmatpush.msra.mxu0 0.0
    %3420 = vmatpush.msra.mxu0 0.0
    %3421 = vmatpush.msra.mxu0 0.0
    %3422 = vmatpush.msra.mxu0 0.0
    %3423 = vmatpush.msra.mxu0 0.0
    %3424 = vmatpush.msra.mxu0 0.0
    %3425 = vmatpush.msra.mxu0 0.0
    %3426 = vmatpush.msra.mxu0 0.0
    %3427 = vmatpush.msra.mxu0 0.0
    %3428 = vmatpush.msra.mxu0 0.0
    %3429 = vmatpush.msra.mxu0 0.0
    %v3430 = vand.u32 %v3298, 4294901760
    %v3431 = vsub.f32 %v3298, %v3430
    %v3432 = vand.u32 %v3431, 4294901760
    %3433 = vmatpush.msra.mxu0 %v3432
    %v3434 = vand.u32 %v3296, 4294901760
    %v3435 = vsub.f32 %v3296, %v3434
    %v3436 = vand.u32 %v3435, 4294901760
    %3437 = vmatpush.msra.mxu0 %v3436
    %v3438 = vand.u32 %v96, 4294901760
    %3439 = vmatmul.f32.gmra.mxu0 %v3438
    %v3440 = vpop.f32.mrf.mxu0
    %v3441 = vadd.f32 %v3414, %v3440
    %3442 = vdwg.mxu0
    %3443 = vmatpush.msra.mxu0 0.0
    %3444 = vmatpush.msra.mxu0 0.0
    %3445 = vmatpush.msra.mxu0 0.0
    %3446 = vmatpush.msra.mxu0 0.0
    %3447 = vmatpush.msra.mxu0 0.0
    %3448 = vmatpush.msra.mxu0 0.0
    %3449 = vmatpush.msra.mxu0 0.0
    %3450 = vmatpush.msra.mxu0 0.0
    %3451 = vmatpush.msra.mxu0 0.0
    %3452 = vmatpush.msra.mxu0 0.0
    %3453 = vmatpush.msra.mxu0 0.0
    %3454 = vmatpush.msra.mxu0 0.0
    %3455 = vmatpush.msra.mxu0 0.0
    %3456 = vmatpush.msra.mxu0 0.0
    %v3457 = vand.u32 %v3298, 4294901760
    %3458 = vmatpush.msra.mxu0 %v3457
    %v3459 = vand.u32 %v3296, 4294901760
    %3460 = vmatpush.msra.mxu0 %v3459
    %v3461 = vand.u32 %v96, 4294901760
    %3462 = vmatmul.f32.gmra.mxu0 %v3461
    %v3463 = vpop.f32.mrf.mxu0
    %v3464 = vadd.f32 %v3441, %v3463
    %3465 = vdwg.mxu0
    %3466 = vmatpush.msra.mxu0 0.0
    %3467 = vmatpush.msra.mxu0 0.0
    %3468 = vmatpush.msra.mxu0 0.0
    %3469 = vmatpush.msra.mxu0 0.0
    %3470 = vmatpush.msra.mxu0 0.0
    %3471 = vmatpush.msra.mxu0 0.0
    %3472 = vmatpush.msra.mxu0 0.0
    %3473 = vmatpush.msra.mxu0 0.0
    %3474 = vmatpush.msra.mxu0 0.0
    %3475 = vmatpush.msra.mxu0 0.0
    %3476 = vmatpush.msra.mxu0 0.0
    %3477 = vmatpush.msra.mxu0 0.0
    %3478 = vmatpush.msra.mxu0 0.0
    %3479 = vmatpush.msra.mxu0 0.0
    %v3480 = vand.u32 %v3299, 4294901760
    %3481 = vmatpush.msra.mxu0 %v3480
    %v3482 = vand.u32 %v3297, 4294901760
    %3483 = vmatpush.msra.mxu0 %v3482
    %v3484 = vand.u32 %v96, 4294901760
    %v3485 = vsub.f32 %v96, %v3484
    %v3486 = vand.u32 %v3485, 4294901760
    %v3487 = vsub.f32 %v3485, %v3486
    %v3488 = vand.u32 %v3487, 4294901760
    %3489 = vmatmul.f32.gmra.mxu0 %v3488
    %v3490 = vpop.f32.mrf.mxu0
    %v3491 = vadd.f32 %v3304, %v3490
    %3492 = vdwg.mxu0
    %3493 = vmatpush.msra.mxu0 0.0
    %3494 = vmatpush.msra.mxu0 0.0
    %3495 = vmatpush.msra.mxu0 0.0
    %3496 = vmatpush.msra.mxu0 0.0
    %3497 = vmatpush.msra.mxu0 0.0
    %3498 = vmatpush.msra.mxu0 0.0
    %3499 = vmatpush.msra.mxu0 0.0
    %3500 = vmatpush.msra.mxu0 0.0
    %3501 = vmatpush.msra.mxu0 0.0
    %3502 = vmatpush.msra.mxu0 0.0
    %3503 = vmatpush.msra.mxu0 0.0
    %3504 = vmatpush.msra.mxu0 0.0
    %3505 = vmatpush.msra.mxu0 0.0
    %3506 = vmatpush.msra.mxu0 0.0
    %v3507 = vand.u32 %v3299, 4294901760
    %v3508 = vsub.f32 %v3299, %v3507
    %v3509 = vand.u32 %v3508, 4294901760
    %v3510 = vsub.f32 %v3508, %v3509
    %v3511 = vand.u32 %v3510, 4294901760
    %3512 = vmatpush.msra.mxu0 %v3511
    %v3513 = vand.u32 %v3297, 4294901760
    %v3514 = vsub.f32 %v3297, %v3513
    %v3515 = vand.u32 %v3514, 4294901760
    %v3516 = vsub.f32 %v3514, %v3515
    %v3517 = vand.u32 %v3516, 4294901760
    %3518 = vmatpush.msra.mxu0 %v3517
    %v3519 = vand.u32 %v96, 4294901760
    %3520 = vmatmul.f32.gmra.mxu0 %v3519
    %v3521 = vpop.f32.mrf.mxu0
    %v3522 = vadd.f32 %v3491, %v3521
    %3523 = vdwg.mxu0
    %3524 = vmatpush.msra.mxu0 0.0
    %3525 = vmatpush.msra.mxu0 0.0
    %3526 = vmatpush.msra.mxu0 0.0
    %3527 = vmatpush.msra.mxu0 0.0
    %3528 = vmatpush.msra.mxu0 0.0
    %3529 = vmatpush.msra.mxu0 0.0
    %3530 = vmatpush.msra.mxu0 0.0
    %3531 = vmatpush.msra.mxu0 0.0
    %3532 = vmatpush.msra.mxu0 0.0
    %3533 = vmatpush.msra.mxu0 0.0
    %3534 = vmatpush.msra.mxu0 0.0
    %3535 = vmatpush.msra.mxu0 0.0
    %3536 = vmatpush.msra.mxu0 0.0
    %3537 = vmatpush.msra.mxu0 0.0
    %v3538 = vand.u32 %v3299, 4294901760
    %v3539 = vsub.f32 %v3299, %v3538
    %3540 = vmatpush.msra.mxu0 %v3539
    %v3541 = vand.u32 %v3297, 4294901760
    %v3542 = vsub.f32 %v3297, %v3541
    %3543 = vmatpush.msra.mxu0 %v3542
    %v3544 = vand.u32 %v96, 4294901760
    %v3545 = vsub.f32 %v96, %v3544
    %3546 = vmatmul.f32.gmra.mxu0 %v3545
    %v3547 = vpop.f32.mrf.mxu0
    %v3548 = vadd.f32 %v3522, %v3547
    %3549 = vdwg.mxu0
    %3550 = vmatpush.msra.mxu0 0.0
    %3551 = vmatpush.msra.mxu0 0.0
    %3552 = vmatpush.msra.mxu0 0.0
    %3553 = vmatpush.msra.mxu0 0.0
    %3554 = vmatpush.msra.mxu0 0.0
    %3555 = vmatpush.msra.mxu0 0.0
    %3556 = vmatpush.msra.mxu0 0.0
    %3557 = vmatpush.msra.mxu0 0.0
    %3558 = vmatpush.msra.mxu0 0.0
    %3559 = vmatpush.msra.mxu0 0.0
    %3560 = vmatpush.msra.mxu0 0.0
    %3561 = vmatpush.msra.mxu0 0.0
    %3562 = vmatpush.msra.mxu0 0.0
    %3563 = vmatpush.msra.mxu0 0.0
    %v3564 = vand.u32 %v3299, 4294901760
    %3565 = vmatpush.msra.mxu0 %v3564
    %v3566 = vand.u32 %v3297, 4294901760
    %3567 = vmatpush.msra.mxu0 %v3566
    %v3568 = vand.u32 %v96, 4294901760
    %v3569 = vsub.f32 %v96, %v3568
    %v3570 = vand.u32 %v3569, 4294901760
    %3571 = vmatmul.f32.gmra.mxu0 %v3570
    %v3572 = vpop.f32.mrf.mxu0
    %v3573 = vadd.f32 %v3548, %v3572
    %3574 = vdwg.mxu0
    %3575 = vmatpush.msra.mxu0 0.0
    %3576 = vmatpush.msra.mxu0 0.0
    %3577 = vmatpush.msra.mxu0 0.0
    %3578 = vmatpush.msra.mxu0 0.0
    %3579 = vmatpush.msra.mxu0 0.0
    %3580 = vmatpush.msra.mxu0 0.0
    %3581 = vmatpush.msra.mxu0 0.0
    %3582 = vmatpush.msra.mxu0 0.0
    %3583 = vmatpush.msra.mxu0 0.0
    %3584 = vmatpush.msra.mxu0 0.0
    %3585 = vmatpush.msra.mxu0 0.0
    %3586 = vmatpush.msra.mxu0 0.0
    %3587 = vmatpush.msra.mxu0 0.0
    %3588 = vmatpush.msra.mxu0 0.0
    %v3589 = vand.u32 %v3299, 4294901760
    %v3590 = vsub.f32 %v3299, %v3589
    %v3591 = vand.u32 %v3590, 4294901760
    %3592 = vmatpush.msra.mxu0 %v3591
    %v3593 = vand.u32 %v3297, 4294901760
    %v3594 = vsub.f32 %v3297, %v3593
    %v3595 = vand.u32 %v3594, 4294901760
    %3596 = vmatpush.msra.mxu0 %v3595
    %v3597 = vand.u32 %v96, 4294901760
    %3598 = vmatmul.f32.gmra.mxu0 %v3597
    %v3599 = vpop.f32.mrf.mxu0
    %v3600 = vadd.f32 %v3573, %v3599
    %3601 = vdwg.mxu0
    %3602 = vmatpush.msra.mxu0 0.0
    %3603 = vmatpush.msra.mxu0 0.0
    %3604 = vmatpush.msra.mxu0 0.0
    %3605 = vmatpush.msra.mxu0 0.0
    %3606 = vmatpush.msra.mxu0 0.0
    %3607 = vmatpush.msra.mxu0 0.0
    %3608 = vmatpush.msra.mxu0 0.0
    %3609 = vmatpush.msra.mxu0 0.0
    %3610 = vmatpush.msra.mxu0 0.0
    %3611 = vmatpush.msra.mxu0 0.0
    %3612 = vmatpush.msra.mxu0 0.0
    %3613 = vmatpush.msra.mxu0 0.0
    %3614 = vmatpush.msra.mxu0 0.0
    %3615 = vmatpush.msra.mxu0 0.0
    %v3616 = vand.u32 %v3299, 4294901760
    %3617 = vmatpush.msra.mxu0 %v3616
    %v3618 = vand.u32 %v3297, 4294901760
    %3619 = vmatpush.msra.mxu0 %v3618
    %v3620 = vand.u32 %v96, 4294901760
    %3621 = vmatmul.f32.gmra.mxu0 %v3620
    %v3622 = vpop.f32.mrf.mxu0
    %v3623 = vadd.f32 %v3600, %v3622
    %3624 = vdwg.mxu0
    %v3627 = vrot.slane %v3623, 6
    %v3628 = vsel %vm3292, %v3464, %v3627
    %3630 = vst [vmem:[#allocation11] sm:$0xf] %v3628
    %v3631 = vld [vmem:[#allocation5 + $0x240] sm:$0xff]
    %v3632 = vld [vmem:[#allocation5 + $0x248] sm:$0xff]
    %v3633 = vld [vmem:[#allocation5 + $0x250] sm:$0xff]
    %v3634 = vld [vmem:[#allocation5 + $0x258] sm:$0xff]
    %s3635 = scalar_lea.vmem [#allocation7], 3
    %v3636 = vld [vmem:[%s3635] ss:$4 sm:$0x3]
    %v3638 = vperm.slane %v3636, 0
    %v3639 = vperm.slane %v3636, 1
    %3642 = vmatpush.msra.mxu0 0.0
    %3643 = vmatpush.msra.mxu0 0.0
    %3644 = vmatpush.msra.mxu0 0.0
    %3645 = vmatpush.msra.mxu0 0.0
    %3646 = vmatpush.msra.mxu0 0.0
    %3647 = vmatpush.msra.mxu0 0.0
    %3648 = vmatpush.msra.mxu0 0.0
    %3649 = vmatpush.msra.mxu0 0.0
    %3650 = vmatpush.msra.mxu0 0.0
    %3651 = vmatpush.msra.mxu0 0.0
    %3652 = vmatpush.msra.mxu0 0.0
    %3653 = vmatpush.msra.mxu0 0.0
    %3654 = vmatpush.msra.mxu0 0.0
    %3655 = vmatpush.msra.mxu0 0.0
    %v3656 = vand.u32 %v3633, 4294901760
    %3657 = vmatpush.msra.mxu0 %v3656
    %v3658 = vand.u32 %v3631, 4294901760
    %3659 = vmatpush.msra.mxu0 %v3658
    %v3660 = vand.u32 %v96, 4294901760
    %v3661 = vsub.f32 %v96, %v3660
    %v3662 = vand.u32 %v3661, 4294901760
    %v3663 = vsub.f32 %v3661, %v3662
    %v3664 = vand.u32 %v3663, 4294901760
    %3665 = vmatmul.f32.gmra.mxu0 %v3664
    %v3666 = vpop.f32.mrf.mxu0
    %v3667 = vadd.f32 %v3638, %v3666
    %3668 = vdwg.mxu0
    %3669 = vmatpush.msra.mxu0 0.0
    %3670 = vmatpush.msra.mxu0 0.0
    %3671 = vmatpush.msra.mxu0 0.0
    %3672 = vmatpush.msra.mxu0 0.0
    %3673 = vmatpush.msra.mxu0 0.0
    %3674 = vmatpush.msra.mxu0 0.0
    %3675 = vmatpush.msra.mxu0 0.0
    %3676 = vmatpush.msra.mxu0 0.0
    %3677 = vmatpush.msra.mxu0 0.0
    %3678 = vmatpush.msra.mxu0 0.0
    %3679 = vmatpush.msra.mxu0 0.0
    %3680 = vmatpush.msra.mxu0 0.0
    %3681 = vmatpush.msra.mxu0 0.0
    %3682 = vmatpush.msra.mxu0 0.0
    %v3683 = vand.u32 %v3633, 4294901760
    %v3684 = vsub.f32 %v3633, %v3683
    %v3685 = vand.u32 %v3684, 4294901760
    %v3686 = vsub.f32 %v3684, %v3685
    %v3687 = vand.u32 %v3686, 4294901760
    %3688 = vmatpush.msra.mxu0 %v3687
    %v3689 = vand.u32 %v3631, 4294901760
    %v3690 = vsub.f32 %v3631, %v3689
    %v3691 = vand.u32 %v3690, 4294901760
    %v3692 = vsub.f32 %v3690, %v3691
    %v3693 = vand.u32 %v3692, 4294901760
    %3694 = vmatpush.msra.mxu0 %v3693
    %v3695 = vand.u32 %v96, 4294901760
    %3696 = vmatmul.f32.gmra.mxu0 %v3695
    %v3697 = vpop.f32.mrf.mxu0
    %v3698 = vadd.f32 %v3667, %v3697
    %3699 = vdwg.mxu0
    %3700 = vmatpush.msra.mxu0 0.0
    %3701 = vmatpush.msra.mxu0 0.0
    %3702 = vmatpush.msra.mxu0 0.0
    %3703 = vmatpush.msra.mxu0 0.0
    %3704 = vmatpush.msra.mxu0 0.0
    %3705 = vmatpush.msra.mxu0 0.0
    %3706 = vmatpush.msra.mxu0 0.0
    %3707 = vmatpush.msra.mxu0 0.0
    %3708 = vmatpush.msra.mxu0 0.0
    %3709 = vmatpush.msra.mxu0 0.0
    %3710 = vmatpush.msra.mxu0 0.0
    %3711 = vmatpush.msra.mxu0 0.0
    %3712 = vmatpush.msra.mxu0 0.0
    %3713 = vmatpush.msra.mxu0 0.0
    %v3714 = vand.u32 %v3633, 4294901760
    %v3715 = vsub.f32 %v3633, %v3714
    %3716 = vmatpush.msra.mxu0 %v3715
    %v3717 = vand.u32 %v3631, 4294901760
    %v3718 = vsub.f32 %v3631, %v3717
    %3719 = vmatpush.msra.mxu0 %v3718
    %v3720 = vand.u32 %v96, 4294901760
    %v3721 = vsub.f32 %v96, %v3720
    %3722 = vmatmul.f32.gmra.mxu0 %v3721
    %v3723 = vpop.f32.mrf.mxu0
    %v3724 = vadd.f32 %v3698, %v3723
    %3725 = vdwg.mxu0
    %3726 = vmatpush.msra.mxu0 0.0
    %3727 = vmatpush.msra.mxu0 0.0
    %3728 = vmatpush.msra.mxu0 0.0
    %3729 = vmatpush.msra.mxu0 0.0
    %3730 = vmatpush.msra.mxu0 0.0
    %3731 = vmatpush.msra.mxu0 0.0
    %3732 = vmatpush.msra.mxu0 0.0
    %3733 = vmatpush.msra.mxu0 0.0
    %3734 = vmatpush.msra.mxu0 0.0
    %3735 = vmatpush.msra.mxu0 0.0
    %3736 = vmatpush.msra.mxu0 0.0
    %3737 = vmatpush.msra.mxu0 0.0
    %3738 = vmatpush.msra.mxu0 0.0
    %3739 = vmatpush.msra.mxu0 0.0
    %v3740 = vand.u32 %v3633, 4294901760
    %3741 = vmatpush.msra.mxu0 %v3740
    %v3742 = vand.u32 %v3631, 4294901760
    %3743 = vmatpush.msra.mxu0 %v3742
    %v3744 = vand.u32 %v96, 4294901760
    %v3745 = vsub.f32 %v96, %v3744
    %v3746 = vand.u32 %v3745, 4294901760
    %3747 = vmatmul.f32.gmra.mxu0 %v3746
    %v3748 = vpop.f32.mrf.mxu0
    %v3749 = vadd.f32 %v3724, %v3748
    %3750 = vdwg.mxu0
    %3751 = vmatpush.msra.mxu0 0.0
    %3752 = vmatpush.msra.mxu0 0.0
    %3753 = vmatpush.msra.mxu0 0.0
    %3754 = vmatpush.msra.mxu0 0.0
    %3755 = vmatpush.msra.mxu0 0.0
    %3756 = vmatpush.msra.mxu0 0.0
    %3757 = vmatpush.msra.mxu0 0.0
    %3758 = vmatpush.msra.mxu0 0.0
    %3759 = vmatpush.msra.mxu0 0.0
    %3760 = vmatpush.msra.mxu0 0.0
    %3761 = vmatpush.msra.mxu0 0.0
    %3762 = vmatpush.msra.mxu0 0.0
    %3763 = vmatpush.msra.mxu0 0.0
    %3764 = vmatpush.msra.mxu0 0.0
    %v3765 = vand.u32 %v3633, 4294901760
    %v3766 = vsub.f32 %v3633, %v3765
    %v3767 = vand.u32 %v3766, 4294901760
    %3768 = vmatpush.msra.mxu0 %v3767
    %v3769 = vand.u32 %v3631, 4294901760
    %v3770 = vsub.f32 %v3631, %v3769
    %v3771 = vand.u32 %v3770, 4294901760
    %3772 = vmatpush.msra.mxu0 %v3771
    %v3773 = vand.u32 %v96, 4294901760
    %3774 = vmatmul.f32.gmra.mxu0 %v3773
    %v3775 = vpop.f32.mrf.mxu0
    %v3776 = vadd.f32 %v3749, %v3775
    %3777 = vdwg.mxu0
    %3778 = vmatpush.msra.mxu0 0.0
    %3779 = vmatpush.msra.mxu0 0.0
    %3780 = vmatpush.msra.mxu0 0.0
    %3781 = vmatpush.msra.mxu0 0.0
    %3782 = vmatpush.msra.mxu0 0.0
    %3783 = vmatpush.msra.mxu0 0.0
    %3784 = vmatpush.msra.mxu0 0.0
    %3785 = vmatpush.msra.mxu0 0.0
    %3786 = vmatpush.msra.mxu0 0.0
    %3787 = vmatpush.msra.mxu0 0.0
    %3788 = vmatpush.msra.mxu0 0.0
    %3789 = vmatpush.msra.mxu0 0.0
    %3790 = vmatpush.msra.mxu0 0.0
    %3791 = vmatpush.msra.mxu0 0.0
    %v3792 = vand.u32 %v3633, 4294901760
    %3793 = vmatpush.msra.mxu0 %v3792
    %v3794 = vand.u32 %v3631, 4294901760
    %3795 = vmatpush.msra.mxu0 %v3794
    %v3796 = vand.u32 %v96, 4294901760
    %3797 = vmatmul.f32.gmra.mxu0 %v3796
    %v3798 = vpop.f32.mrf.mxu0
    %v3799 = vadd.f32 %v3776, %v3798
    %3800 = vdwg.mxu0
    %3801 = vmatpush.msra.mxu0 0.0
    %3802 = vmatpush.msra.mxu0 0.0
    %3803 = vmatpush.msra.mxu0 0.0
    %3804 = vmatpush.msra.mxu0 0.0
    %3805 = vmatpush.msra.mxu0 0.0
    %3806 = vmatpush.msra.mxu0 0.0
    %3807 = vmatpush.msra.mxu0 0.0
    %3808 = vmatpush.msra.mxu0 0.0
    %3809 = vmatpush.msra.mxu0 0.0
    %3810 = vmatpush.msra.mxu0 0.0
    %3811 = vmatpush.msra.mxu0 0.0
    %3812 = vmatpush.msra.mxu0 0.0
    %3813 = vmatpush.msra.mxu0 0.0
    %3814 = vmatpush.msra.mxu0 0.0
    %v3815 = vand.u32 %v3634, 4294901760
    %3816 = vmatpush.msra.mxu0 %v3815
    %v3817 = vand.u32 %v3632, 4294901760
    %3818 = vmatpush.msra.mxu0 %v3817
    %v3819 = vand.u32 %v96, 4294901760
    %v3820 = vsub.f32 %v96, %v3819
    %v3821 = vand.u32 %v3820, 4294901760
    %v3822 = vsub.f32 %v3820, %v3821
    %v3823 = vand.u32 %v3822, 4294901760
    %3824 = vmatmul.f32.gmra.mxu0 %v3823
    %v3825 = vpop.f32.mrf.mxu0
    %v3826 = vadd.f32 %v3639, %v3825
    %3827 = vdwg.mxu0
    %3828 = vmatpush.msra.mxu0 0.0
    %3829 = vmatpush.msra.mxu0 0.0
    %3830 = vmatpush.msra.mxu0 0.0
    %3831 = vmatpush.msra.mxu0 0.0
    %3832 = vmatpush.msra.mxu0 0.0
    %3833 = vmatpush.msra.mxu0 0.0
    %3834 = vmatpush.msra.mxu0 0.0
    %3835 = vmatpush.msra.mxu0 0.0
    %3836 = vmatpush.msra.mxu0 0.0
    %3837 = vmatpush.msra.mxu0 0.0
    %3838 = vmatpush.msra.mxu0 0.0
    %3839 = vmatpush.msra.mxu0 0.0
    %3840 = vmatpush.msra.mxu0 0.0
    %3841 = vmatpush.msra.mxu0 0.0
    %v3842 = vand.u32 %v3634, 4294901760
    %v3843 = vsub.f32 %v3634, %v3842
    %v3844 = vand.u32 %v3843, 4294901760
    %v3845 = vsub.f32 %v3843, %v3844
    %v3846 = vand.u32 %v3845, 4294901760
    %3847 = vmatpush.msra.mxu0 %v3846
    %v3848 = vand.u32 %v3632, 4294901760
    %v3849 = vsub.f32 %v3632, %v3848
    %v3850 = vand.u32 %v3849, 4294901760
    %v3851 = vsub.f32 %v3849, %v3850
    %v3852 = vand.u32 %v3851, 4294901760
    %3853 = vmatpush.msra.mxu0 %v3852
    %v3854 = vand.u32 %v96, 4294901760
    %3855 = vmatmul.f32.gmra.mxu0 %v3854
    %v3856 = vpop.f32.mrf.mxu0
    %v3857 = vadd.f32 %v3826, %v3856
    %3858 = vdwg.mxu0
    %3859 = vmatpush.msra.mxu0 0.0
    %3860 = vmatpush.msra.mxu0 0.0
    %3861 = vmatpush.msra.mxu0 0.0
    %3862 = vmatpush.msra.mxu0 0.0
    %3863 = vmatpush.msra.mxu0 0.0
    %3864 = vmatpush.msra.mxu0 0.0
    %3865 = vmatpush.msra.mxu0 0.0
    %3866 = vmatpush.msra.mxu0 0.0
    %3867 = vmatpush.msra.mxu0 0.0
    %3868 = vmatpush.msra.mxu0 0.0
    %3869 = vmatpush.msra.mxu0 0.0
    %3870 = vmatpush.msra.mxu0 0.0
    %3871 = vmatpush.msra.mxu0 0.0
    %3872 = vmatpush.msra.mxu0 0.0
    %v3873 = vand.u32 %v3634, 4294901760
    %v3874 = vsub.f32 %v3634, %v3873
    %3875 = vmatpush.msra.mxu0 %v3874
    %v3876 = vand.u32 %v3632, 4294901760
    %v3877 = vsub.f32 %v3632, %v3876
    %3878 = vmatpush.msra.mxu0 %v3877
    %v3879 = vand.u32 %v96, 4294901760
    %v3880 = vsub.f32 %v96, %v3879
    %3881 = vmatmul.f32.gmra.mxu0 %v3880
    %v3882 = vpop.f32.mrf.mxu0
    %v3883 = vadd.f32 %v3857, %v3882
    %3884 = vdwg.mxu0
    %3885 = vmatpush.msra.mxu0 0.0
    %3886 = vmatpush.msra.mxu0 0.0
    %3887 = vmatpush.msra.mxu0 0.0
    %3888 = vmatpush.msra.mxu0 0.0
    %3889 = vmatpush.msra.mxu0 0.0
    %3890 = vmatpush.msra.mxu0 0.0
    %3891 = vmatpush.msra.mxu0 0.0
    %3892 = vmatpush.msra.mxu0 0.0
    %3893 = vmatpush.msra.mxu0 0.0
    %3894 = vmatpush.msra.mxu0 0.0
    %3895 = vmatpush.msra.mxu0 0.0
    %3896 = vmatpush.msra.mxu0 0.0
    %3897 = vmatpush.msra.mxu0 0.0
    %3898 = vmatpush.msra.mxu0 0.0
    %v3899 = vand.u32 %v3634, 4294901760
    %3900 = vmatpush.msra.mxu0 %v3899
    %v3901 = vand.u32 %v3632, 4294901760
    %3902 = vmatpush.msra.mxu0 %v3901
    %v3903 = vand.u32 %v96, 4294901760
    %v3904 = vsub.f32 %v96, %v3903
    %v3905 = vand.u32 %v3904, 4294901760
    %3906 = vmatmul.f32.gmra.mxu0 %v3905
    %v3907 = vpop.f32.mrf.mxu0
    %v3908 = vadd.f32 %v3883, %v3907
    %3909 = vdwg.mxu0
    %3910 = vmatpush.msra.mxu0 0.0
    %3911 = vmatpush.msra.mxu0 0.0
    %3912 = vmatpush.msra.mxu0 0.0
    %3913 = vmatpush.msra.mxu0 0.0
    %3914 = vmatpush.msra.mxu0 0.0
    %3915 = vmatpush.msra.mxu0 0.0
    %3916 = vmatpush.msra.mxu0 0.0
    %3917 = vmatpush.msra.mxu0 0.0
    %3918 = vmatpush.msra.mxu0 0.0
    %3919 = vmatpush.msra.mxu0 0.0
    %3920 = vmatpush.msra.mxu0 0.0
    %3921 = vmatpush.msra.mxu0 0.0
    %3922 = vmatpush.msra.mxu0 0.0
    %3923 = vmatpush.msra.mxu0 0.0
    %v3924 = vand.u32 %v3634, 4294901760
    %v3925 = vsub.f32 %v3634, %v3924
    %v3926 = vand.u32 %v3925, 4294901760
    %3927 = vmatpush.msra.mxu0 %v3926
    %v3928 = vand.u32 %v3632, 4294901760
    %v3929 = vsub.f32 %v3632, %v3928
    %v3930 = vand.u32 %v3929, 4294901760
    %3931 = vmatpush.msra.mxu0 %v3930
    %v3932 = vand.u32 %v96, 4294901760
    %3933 = vmatmul.f32.gmra.mxu0 %v3932
    %v3934 = vpop.f32.mrf.mxu0
    %v3935 = vadd.f32 %v3908, %v3934
    %3936 = vdwg.mxu0
    %3937 = vmatpush.msra.mxu0 0.0
    %3938 = vmatpush.msra.mxu0 0.0
    %3939 = vmatpush.msra.mxu0 0.0
    %3940 = vmatpush.msra.mxu0 0.0
    %3941 = vmatpush.msra.mxu0 0.0
    %3942 = vmatpush.msra.mxu0 0.0
    %3943 = vmatpush.msra.mxu0 0.0
    %3944 = vmatpush.msra.mxu0 0.0
    %3945 = vmatpush.msra.mxu0 0.0
    %3946 = vmatpush.msra.mxu0 0.0
    %3947 = vmatpush.msra.mxu0 0.0
    %3948 = vmatpush.msra.mxu0 0.0
    %3949 = vmatpush.msra.mxu0 0.0
    %3950 = vmatpush.msra.mxu0 0.0
    %v3951 = vand.u32 %v3634, 4294901760
    %3952 = vmatpush.msra.mxu0 %v3951
    %v3953 = vand.u32 %v3632, 4294901760
    %3954 = vmatpush.msra.mxu0 %v3953
    %v3955 = vand.u32 %v96, 4294901760
    %3956 = vmatmul.f32.gmra.mxu0 %v3955
    %v3957 = vpop.f32.mrf.mxu0
    %v3958 = vadd.f32 %v3935, %v3957
    %3959 = vdwg.mxu0
    %v3962 = vrot.slane %v3958, 6
    %v3963 = vsel %vm3292, %v3799, %v3962
    %s3965 = scalar_lea.vmem [#allocation11], 4
    %3966 = vst [vmem:[%s3965] sm:$0xf] %v3963
    // Predicated region
    $region38: #{tpu_custom_call.1} parent=1 // pred_check
      _
    $region39: #{tpu_custom_call.1} parent=1 // pred_check_branch
      %3968 = sbr.rel (0) target = $region41
    $region40: #{tpu_custom_call.1} parent=1 // pred_region
      %3970 = vsyncadd [#allocation4], 0
      %s3972 = sshll.u32 [#allocation10], 4
      %s3973 = int_to_ptr.vmem [resolvable:$true] %s3972
      %s3974 = sshll.u32 %s5, 4
      %s3975 = int_to_ptr.hbm [resolvable:$true] %s3974
      %3977 = dma.vmem_to_hbm [thread:$0]  %s3973, 64, %s3975, [#allocation4]
    $region41: #{tpu_custom_call.1} parent=1 // pred_fallthru
      _
    // Predicated region
    $region42: #{tpu_custom_call.1} parent=1 // pred_check
      _
    $region43: #{tpu_custom_call.1} parent=1 // pred_check_branch
      %3979 = sbr.rel (0) target = $region45
    $region44: #{tpu_custom_call.1} parent=1 // pred_region
      %3981 = vsyncadd [#allocation12], 0
      %s3982 = sshll.u32 [#allocation11], 4
      %s3983 = int_to_ptr.vmem [resolvable:$true] %s3982
      %s3984 = sshll.u32 %s6, 4
      %s3985 = int_to_ptr.hbm [resolvable:$true] %s3984
      %3990 = dma.vmem_to_hbm [thread:$0]  %s3983, 128, %s3985, [#allocation12], 64, 64, 4
    $region45: #{tpu_custom_call.1} parent=1 // pred_fallthru
      _
    // Predicated region
    $region46: #{tpu_custom_call.1} parent=1 // pred_check
      _
    $region47: #{tpu_custom_call.1} parent=1 // pred_check_branch
      %3992 = sbr.rel (0) target = $region49
    $region48: #{tpu_custom_call.1} parent=1 // pred_region
      %3994 = dma.done [#allocation4], 64
    $region49: #{tpu_custom_call.1} parent=1 // pred_fallthru
      _
    // Predicated region
    $region50: #{tpu_custom_call.1} parent=1 // pred_check
      _
    $region51: #{tpu_custom_call.1} parent=1 // pred_check_branch
      %3996 = sbr.rel (0) target = $region53
    $region52: #{tpu_custom_call.1} parent=1 // pred_region
      %3998 = dma.done [#allocation12], 128
    $region53: #{tpu_custom_call.1} parent=1 // pred_fallthru
      _
    %3999 = vsyncpa [#allocation3], 1
    %4000 = vsyncpa [#allocation6], 1
    %4001 = vsyncpa [#allocation9], 1
    %4002 = vsyncpa [#allocation4], 1
    %4003 = vsyncpa [#allocation12], 1

</llo_original>
